<compile_context>
chip_gen: v7x
topology: tpu7x:2x2x1
jax: 0.10.0
libtpu: 0.0.40
codegen_flags: <defaults>
</compile_context>

<pallas_src>
import math
import functools

import jax
import jax.numpy as jnp
from jax import lax
from jax.experimental import pallas as pl
from jax.experimental.pallas import tpu as pltpu


def _ffn_kernel(x_ref, w1_ref, b1_ref, w2_ref, b2_ref, o_ref, acc_ref, *,
                hc, n_chunks):
    # x_ref : (TM, dim)      token tile (weights' dtype)
    # w1_ref: (dim, hidden)  resident, single-buffered
    # b1_ref: (1, hidden)    resident
    # w2_ref: (hidden, dim)  resident, single-buffered
    # b2_ref: (1, dim)       resident
    # acc_ref: (TM, dim) f32 scratch accumulator
    x = x_ref[...]
    acc_ref[...] = jnp.zeros_like(acc_ref)
    inv_sqrt2 = 1.0 / math.sqrt(2.0)

    # Static trip count -> fully visible to the scheduler; all ref slices are
    # static (zero-cost views), lane/sublane starts are multiples of hc.
    for c in range(n_chunks):
        lo = c * hc
        # Matmul 1 slice: native-dtype MXU inputs, f32 accumulation.
        h = jnp.dot(x, w1_ref[:, lo:lo + hc],
                    preferred_element_type=jnp.float32)          # (TM, hc) f32
        h = h + b1_ref[:, lo:lo + hc].astype(jnp.float32)
        # Exact GELU (matches torch.nn.GELU default): 0.5*x*(1+erf(x/sqrt(2)))
        h = 0.5 * h * (1.0 + lax.erf(h * inv_sqrt2))
        # Dropout with p=0.0 is the identity (inference); nothing to do.
        # TODO(synk): training-mode dropout (p>0) would need pltpu.prng_* masking.
        # Matmul 2 slice: partial-accumulate into the f32 scratch.
        acc_ref[...] += jnp.dot(h.astype(w2_ref.dtype),
                                w2_ref[lo:lo + hc, :],
                                preferred_element_type=jnp.float32)

    o_ref[...] = (acc_ref[...] + b2_ref[...].astype(jnp.float32)).astype(o_ref.dtype)


def _physical_vmem_bytes():
    # Per-TensorCore VMEM capacity (v5e/v6e: 128 MiB, v7x: 64 MiB).
    try:
        cap = getattr(pltpu.get_tpu_info(), "vmem_capacity_bytes", None)
        if cap:
            return int(cap)
    except Exception:
        pass
    return 64 << 20   # conservative fallback = v7x ceiling


def _vmem_limit_bytes(tm, dim, hidden, hc, w_itemsize, single_buffer_weights):
    bufs = 1 if single_buffer_weights else 2
    weights = bufs * (dim * hidden + hidden * dim + hidden + dim) * w_itemsize
    io_tiles = 2 * 2 * (tm * dim) * max(w_itemsize, 4)   # double-buffered x/out
    inter = tm * hc * 4 + tm * dim * 4                    # chunk intermediate + acc
    est = int(1.25 * (weights + io_tiles + inter)) + (4 << 20)
    cap = _physical_vmem_bytes() - (8 << 20)              # Mosaic scratch headroom
    return min(max(est, 32 << 20), cap)


def _pick_hidden_chunk(hidden):
    # Only chunk when the f32 intermediate would be large; prefer 1024/512/256
    # wide slices (multiples of 128 lanes / 8 sublanes).
    if hidden <= 1024:
        return hidden
    for hc in (1024, 512, 256):
        if hidden % hc == 0:
            return hc
    return hidden


@functools.partial(jax.jit,
                   static_argnames=("tm", "hidden_chunk", "single_buffer_weights"))
def _ffn_pallas_impl(x, w1_t, b1, w2_t, b2, *, tm, hidden_chunk,
                     single_buffer_weights):
    B, N, dim = x.shape
    hidden = w1_t.shape[1]
    M = B * N

    # Feed the MXU in the weights' dtype (avoid mixed-dtype f32 fallback).
    cdt = w1_t.dtype
    x2 = x.reshape(M, dim).astype(cdt)
    b1_2 = b1.reshape(1, hidden)
    b2_2 = b2.reshape(1, dim)

    # Token tile: no pad / no output slice; Pallas masks the partial last block.
    tm_eff = M if M <= tm else tm
    n_tiles = pl.cdiv(M, tm_eff)

    hc = hidden_chunk if hidden_chunk is not None else _pick_hidden_chunk(hidden)
    if hidden % hc != 0:
        hc = hidden
    n_chunks = hidden // hc

    kernel = functools.partial(_ffn_kernel, hc=hc, n_chunks=n_chunks)

    # Resident operands: constant index maps -> a second pipeline buffer is waste.
    w_pipe = {"pipeline_mode": pl.Buffered(1)} if single_buffer_weights else {}

    vmem_bytes = _vmem_limit_bytes(tm_eff, dim, hidden, hc,
                                   jnp.dtype(cdt).itemsize,
                                   single_buffer_weights)

    out = pl.pallas_call(
        kernel,
        out_shape=jax.ShapeDtypeStruct((M, dim), x.dtype),
        grid_spec=pltpu.PrefetchScalarGridSpec(
            num_scalar_prefetch=0,
            grid=(n_tiles,),
            in_specs=[
                pl.BlockSpec((tm_eff, dim), lambda i: (i, 0)),             # x tile
                pl.BlockSpec((dim, hidden), lambda i: (0, 0), **w_pipe),   # W1^T
                pl.BlockSpec((1, hidden), lambda i: (0, 0), **w_pipe),     # b1
                pl.BlockSpec((hidden, dim), lambda i: (0, 0), **w_pipe),   # W2^T
                pl.BlockSpec((1, dim), lambda i: (0, 0), **w_pipe),        # b2
            ],
            out_specs=pl.BlockSpec((tm_eff, dim), lambda i: (i, 0)),
            scratch_shapes=[pltpu.VMEM((tm_eff, dim), jnp.float32)],
        ),
        compiler_params=pltpu.CompilerParams(
            dimension_semantics=("parallel",),
            vmem_limit_bytes=vmem_bytes,
        ),
    )(x2, w1_t, b1_2, w2_t, b2_2)

    return out.reshape(B, N, dim)


def ffn_pallas(x, w1_t, b1, w2_t, b2, *, tm=512, hidden_chunk=None):
    """x: (B, N, dim). w1_t: (dim, hidden) = W1.T, b1: (hidden,),
       w2_t: (hidden, dim) = W2.T, b2: (dim,). Returns (B, N, dim)."""
    assert w1_t.dtype == w2_t.dtype, "W1/W2 must share a dtype for the MXU path"
    try:
        return _ffn_pallas_impl(x, w1_t, b1, w2_t, b2, tm=tm,
                                hidden_chunk=hidden_chunk,
                                single_buffer_weights=True)
    except Exception:
        # Installed jax without BlockSpec pipeline_mode / Buffered(1) support:
        # fall back to default double-buffered resident weights.
        return _ffn_pallas_impl(x, w1_t, b1, w2_t, b2, tm=tm,
                                hidden_chunk=hidden_chunk,
                                single_buffer_weights=False)


def ffn_reference(x, w1_t, b1, w2_t, b2):
    h = jnp.dot(x, w1_t) + b1
    h = 0.5 * h * (1.0 + lax.erf(h / math.sqrt(2.0)))
    return jnp.dot(h, w2_t) + b2


if __name__ == "__main__":
    # Small ViT-like shapes: batch=2, seq=197 (CLS + 14x14 patches), dim=128,
    # hidden=512.  tm=256 / hidden_chunk=256 deliberately exercise a
    # multi-step token grid with a masked partial last block (M = 394 rows)
    # and the chunked hidden loop (2 chunks).
    B, N, dim, hidden = 2, 197, 128, 512

    key = jax.random.PRNGKey(0)
    kx, kw1, kb1, kw2, kb2 = jax.random.split(key, 5)

    x = jax.random.normal(kx, (B, N, dim), dtype=jnp.float32)

    # Deterministic init mimicking nn.Linear's uniform(-1/sqrt(fan_in), +)
    lim1 = 1.0 / math.sqrt(dim)
    lim2 = 1.0 / math.sqrt(hidden)
    w1_t = jax.random.uniform(kw1, (dim, hidden), jnp.float32, -lim1, lim1)  # = W1.T
    b1 = jax.random.uniform(kb1, (hidden,), jnp.float32, -lim1, lim1)
    w2_t = jax.random.uniform(kw2, (hidden, dim), jnp.float32, -lim2, lim2)  # = W2.T
    b2 = jax.random.uniform(kb2, (dim,), jnp.float32, -lim2, lim2)

    y = ffn_pallas(x, w1_t, b1, w2_t, b2, tm=256, hidden_chunk=256)
    y = jax.block_until_ready(y)

    y_ref = ffn_reference(x, w1_t, b1, w2_t, b2)
    assert y.shape == (B, N, dim)
    assert jnp.allclose(y, y_ref, atol=1e-4, rtol=1e-4), \
        float(jnp.max(jnp.abs(y - y_ref)))

    print("KERNEL_OK")
</pallas_src>

<mosaic_0001>
module attributes {stable_mosaic.version = 11 : i64} {
  func.func @_ffn_kernel(%arg0: i32, %arg1: memref<256x128xf32, #tpu.memory_space<vmem>>, %arg2: memref<128x512xf32, #tpu.memory_space<vmem>>, %arg3: memref<1x512xf32, #tpu.memory_space<vmem>>, %arg4: memref<512x128xf32, #tpu.memory_space<vmem>>, %arg5: memref<1x128xf32, #tpu.memory_space<vmem>>, %arg6: memref<256x128xf32, #tpu.memory_space<vmem>>, %arg7: memref<256x128xf32, #tpu.memory_space<vmem>>) attributes {dimension_semantics = [#tpu.dimension_semantics<parallel>], iteration_bounds = array<i64: 2>, scalar_prefetch = 0 : i64, scratch_operands = 1 : i64, tpu.core_type = #tpu.core_type<tc>, window_params = [{transform_indices = @transform_0, window_bounds = array<i64: 256, 128>}, {pipeline_mode = #tpu.pipeline_mode<synchronous>, transform_indices = @transform_1, window_bounds = array<i64: 128, 512>}, {pipeline_mode = #tpu.pipeline_mode<synchronous>, transform_indices = @transform_2, window_bounds = array<i64: 1, 512>}, {pipeline_mode = #tpu.pipeline_mode<synchronous>, transform_indices = @transform_3, window_bounds = array<i64: 512, 128>}, {pipeline_mode = #tpu.pipeline_mode<synchronous>, transform_indices = @transform_4, window_bounds = array<i64: 1, 128>}, {transform_indices = @transform_5, window_bounds = array<i64: 256, 128>}]} {
    %c0 = arith.constant 0 : index
    %c0_0 = arith.constant 0 : index
    %0 = vector.load %arg1[%c0, %c0_0] : memref<256x128xf32, #tpu.memory_space<vmem>>, vector<256x128xf32>
    %cst = arith.constant 0.000000e+00 : f32
    %1 = vector.broadcast %cst : f32 to vector<256x128xf32>
    %c0_1 = arith.constant 0 : index
    %c0_2 = arith.constant 0 : index
    %2 = vector.load %arg7[%c0_1, %c0_2] : memref<256x128xf32, #tpu.memory_space<vmem>>, vector<256x128xf32>
    tpu.vector_store %arg7[%c0_1, %c0_2], %1 {strides = array<i32>} : memref<256x128xf32, #tpu.memory_space<vmem>>, vector<256x128xf32>,
    %c0_3 = arith.constant 0 : index
    %c0_4 = arith.constant 0 : index
    %3 = vector.load %arg2[%c0_3, %c0_4] : memref<128x512xf32, #tpu.memory_space<vmem>>, vector<128x256xf32>
    %cst_5 = arith.constant dense<0.000000e+00> : vector<256x256xf32>
    %4 = tpu.matmul %0, %3, %cst_5 {dimension_numbers = #tpu.dot_dimension_numbers<[1], [0], [0], [1], [0, 0, 1, 1], [], []>} : vector<256x128xf32>, vector<128x256xf32>, vector<256x256xf32> -> vector<256x256xf32>
    %c0_6 = arith.constant 0 : index
    %c0_7 = arith.constant 0 : index
    %5 = vector.load %arg3[%c0_6, %c0_7] : memref<1x512xf32, #tpu.memory_space<vmem>>, vector<1x256xf32>
    %6 = vector.broadcast %5 : vector<1x256xf32> to vector<256x256xf32>
    %7 = arith.addf %4, %6 : vector<256x256xf32>
    %cst_8 = arith.constant 5.000000e-01 : f32
    %8 = vector.broadcast %cst_8 : f32 to vector<256x256xf32>
    %9 = arith.mulf %8, %7 : vector<256x256xf32>
    %cst_9 = arith.constant 0.707106769 : f32
    %10 = vector.broadcast %cst_9 : f32 to vector<256x256xf32>
    %11 = arith.mulf %7, %10 : vector<256x256xf32>
    %12 = math.erf %11 : vector<256x256xf32>
    %cst_10 = arith.constant 1.000000e+00 : f32
    %13 = vector.broadcast %cst_10 : f32 to vector<256x256xf32>
    %14 = arith.addf %13, %12 : vector<256x256xf32>
    %15 = arith.mulf %9, %14 : vector<256x256xf32>
    %c0_11 = arith.constant 0 : index
    %c0_12 = arith.constant 0 : index
    %16 = vector.load %arg7[%c0_11, %c0_12] : memref<256x128xf32, #tpu.memory_space<vmem>>, vector<256x128xf32>
    %c0_13 = arith.constant 0 : index
    %c0_14 = arith.constant 0 : index
    %17 = vector.load %arg4[%c0_13, %c0_14] : memref<512x128xf32, #tpu.memory_space<vmem>>, vector<256x128xf32>
    %cst_15 = arith.constant dense<0.000000e+00> : vector<256x128xf32>
    %18 = tpu.matmul %15, %17, %cst_15 {dimension_numbers = #tpu.dot_dimension_numbers<[1], [0], [0], [1], [0, 0, 1, 1], [], []>} : vector<256x256xf32>, vector<256x128xf32>, vector<256x128xf32> -> vector<256x128xf32>
    %19 = arith.addf %16, %18 : vector<256x128xf32>
    %c0_16 = arith.constant 0 : index
    %c0_17 = arith.constant 0 : index
    %20 = vector.load %arg7[%c0_16, %c0_17] : memref<256x128xf32, #tpu.memory_space<vmem>>, vector<256x128xf32>
    tpu.vector_store %arg7[%c0_16, %c0_17], %19 {strides = array<i32>} : memref<256x128xf32, #tpu.memory_space<vmem>>, vector<256x128xf32>,
    %c0_18 = arith.constant 0 : index
    %c256 = arith.constant 256 : index
    %21 = vector.load %arg2[%c0_18, %c256] : memref<128x512xf32, #tpu.memory_space<vmem>>, vector<128x256xf32>
    %cst_19 = arith.constant dense<0.000000e+00> : vector<256x256xf32>
    %22 = tpu.matmul %0, %21, %cst_19 {dimension_numbers = #tpu.dot_dimension_numbers<[1], [0], [0], [1], [0, 0, 1, 1], [], []>} : vector<256x128xf32>, vector<128x256xf32>, vector<256x256xf32> -> vector<256x256xf32>
    %c0_20 = arith.constant 0 : index
    %c256_21 = arith.constant 256 : index
    %23 = vector.load %arg3[%c0_20, %c256_21] : memref<1x512xf32, #tpu.memory_space<vmem>>, vector<1x256xf32>
    %24 = vector.broadcast %23 : vector<1x256xf32> to vector<256x256xf32>
    %25 = arith.addf %22, %24 : vector<256x256xf32>
    %cst_22 = arith.constant 5.000000e-01 : f32
    %26 = vector.broadcast %cst_22 : f32 to vector<256x256xf32>
    %27 = arith.mulf %26, %25 : vector<256x256xf32>
    %cst_23 = arith.constant 0.707106769 : f32
    %28 = vector.broadcast %cst_23 : f32 to vector<256x256xf32>
    %29 = arith.mulf %25, %28 : vector<256x256xf32>
    %30 = math.erf %29 : vector<256x256xf32>
    %cst_24 = arith.constant 1.000000e+00 : f32
    %31 = vector.broadcast %cst_24 : f32 to vector<256x256xf32>
    %32 = arith.addf %31, %30 : vector<256x256xf32>
    %33 = arith.mulf %27, %32 : vector<256x256xf32>
    %c0_25 = arith.constant 0 : index
    %c0_26 = arith.constant 0 : index
    %34 = vector.load %arg7[%c0_25, %c0_26] : memref<256x128xf32, #tpu.memory_space<vmem>>, vector<256x128xf32>
    %c256_27 = arith.constant 256 : index
    %c0_28 = arith.constant 0 : index
    %35 = vector.load %arg4[%c256_27, %c0_28] : memref<512x128xf32, #tpu.memory_space<vmem>>, vector<256x128xf32>
    %cst_29 = arith.constant dense<0.000000e+00> : vector<256x128xf32>
    %36 = tpu.matmul %33, %35, %cst_29 {dimension_numbers = #tpu.dot_dimension_numbers<[1], [0], [0], [1], [0, 0, 1, 1], [], []>} : vector<256x256xf32>, vector<256x128xf32>, vector<256x128xf32> -> vector<256x128xf32>
    %37 = arith.addf %34, %36 : vector<256x128xf32>
    %c0_30 = arith.constant 0 : index
    %c0_31 = arith.constant 0 : index
    %38 = vector.load %arg7[%c0_30, %c0_31] : memref<256x128xf32, #tpu.memory_space<vmem>>, vector<256x128xf32>
    tpu.vector_store %arg7[%c0_30, %c0_31], %37 {strides = array<i32>} : memref<256x128xf32, #tpu.memory_space<vmem>>, vector<256x128xf32>,
    %c0_32 = arith.constant 0 : index
    %c0_33 = arith.constant 0 : index
    %39 = vector.load %arg7[%c0_32, %c0_33] : memref<256x128xf32, #tpu.memory_space<vmem>>, vector<256x128xf32>
    %c0_34 = arith.constant 0 : index
    %c0_35 = arith.constant 0 : index
    %40 = vector.load %arg5[%c0_34, %c0_35] : memref<1x128xf32, #tpu.memory_space<vmem>>, vector<1x128xf32>
    %41 = vector.broadcast %40 : vector<1x128xf32> to vector<256x128xf32>
    %42 = arith.addf %39, %41 : vector<256x128xf32>
    %c0_36 = arith.constant 0 : index
    %c0_37 = arith.constant 0 : index
    %43 = vector.load %arg6[%c0_36, %c0_37] : memref<256x128xf32, #tpu.memory_space<vmem>>, vector<256x128xf32>
    tpu.vector_store %arg6[%c0_36, %c0_37], %42 {strides = array<i32>} : memref<256x128xf32, #tpu.memory_space<vmem>>, vector<256x128xf32>,
    return
  }
  func.func @transform_0(%arg0: i32) -> (i32, i32) {
    %c0_i32 = arith.constant 0 : i32
    %c0_i32_0 = arith.constant 0 : i32
    return %arg0, %c0_i32 : i32, i32
  }
  func.func @transform_1(%arg0: i32) -> (i32, i32) {
    %c0_i32 = arith.constant 0 : i32
    %c0_i32_0 = arith.constant 0 : i32
    %c0_i32_1 = arith.constant 0 : i32
    return %c0_i32, %c0_i32_0 : i32, i32
  }
  func.func @transform_2(%arg0: i32) -> (i32, i32) {
    %c0_i32 = arith.constant 0 : i32
    %c0_i32_0 = arith.constant 0 : i32
    %c0_i32_1 = arith.constant 0 : i32
    return %c0_i32, %c0_i32_0 : i32, i32
  }
  func.func @transform_3(%arg0: i32) -> (i32, i32) {
    %c0_i32 = arith.constant 0 : i32
    %c0_i32_0 = arith.constant 0 : i32
    %c0_i32_1 = arith.constant 0 : i32
    return %c0_i32, %c0_i32_0 : i32, i32
  }
  func.func @transform_4(%arg0: i32) -> (i32, i32) {
    %c0_i32 = arith.constant 0 : i32
    %c0_i32_0 = arith.constant 0 : i32
    %c0_i32_1 = arith.constant 0 : i32
    return %c0_i32, %c0_i32_0 : i32, i32
  }
  func.func @transform_5(%arg0: i32) -> (i32, i32) {
    %c0_i32 = arith.constant 0 : i32
    %c0_i32_0 = arith.constant 0 : i32
    return %arg0, %c0_i32 : i32, i32
  }
}

module attributes {stable_mosaic.version = 11 : i64} {
  func.func @_ffn_kernel(%arg0: i32, %arg1: memref<256x128xf32, #tpu.memory_space<vmem>>, %arg2: memref<128x512xf32, #tpu.memory_space<vmem>>, %arg3: memref<1x512xf32, #tpu.memory_space<vmem>>, %arg4: memref<512x128xf32, #tpu.memory_space<vmem>>, %arg5: memref<1x128xf32, #tpu.memory_space<vmem>>, %arg6: memref<256x128xf32, #tpu.memory_space<vmem>>, %arg7: memref<256x128xf32, #tpu.memory_space<vmem>>) attributes {dimension_semantics = [#tpu.dimension_semantics<parallel>], iteration_bounds = array<i64: 2>, scalar_prefetch = 0 : i64, scratch_operands = 1 : i64, tpu.core_type = #tpu.core_type<tc>, window_params = [{transform_indices = @transform_0, window_bounds = array<i64: 256, 128>}, {pipeline_mode = #tpu.pipeline_mode<synchronous>, transform_indices = @transform_1, window_bounds = array<i64: 128, 512>}, {pipeline_mode = #tpu.pipeline_mode<synchronous>, transform_indices = @transform_2, window_bounds = array<i64: 1, 512>}, {pipeline_mode = #tpu.pipeline_mode<synchronous>, transform_indices = @transform_3, window_bounds = array<i64: 512, 128>}, {pipeline_mode = #tpu.pipeline_mode<synchronous>, transform_indices = @transform_4, window_bounds = array<i64: 1, 128>}, {transform_indices = @transform_5, window_bounds = array<i64: 256, 128>}]} {
    %c0 = arith.constant 0 : index
    %c0_0 = arith.constant 0 : index
    %0 = vector.load %arg1[%c0, %c0_0] : memref<256x128xf32, #tpu.memory_space<vmem>>, vector<256x128xf32>
    %cst = arith.constant 0.000000e+00 : f32
    %1 = vector.broadcast %cst : f32 to vector<256x128xf32>
    %c0_1 = arith.constant 0 : index
    %c0_2 = arith.constant 0 : index
    %2 = vector.load %arg7[%c0_1, %c0_2] : memref<256x128xf32, #tpu.memory_space<vmem>>, vector<256x128xf32>
    tpu.vector_store %arg7[%c0_1, %c0_2], %1 {strides = array<i32>} : memref<256x128xf32, #tpu.memory_space<vmem>>, vector<256x128xf32>,
    %c0_3 = arith.constant 0 : index
    %c0_4 = arith.constant 0 : index
    %3 = vector.load %arg2[%c0_3, %c0_4] : memref<128x512xf32, #tpu.memory_space<vmem>>, vector<128x256xf32>
    %cst_5 = arith.constant dense<0.000000e+00> : vector<256x256xf32>
    %4 = tpu.matmul %0, %3, %cst_5 {dimension_numbers = #tpu.dot_dimension_numbers<[1], [0], [0], [1], [0, 0, 1, 1], [], []>} : vector<256x128xf32>, vector<128x256xf32>, vector<256x256xf32> -> vector<256x256xf32>
    %c0_6 = arith.constant 0 : index
    %c0_7 = arith.constant 0 : index
    %5 = vector.load %arg3[%c0_6, %c0_7] : memref<1x512xf32, #tpu.memory_space<vmem>>, vector<1x256xf32>
    %6 = vector.broadcast %5 : vector<1x256xf32> to vector<256x256xf32>
    %7 = arith.addf %4, %6 : vector<256x256xf32>
    %cst_8 = arith.constant 5.000000e-01 : f32
    %8 = vector.broadcast %cst_8 : f32 to vector<256x256xf32>
    %9 = arith.mulf %8, %7 : vector<256x256xf32>
    %cst_9 = arith.constant 0.707106769 : f32
    %10 = vector.broadcast %cst_9 : f32 to vector<256x256xf32>
    %11 = arith.mulf %7, %10 : vector<256x256xf32>
    %12 = math.erf %11 : vector<256x256xf32>
    %cst_10 = arith.constant 1.000000e+00 : f32
    %13 = vector.broadcast %cst_10 : f32 to vector<256x256xf32>
    %14 = arith.addf %13, %12 : vector<256x256xf32>
    %15 = arith.mulf %9, %14 : vector<256x256xf32>
    %c0_11 = arith.constant 0 : index
    %c0_12 = arith.constant 0 : index
    %16 = vector.load %arg7[%c0_11, %c0_12] : memref<256x128xf32, #tpu.memory_space<vmem>>, vector<256x128xf32>
    %c0_13 = arith.constant 0 : index
    %c0_14 = arith.constant 0 : index
    %17 = vector.load %arg4[%c0_13, %c0_14] : memref<512x128xf32, #tpu.memory_space<vmem>>, vector<256x128xf32>
    %cst_15 = arith.constant dense<0.000000e+00> : vector<256x128xf32>
    %18 = tpu.matmul %15, %17, %cst_15 {dimension_numbers = #tpu.dot_dimension_numbers<[1], [0], [0], [1], [0, 0, 1, 1], [], []>} : vector<256x256xf32>, vector<256x128xf32>, vector<256x128xf32> -> vector<256x128xf32>
    %19 = arith.addf %16, %18 : vector<256x128xf32>
    %c0_16 = arith.constant 0 : index
    %c0_17 = arith.constant 0 : index
    %20 = vector.load %arg7[%c0_16, %c0_17] : memref<256x128xf32, #tpu.memory_space<vmem>>, vector<256x128xf32>
    tpu.vector_store %arg7[%c0_16, %c0_17], %19 {strides = array<i32>} : memref<256x128xf32, #tpu.memory_space<vmem>>, vector<256x128xf32>,
    %c0_18 = arith.constant 0 : index
    %c256 = arith.constant 256 : index
    %21 = vector.load %arg2[%c0_18, %c256] : memref<128x512xf32, #tpu.memory_space<vmem>>, vector<128x256xf32>
    %cst_19 = arith.constant dense<0.000000e+00> : vector<256x256xf32>
    %22 = tpu.matmul %0, %21, %cst_19 {dimension_numbers = #tpu.dot_dimension_numbers<[1], [0], [0], [1], [0, 0, 1, 1], [], []>} : vector<256x128xf32>, vector<128x256xf32>, vector<256x256xf32> -> vector<256x256xf32>
    %c0_20 = arith.constant 0 : index
    %c256_21 = arith.constant 256 : index
    %23 = vector.load %arg3[%c0_20, %c256_21] : memref<1x512xf32, #tpu.memory_space<vmem>>, vector<1x256xf32>
    %24 = vector.broadcast %23 : vector<1x256xf32> to vector<256x256xf32>
    %25 = arith.addf %22, %24 : vector<256x256xf32>
    %cst_22 = arith.constant 5.000000e-01 : f32
    %26 = vector.broadcast %cst_22 : f32 to vector<256x256xf32>
    %27 = arith.mulf %26, %25 : vector<256x256xf32>
    %cst_23 = arith.constant 0.707106769 : f32
    %28 = vector.broadcast %cst_23 : f32 to vector<256x256xf32>
    %29 = arith.mulf %25, %28 : vector<256x256xf32>
    %30 = math.erf %29 : vector<256x256xf32>
    %cst_24 = arith.constant 1.000000e+00 : f32
    %31 = vector.broadcast %cst_24 : f32 to vector<256x256xf32>
    %32 = arith.addf %31, %30 : vector<256x256xf32>
    %33 = arith.mulf %27, %32 : vector<256x256xf32>
    %c0_25 = arith.constant 0 : index
    %c0_26 = arith.constant 0 : index
    %34 = vector.load %arg7[%c0_25, %c0_26] : memref<256x128xf32, #tpu.memory_space<vmem>>, vector<256x128xf32>
    %c256_27 = arith.constant 256 : index
    %c0_28 = arith.constant 0 : index
    %35 = vector.load %arg4[%c256_27, %c0_28] : memref<512x128xf32, #tpu.memory_space<vmem>>, vector<256x128xf32>
    %cst_29 = arith.constant dense<0.000000e+00> : vector<256x128xf32>
    %36 = tpu.matmul %33, %35, %cst_29 {dimension_numbers = #tpu.dot_dimension_numbers<[1], [0], [0], [1], [0, 0, 1, 1], [], []>} : vector<256x256xf32>, vector<256x128xf32>, vector<256x128xf32> -> vector<256x128xf32>
    %37 = arith.addf %34, %36 : vector<256x128xf32>
    %c0_30 = arith.constant 0 : index
    %c0_31 = arith.constant 0 : index
    %38 = vector.load %arg7[%c0_30, %c0_31] : memref<256x128xf32, #tpu.memory_space<vmem>>, vector<256x128xf32>
    tpu.vector_store %arg7[%c0_30, %c0_31], %37 {strides = array<i32>} : memref<256x128xf32, #tpu.memory_space<vmem>>, vector<256x128xf32>,
    %c0_32 = arith.constant 0 : index
    %c0_33 = arith.constant 0 : index
    %39 = vector.load %arg7[%c0_32, %c0_33] : memref<256x128xf32, #tpu.memory_space<vmem>>, vector<256x128xf32>
    %c0_34 = arith.constant 0 : index
    %c0_35 = arith.constant 0 : index
    %40 = vector.load %arg5[%c0_34, %c0_35] : memref<1x128xf32, #tpu.memory_space<vmem>>, vector<1x128xf32>
    %41 = vector.broadcast %40 : vector<1x128xf32> to vector<256x128xf32>
    %42 = arith.addf %39, %41 : vector<256x128xf32>
    %c0_36 = arith.constant 0 : index
    %c0_37 = arith.constant 0 : index
    %43 = vector.load %arg6[%c0_36, %c0_37] : memref<256x128xf32, #tpu.memory_space<vmem>>, vector<256x128xf32>
    tpu.vector_store %arg6[%c0_36, %c0_37], %42 {strides = array<i32>} : memref<256x128xf32, #tpu.memory_space<vmem>>, vector<256x128xf32>,
    return
  }
  func.func @transform_0(%arg0: i32) -> (i32, i32) {
    %c0_i32 = arith.constant 0 : i32
    %c0_i32_0 = arith.constant 0 : i32
    return %arg0, %c0_i32 : i32, i32
  }
  func.func @transform_1(%arg0: i32) -> (i32, i32) {
    %c0_i32 = arith.constant 0 : i32
    %c0_i32_0 = arith.constant 0 : i32
    %c0_i32_1 = arith.constant 0 : i32
    return %c0_i32, %c0_i32_0 : i32, i32
  }
  func.func @transform_2(%arg0: i32) -> (i32, i32) {
    %c0_i32 = arith.constant 0 : i32
    %c0_i32_0 = arith.constant 0 : i32
    %c0_i32_1 = arith.constant 0 : i32
    return %c0_i32, %c0_i32_0 : i32, i32
  }
  func.func @transform_3(%arg0: i32) -> (i32, i32) {
    %c0_i32 = arith.constant 0 : i32
    %c0_i32_0 = arith.constant 0 : i32
    %c0_i32_1 = arith.constant 0 : i32
    return %c0_i32, %c0_i32_0 : i32, i32
  }
  func.func @transform_4(%arg0: i32) -> (i32, i32) {
    %c0_i32 = arith.constant 0 : i32
    %c0_i32_0 = arith.constant 0 : i32
    %c0_i32_1 = arith.constant 0 : i32
    return %c0_i32, %c0_i32_0 : i32, i32
  }
  func.func @transform_5(%arg0: i32) -> (i32, i32) {
    %c0_i32 = arith.constant 0 : i32
    %c0_i32_0 = arith.constant 0 : i32
    return %arg0, %c0_i32 : i32, i32
  }
}

</mosaic_0001>

<llo_original>
// kernel: _ffn_pallas_impl.1
$region0: #{_ffn_pallas_impl.1}
  #allocation0 [shape = 'u32[]', space=smem, size = 0x4, offset = 0x4, fixed_abs, tag = 'smem constant byte address 0x4 - core index']
  #allocation1 [shape = 'u32[144,128]{1,0:T(1,128)}', space=vmem, size = 0x12000, scoped, tag = 'internal scratch']
  #allocation2 [shape = 'f32[256,128]{1,0:T(8,128)}', space=vmem, size = 0x20000, scoped, tag = 'scratch operand']
  %s0 = inlined_call_operand.vmem [shape: f32[394,128], index: 0, kind: input, shape index: {}]
  %s1 = inlined_call_operand.vmem [shape: f32[128,512], index: 1, kind: input, shape index: {}]
  %s2 = inlined_call_operand.vmem [shape: f32[1,512], index: 2, kind: input, shape index: {}]
  %s3 = inlined_call_operand.vmem [shape: f32[512,128], index: 3, kind: input, shape index: {}]
  %s4 = inlined_call_operand.vmem [shape: f32[1,128], index: 4, kind: input, shape index: {}]
  %s5 = inlined_call_operand.vmem [shape: f32[394,128], index: 5, kind: output, shape index: {}]
  %s6 = sld [smem:[#allocation0]]
  $region101: #{_ffn_pallas_impl.1} parent=0
    _
  %s8 = ssub.s32 1, %s6
  %s9 = scalar_select 0, %s8, %s6
  $region1: #{_ffn_pallas_impl.1} parent=0
    #allocation3 [shape = 'u8[262144]{0}', space=vmem, size = 0x40000, scoped, tag = 'output window, operand 0']
    loop: start=0, step=1, limit=4
    $region2: #{_ffn_pallas_impl.1} parent=1 // loop_pre_header
      _
    $region3: #{_ffn_pallas_impl.1} parent=1 // loop_header
      %s11 = sphi 0, %s15
      %p12 = scmp.ge.s32.totalorder %s11, 4
      %s21 = sphi 0, %s23
      %s24 = sphi 0, %s21
      %s25 = sphi 0, %s24
      %s41 = sphi 0, %s25
      %s45 = sphi 0, %s45
      %s47 = sphi 0, %s45
      %s48 = sphi 0, %s47
      %s62 = sphi 0, %s48
      %s66 = sphi 0, %s66
      %s68 = sphi 0, %s66
      %s69 = sphi 0, %s68
      %s83 = sphi 0, %s69
      %s87 = sphi 0, %s87
      %s89 = sphi 0, %s87
      %s90 = sphi 0, %s89
      %s104 = sphi 0, %s90
      %s108 = sphi 0, %s108
      %s110 = sphi 0, %s108
      %s111 = sphi 0, %s110
      %s125 = sphi 0, %s111
      %s131 = sphi 0, %s133
      %s134 = sphi 0, %s131
      %s135 = sphi 0, %s134
      %s151 = sphi 0, %s135
    $region4: #{_ffn_pallas_impl.1} parent=1 // loop_header_branch
      %14 = sbr.rel (%p12) target = $region8
    $region5: #{_ffn_pallas_impl.1} parent=1 // loop_body
      %s16 = ssub.s32 %s11, 1
      %s17 = ssub.s32 %s11, 2
      %s18 = sadd.s32 %s11, 1
      %s19 = ssub.s32 %s11, %s18
      %p20 = scmp.eq.s32.totalorder %s19, 0
      %s22 = sadd.s32 %s21, 1
      %s23 = scalar_select %p20, %s21, %s22
      %p26 = pneg %p20
      %p27 = scmp.eq.s32.totalorder %s11, 1
      %p28 = por %p26, %p27
      %p29 = scmp.ne.s32.totalorder %s21, %s24
      %p30 = scmp.eq.s32.totalorder %s11, 0
      %p31 = por %p29, %p30
      %p32 = scmp.ne.s32.totalorder %s21, %s24
      %p33 = scmp.eq.s32.totalorder %s16, 1
      %p34 = por %p32, %p33
      %p35 = scmp.ne.s32.totalorder %s24, %s25
      %p36 = scmp.eq.s32.totalorder %s16, 0
      %p37 = por %p35, %p36
      %p38 = scmp.ne.s32.totalorder %s24, %s25
      %p39 = scmp.eq.s32.totalorder %s17, 1
      %p40 = por %p38, %p39
      %p42 = scmp.ne.s32.totalorder %s25, %s41
      %p43 = scmp.eq.s32.totalorder %s17, 0
      %p44 = por %p42, %p43
      %s46 = sadd.s32 %s45, 1
      %p49 = scmp.eq.s32.totalorder %s11, 1
      %p50 = scmp.ne.s32.totalorder %s45, %s47
      %p51 = scmp.eq.s32.totalorder %s11, 0
      %p52 = por %p50, %p51
      %p53 = scmp.ne.s32.totalorder %s45, %s47
      %p54 = scmp.eq.s32.totalorder %s16, 1
      %p55 = por %p53, %p54
      %p56 = scmp.ne.s32.totalorder %s47, %s48
      %p57 = scmp.eq.s32.totalorder %s16, 0
      %p58 = por %p56, %p57
      %p59 = scmp.ne.s32.totalorder %s47, %s48
      %p60 = scmp.eq.s32.totalorder %s17, 1
      %p61 = por %p59, %p60
      %p63 = scmp.ne.s32.totalorder %s48, %s62
      %p64 = scmp.eq.s32.totalorder %s17, 0
      %p65 = por %p63, %p64
      %s67 = sadd.s32 %s66, 1
      %p70 = scmp.eq.s32.totalorder %s11, 1
      %p71 = scmp.ne.s32.totalorder %s66, %s68
      %p72 = scmp.eq.s32.totalorder %s11, 0
      %p73 = por %p71, %p72
      %p74 = scmp.ne.s32.totalorder %s66, %s68
      %p75 = scmp.eq.s32.totalorder %s16, 1
      %p76 = por %p74, %p75
      %p77 = scmp.ne.s32.totalorder %s68, %s69
      %p78 = scmp.eq.s32.totalorder %s16, 0
      %p79 = por %p77, %p78
      %p80 = scmp.ne.s32.totalorder %s68, %s69
      %p81 = scmp.eq.s32.totalorder %s17, 1
      %p82 = por %p80, %p81
      %p84 = scmp.ne.s32.totalorder %s69, %s83
      %p85 = scmp.eq.s32.totalorder %s17, 0
      %p86 = por %p84, %p85
      %s88 = sadd.s32 %s87, 1
      %p91 = scmp.eq.s32.totalorder %s11, 1
      %p92 = scmp.ne.s32.totalorder %s87, %s89
      %p93 = scmp.eq.s32.totalorder %s11, 0
      %p94 = por %p92, %p93
      %p95 = scmp.ne.s32.totalorder %s87, %s89
      %p96 = scmp.eq.s32.totalorder %s16, 1
      %p97 = por %p95, %p96
      %p98 = scmp.ne.s32.totalorder %s89, %s90
      %p99 = scmp.eq.s32.totalorder %s16, 0
      %p100 = por %p98, %p99
      %p101 = scmp.ne.s32.totalorder %s89, %s90
      %p102 = scmp.eq.s32.totalorder %s17, 1
      %p103 = por %p101, %p102
      %p105 = scmp.ne.s32.totalorder %s90, %s104
      %p106 = scmp.eq.s32.totalorder %s17, 0
      %p107 = por %p105, %p106
      %s109 = sadd.s32 %s108, 1
      %p112 = scmp.eq.s32.totalorder %s11, 1
      %p113 = scmp.ne.s32.totalorder %s108, %s110
      %p114 = scmp.eq.s32.totalorder %s11, 0
      %p115 = por %p113, %p114
      %p116 = scmp.ne.s32.totalorder %s108, %s110
      %p117 = scmp.eq.s32.totalorder %s16, 1
      %p118 = por %p116, %p117
      %p119 = scmp.ne.s32.totalorder %s110, %s111
      %p120 = scmp.eq.s32.totalorder %s16, 0
      %p121 = por %p119, %p120
      %p122 = scmp.ne.s32.totalorder %s110, %s111
      %p123 = scmp.eq.s32.totalorder %s17, 1
      %p124 = por %p122, %p123
      %p126 = scmp.ne.s32.totalorder %s111, %s125
      %p127 = scmp.eq.s32.totalorder %s17, 0
      %p128 = por %p126, %p127
      %s129 = ssub.s32 %s11, %s18
      %p130 = scmp.eq.s32.totalorder %s129, 0
      %s132 = sadd.s32 %s131, 1
      %s133 = scalar_select %p130, %s131, %s132
      %p136 = pneg %p130
      %p137 = scmp.eq.s32.totalorder %s11, 1
      %p138 = por %p136, %p137
      %p139 = scmp.ne.s32.totalorder %s131, %s134
      %p140 = scmp.eq.s32.totalorder %s11, 0
      %p141 = por %p139, %p140
      %p142 = scmp.ne.s32.totalorder %s131, %s134
      %p143 = scmp.eq.s32.totalorder %s16, 1
      %p144 = por %p142, %p143
      %p145 = scmp.ne.s32.totalorder %s134, %s135
      %p146 = scmp.eq.s32.totalorder %s16, 0
      %p147 = por %p145, %p146
      %p148 = scmp.ne.s32.totalorder %s134, %s135
      %p149 = scmp.eq.s32.totalorder %s17, 1
      %p150 = por %p148, %p149
      %p152 = scmp.ne.s32.totalorder %s135, %s151
      %p153 = scmp.eq.s32.totalorder %s17, 0
      %p154 = por %p152, %p153
      %p155 = scmp.le.s32.totalorder 1, %s11
      %p156 = scmp.lt.s32.totalorder %s11, 3
      %p157 = pnand %p155, %p156
      %p158 = pneg %p157
      // Predicated region
      $region9: #{_ffn_pallas_impl.1} parent=5 // pred_check
        _
      $region10: #{_ffn_pallas_impl.1} parent=5 // pred_check_branch
        %160 = sbr.rel (%p157) target = $region12
      $region11: #{_ffn_pallas_impl.1} parent=5 // pred_region
        %s161 = ssub.s32 %s11, 1
        // Predicated region
        $region13: #{_ffn_pallas_impl.1} parent=11 // pred_check
          %p162 = pneg %p58
        $region14: #{_ffn_pallas_impl.1} parent=11 // pred_check_branch
          %164 = sbr.rel (%p162) target = $region16
        $region15: #{_ffn_pallas_impl.1} parent=11 // pred_region
          _
        $region16: #{_ffn_pallas_impl.1} parent=11 // pred_fallthru
          _
        // Predicated region
        $region17: #{_ffn_pallas_impl.1} parent=11 // pred_check
          %p165 = pneg %p79
        $region18: #{_ffn_pallas_impl.1} parent=11 // pred_check_branch
          %167 = sbr.rel (%p165) target = $region20
        $region19: #{_ffn_pallas_impl.1} parent=11 // pred_region
          _
        $region20: #{_ffn_pallas_impl.1} parent=11 // pred_fallthru
          _
        // Predicated region
        $region21: #{_ffn_pallas_impl.1} parent=11 // pred_check
          %p168 = pneg %p100
        $region22: #{_ffn_pallas_impl.1} parent=11 // pred_check_branch
          %170 = sbr.rel (%p168) target = $region24
        $region23: #{_ffn_pallas_impl.1} parent=11 // pred_region
          _
        $region24: #{_ffn_pallas_impl.1} parent=11 // pred_fallthru
          _
        // Predicated region
        $region25: #{_ffn_pallas_impl.1} parent=11 // pred_check
          %p171 = pneg %p121
        $region26: #{_ffn_pallas_impl.1} parent=11 // pred_check_branch
          %173 = sbr.rel (%p171) target = $region28
        $region27: #{_ffn_pallas_impl.1} parent=11 // pred_region
          _
        $region28: #{_ffn_pallas_impl.1} parent=11 // pred_fallthru
          _
      $region12: #{_ffn_pallas_impl.1} parent=5 // pred_fallthru
        _
      %p174 = scmp.lt.s32.totalorder %s11, 2
      // Predicated region
      $region29: #{_ffn_pallas_impl.1} parent=5 // pred_check
        %p175 = pneg %p174
      $region30: #{_ffn_pallas_impl.1} parent=5 // pred_check_branch
        %177 = sbr.rel (%p175) target = $region32
      $region31: #{_ffn_pallas_impl.1} parent=5 // pred_region
        // Predicated region
        $region33: #{_ffn_pallas_impl.1} parent=31 // pred_check
          %p178 = pneg %p31
        $region34: #{_ffn_pallas_impl.1} parent=31 // pred_check_branch
          %180 = sbr.rel (%p178) target = $region36
        $region35: #{_ffn_pallas_impl.1} parent=31 // pred_region
          %s181 = smul.u32 32, %s11
          %s182 = ssub.s32 50, %s181
          %p183 = scmp.lt.s32.totalorder %s182, 32
          %s184 = scalar_select %p183, %s182, 32
          %s185 = smul.u32 128, %s184
          %p186 = scmp.lt.s32.totalorder %s181, 49
          %s187 = scalar_select %p186, %s181, 49
          %s188 = smul.addr %s187, 8
          %s189 = scalar_lea.vmem %s0, %s188
          %s190 = smul.u32 32, %s11
          %s191 = ssub.s32 50, %s190
          %p192 = scmp.lt.s32.totalorder %s191, 32
          %s193 = scalar_select %p192, %s191, 32
          %s194 = smul.u32 128, %s193
        $region36: #{_ffn_pallas_impl.1} parent=31 // pred_fallthru
          _
      $region32: #{_ffn_pallas_impl.1} parent=5 // pred_fallthru
        _
      %p195 = scmp.le.s32.totalorder 1, %s11
      %p196 = scmp.lt.s32.totalorder %s11, 3
      %p197 = pnand %p195, %p196
      %p198 = pneg %p197
      // Predicated region
      $region37: #{_ffn_pallas_impl.1} parent=5 // pred_check
        _
      $region38: #{_ffn_pallas_impl.1} parent=5 // pred_check_branch
        %200 = sbr.rel (%p197) target = $region40
      $region39: #{_ffn_pallas_impl.1} parent=5 // pred_region
        %s201 = ssub.s32 %s11, 1
        %s202 = smul.u32 32, %s16
        %s203 = ssub.s32 50, %s202
        %p204 = scmp.lt.s32.totalorder %s203, 32
        %s205 = scalar_select %p204, %s203, 32
        %s206 = smul.u32 128, %s205
        %p207 = scmp.lt.s32.totalorder %s202, 49
        %s208 = scalar_select %p207, %s202, 49
        %s209 = smul.addr %s208, 8
        %s210 = scalar_lea.vmem %s0, %s209
        %p211 = pneg %p37
        %p212 = pneg %p34
        %p213 = pneg %p58
        %p214 = pneg %p55
        %p215 = pneg %p79
        %p216 = pneg %p76
        %p217 = pneg %p100
        %p218 = pneg %p97
        %p219 = pneg %p121
        %p220 = pneg %p118
        %p221 = pneg %p147
        %p222 = pneg %p144
        %s223 = sand.u32 %s134, 1
        %s224 = sand.u32 %s134, 1
        %s225 = smul.addr %s224, 256
        %s226 = scalar_lea.vmem [#allocation3], %s225
        %s227 = smul.u32 32, %s16
        %s228 = ssub.s32 50, %s227
        %p229 = scmp.lt.s32.totalorder %s228, 32
        %s230 = scalar_select %p229, %s228, 32
        %s231 = smul.u32 128, %s230
        %p232 = scmp.lt.s32.totalorder %s227, 49
        %s233 = scalar_select %p232, %s227, 49
        %s234 = smul.addr %s233, 8
        %s235 = scalar_lea.vmem %s0, %s234
        %s236 = smul.u32 32, %s16
        %s237 = ssub.s32 50, %s236
        %p238 = scmp.lt.s32.totalorder %s237, 32
        %s239 = scalar_select %p238, %s237, 32
        %s240 = smul.u32 128, %s239
        %s241 = smul.u32 32, %s16
        %s242 = ssub.s32 50, %s241
        %p243 = scmp.lt.s32.totalorder %s242, 32
        %s244 = scalar_select %p243, %s242, 32
        %s245 = smul.u32 128, %s244
        %v246 = vld [vmem:[%s235] sm:$0xff]
        %v247 = vld [vmem:[%s235 + $0x8] sm:$0xff]
        %v248 = vld [vmem:[%s235 + $0x10] sm:$0xff]
        %v249 = vld [vmem:[%s235 + $0x18] sm:$0xff]
        %v250 = vld [vmem:[%s235 + $0x20] sm:$0xff]
        %v251 = vld [vmem:[%s235 + $0x28] sm:$0xff]
        %v252 = vld [vmem:[%s235 + $0x30] sm:$0xff]
        %v253 = vld [vmem:[%s235 + $0x38] sm:$0xff]
        %v254 = vld [vmem:[%s235 + $0x40] sm:$0xff]
        %v255 = vld [vmem:[%s235 + $0x48] sm:$0xff]
        %v256 = vld [vmem:[%s235 + $0x50] sm:$0xff]
        %v257 = vld [vmem:[%s235 + $0x58] sm:$0xff]
        %v258 = vld [vmem:[%s235 + $0x60] sm:$0xff]
        %v259 = vld [vmem:[%s235 + $0x68] sm:$0xff]
        %v260 = vld [vmem:[%s235 + $0x70] sm:$0xff]
        %v261 = vld [vmem:[%s235 + $0x78] sm:$0xff]
        %v262 = vld [vmem:[%s235 + $0x80] sm:$0xff]
        %v263 = vld [vmem:[%s235 + $0x88] sm:$0xff]
        %v264 = vld [vmem:[%s235 + $0x90] sm:$0xff]
        %v265 = vld [vmem:[%s235 + $0x98] sm:$0xff]
        %v266 = vld [vmem:[%s235 + $0xa0] sm:$0xff]
        %v267 = vld [vmem:[%s235 + $0xa8] sm:$0xff]
        %v268 = vld [vmem:[%s235 + $0xb0] sm:$0xff]
        %v269 = vld [vmem:[%s235 + $0xb8] sm:$0xff]
        %v270 = vld [vmem:[%s235 + $0xc0] sm:$0xff]
        %v271 = vld [vmem:[%s235 + $0xc8] sm:$0xff]
        %v272 = vld [vmem:[%s235 + $0xd0] sm:$0xff]
        %v273 = vld [vmem:[%s235 + $0xd8] sm:$0xff]
        %v274 = vld [vmem:[%s235 + $0xe0] sm:$0xff]
        %v275 = vld [vmem:[%s235 + $0xe8] sm:$0xff]
        %v276 = vld [vmem:[%s235 + $0xf0] sm:$0xff]
        %v277 = vld [vmem:[%s235 + $0xf8] sm:$0xff]
        %278 = vst [vmem:[#allocation2] sm:$0xff] 0.0
        %279 = vst [vmem:[#allocation2 + $0x8] sm:$0xff] 0.0
        %280 = vst [vmem:[#allocation2 + $0x10] sm:$0xff] 0.0
        %281 = vst [vmem:[#allocation2 + $0x18] sm:$0xff] 0.0
        %282 = vst [vmem:[#allocation2 + $0x20] sm:$0xff] 0.0
        %283 = vst [vmem:[#allocation2 + $0x28] sm:$0xff] 0.0
        %284 = vst [vmem:[#allocation2 + $0x30] sm:$0xff] 0.0
        %285 = vst [vmem:[#allocation2 + $0x38] sm:$0xff] 0.0
        %286 = vst [vmem:[#allocation2 + $0x40] sm:$0xff] 0.0
        %287 = vst [vmem:[#allocation2 + $0x48] sm:$0xff] 0.0
        %288 = vst [vmem:[#allocation2 + $0x50] sm:$0xff] 0.0
        %289 = vst [vmem:[#allocation2 + $0x58] sm:$0xff] 0.0
        %290 = vst [vmem:[#allocation2 + $0x60] sm:$0xff] 0.0
        %291 = vst [vmem:[#allocation2 + $0x68] sm:$0xff] 0.0
        %292 = vst [vmem:[#allocation2 + $0x70] sm:$0xff] 0.0
        %293 = vst [vmem:[#allocation2 + $0x78] sm:$0xff] 0.0
        %294 = vst [vmem:[#allocation2 + $0x80] sm:$0xff] 0.0
        %295 = vst [vmem:[#allocation2 + $0x88] sm:$0xff] 0.0
        %296 = vst [vmem:[#allocation2 + $0x90] sm:$0xff] 0.0
        %297 = vst [vmem:[#allocation2 + $0x98] sm:$0xff] 0.0
        %298 = vst [vmem:[#allocation2 + $0xa0] sm:$0xff] 0.0
        %299 = vst [vmem:[#allocation2 + $0xa8] sm:$0xff] 0.0
        %300 = vst [vmem:[#allocation2 + $0xb0] sm:$0xff] 0.0
        %301 = vst [vmem:[#allocation2 + $0xb8] sm:$0xff] 0.0
        %302 = vst [vmem:[#allocation2 + $0xc0] sm:$0xff] 0.0
        %303 = vst [vmem:[#allocation2 + $0xc8] sm:$0xff] 0.0
        %304 = vst [vmem:[#allocation2 + $0xd0] sm:$0xff] 0.0
        %305 = vst [vmem:[#allocation2 + $0xd8] sm:$0xff] 0.0
        %306 = vst [vmem:[#allocation2 + $0xe0] sm:$0xff] 0.0
        %307 = vst [vmem:[#allocation2 + $0xe8] sm:$0xff] 0.0
        %308 = vst [vmem:[#allocation2 + $0xf0] sm:$0xff] 0.0
        %309 = vst [vmem:[#allocation2 + $0xf8] sm:$0xff] 0.0
        %v310 = vld [vmem:[%s1] sm:$0xff]
        %v311 = vld [vmem:[%s1 + $0x8] sm:$0xff]
        %v312 = vld [vmem:[%s1 + $0x20] sm:$0xff]
        %v313 = vld [vmem:[%s1 + $0x28] sm:$0xff]
        %v314 = vld [vmem:[%s1 + $0x40] sm:$0xff]
        %v315 = vld [vmem:[%s1 + $0x48] sm:$0xff]
        %v316 = vld [vmem:[%s1 + $0x60] sm:$0xff]
        %v317 = vld [vmem:[%s1 + $0x68] sm:$0xff]
        %v318 = vld [vmem:[%s1 + $0x80] sm:$0xff]
        %v319 = vld [vmem:[%s1 + $0x88] sm:$0xff]
        %v320 = vld [vmem:[%s1 + $0xa0] sm:$0xff]
        %v321 = vld [vmem:[%s1 + $0xa8] sm:$0xff]
        %v322 = vld [vmem:[%s1 + $0xc0] sm:$0xff]
        %v323 = vld [vmem:[%s1 + $0xc8] sm:$0xff]
        %v324 = vld [vmem:[%s1 + $0xe0] sm:$0xff]
        %v325 = vld [vmem:[%s1 + $0xe8] sm:$0xff]
        %v326 = vld [vmem:[%s1 + $0x100] sm:$0xff]
        %v327 = vld [vmem:[%s1 + $0x108] sm:$0xff]
        %v328 = vld [vmem:[%s1 + $0x120] sm:$0xff]
        %v329 = vld [vmem:[%s1 + $0x128] sm:$0xff]
        %v330 = vld [vmem:[%s1 + $0x140] sm:$0xff]
        %v331 = vld [vmem:[%s1 + $0x148] sm:$0xff]
        %v332 = vld [vmem:[%s1 + $0x160] sm:$0xff]
        %v333 = vld [vmem:[%s1 + $0x168] sm:$0xff]
        %v334 = vld [vmem:[%s1 + $0x180] sm:$0xff]
        %v335 = vld [vmem:[%s1 + $0x188] sm:$0xff]
        %v336 = vld [vmem:[%s1 + $0x1a0] sm:$0xff]
        %v337 = vld [vmem:[%s1 + $0x1a8] sm:$0xff]
        %v338 = vld [vmem:[%s1 + $0x1c0] sm:$0xff]
        %v339 = vld [vmem:[%s1 + $0x1c8] sm:$0xff]
        %v340 = vld [vmem:[%s1 + $0x1e0] sm:$0xff]
        %v341 = vld [vmem:[%s1 + $0x1e8] sm:$0xff]
        %v342 = vld [vmem:[%s2] sm:$0x3]
        %v344 = vlaneseq
        %v345 = vshrl.u32 %v344, 7
        %v346 = vsub.s32 0, %v345
        %v347 = vrot.slane %v342, %v346
        %v348 = vlaneseq
        %v349 = vshrl.u32 %v348, 7
        %v350 = vsub.s32 1, %v349
        %v351 = vrot.slane %v342, %v350
        %354 = vmatprep.subr.mxu0 %v311
        %355 = vmatpush1.msra.mxu0 %v310
        %356 = vmatprep.subr.mxu0 %v313
        %357 = vmatpush1.msra.mxu0 %v312
        %358 = vmatprep.subr.mxu0 %v315
        %359 = vmatpush1.msra.mxu0 %v314
        %360 = vmatprep.subr.mxu0 %v317
        %361 = vmatpush1.msra.mxu0 %v316
        %362 = vmatprep.subr.mxu0 %v319
        %363 = vmatpush1.msra.mxu0 %v318
        %364 = vmatprep.subr.mxu0 %v321
        %365 = vmatpush1.msra.mxu0 %v320
        %366 = vmatprep.subr.mxu0 %v323
        %367 = vmatpush1.msra.mxu0 %v322
        %368 = vmatprep.subr.mxu0 %v325
        %369 = vmatpush1.msra.mxu0 %v324
        %370 = vmatprep.subr.mxu0 %v327
        %371 = vmatpush1.msra.mxu0 %v326
        %372 = vmatprep.subr.mxu0 %v329
        %373 = vmatpush1.msra.mxu0 %v328
        %374 = vmatprep.subr.mxu0 %v331
        %375 = vmatpush1.msra.mxu0 %v330
        %376 = vmatprep.subr.mxu0 %v333
        %377 = vmatpush1.msra.mxu0 %v332
        %378 = vmatprep.subr.mxu0 %v335
        %379 = vmatpush1.msra.mxu0 %v334
        %380 = vmatprep.subr.mxu0 %v337
        %381 = vmatpush1.msra.mxu0 %v336
        %382 = vmatprep.subr.mxu0 %v339
        %383 = vmatpush1.msra.mxu0 %v338
        %384 = vmatprep.subr.mxu0 %v341
        %385 = vmatpush1.msra.mxu0 %v340
        %386 = vmatprep.subr.mxu0 0.0
        %387 = vmatpush1.msra.mxu0 0.0
        %388 = vmatprep.subr.mxu0 0.0
        %389 = vmatpush1.msra.mxu0 0.0
        %390 = vmatprep.subr.mxu0 0.0
        %391 = vmatpush1.msra.mxu0 0.0
        %392 = vmatprep.subr.mxu0 0.0
        %393 = vmatpush1.msra.mxu0 0.0
        %394 = vmatprep.subr.mxu0 0.0
        %395 = vmatpush1.msra.mxu0 0.0
        %396 = vmatprep.subr.mxu0 0.0
        %397 = vmatpush1.msra.mxu0 0.0
        %398 = vmatprep.subr.mxu0 0.0
        %399 = vmatpush1.msra.mxu0 0.0
        %400 = vmatprep.subr.mxu0 0.0
        %401 = vmatpush1.msra.mxu0 0.0
        %402 = vmatprep.subr.mxu0 0.0
        %403 = vmatpush1.msra.mxu0 0.0
        %404 = vmatprep.subr.mxu0 0.0
        %405 = vmatpush1.msra.mxu0 0.0
        %406 = vmatprep.subr.mxu0 0.0
        %407 = vmatpush1.msra.mxu0 0.0
        %408 = vmatprep.subr.mxu0 0.0
        %409 = vmatpush1.msra.mxu0 0.0
        %410 = vmatprep.subr.mxu0 0.0
        %411 = vmatpush1.msra.mxu0 0.0
        %412 = vmatprep.subr.mxu0 0.0
        %413 = vmatpush1.msra.mxu0 0.0
        %414 = vmatprep.subr.mxu0 0.0
        %415 = vmatpush1.msra.mxu0 0.0
        %416 = vmatprep.subr.mxu0 0.0
        %417 = vmatpush1.msra.mxu0 0.0
        %418 = vmatprep.mubr.f32.mxu0 0.0
        %419 = vmatmul.mubr.f32.gmra.mrb[0].mxu0 %v246
        %v420 = vpop.f32.mrb[0].mxu0
        %v421 = vadd.f32 %v347, %v420
        %v422 = vpop.f32.mrb[0].mxu0
        %v423 = vadd.f32 %v351, %v422
        %424 = vmatprep.mubr.f32.mxu0 0.0
        %425 = vmatmul.mubr.f32.gmra.mrb[0].mxu0 %v247
        %v426 = vpop.f32.mrb[0].mxu0
        %v427 = vadd.f32 %v347, %v426
        %v428 = vpop.f32.mrb[0].mxu0
        %v429 = vadd.f32 %v351, %v428
        %430 = vmatprep.mubr.f32.mxu0 0.0
        %431 = vmatmul.mubr.f32.gmra.mrb[0].mxu0 %v248
        %v432 = vpop.f32.mrb[0].mxu0
        %v433 = vadd.f32 %v347, %v432
        %v434 = vpop.f32.mrb[0].mxu0
        %v435 = vadd.f32 %v351, %v434
        %436 = vmatprep.mubr.f32.mxu0 0.0
        %437 = vmatmul.mubr.f32.gmra.mrb[0].mxu0 %v249
        %v438 = vpop.f32.mrb[0].mxu0
        %v439 = vadd.f32 %v347, %v438
        %v440 = vpop.f32.mrb[0].mxu0
        %v441 = vadd.f32 %v351, %v440
        %442 = vmatprep.mubr.f32.mxu0 0.0
        %443 = vmatmul.mubr.f32.gmra.mrb[0].mxu0 %v250
        %v444 = vpop.f32.mrb[0].mxu0
        %v445 = vadd.f32 %v347, %v444
        %v446 = vpop.f32.mrb[0].mxu0
        %v447 = vadd.f32 %v351, %v446
        %448 = vmatprep.mubr.f32.mxu0 0.0
        %449 = vmatmul.mubr.f32.gmra.mrb[0].mxu0 %v251
        %v450 = vpop.f32.mrb[0].mxu0
        %v451 = vadd.f32 %v347, %v450
        %v452 = vpop.f32.mrb[0].mxu0
        %v453 = vadd.f32 %v351, %v452
        %454 = vmatprep.mubr.f32.mxu0 0.0
        %455 = vmatmul.mubr.f32.gmra.mrb[0].mxu0 %v252
        %v456 = vpop.f32.mrb[0].mxu0
        %v457 = vadd.f32 %v347, %v456
        %v458 = vpop.f32.mrb[0].mxu0
        %v459 = vadd.f32 %v351, %v458
        %460 = vmatprep.mubr.f32.mxu0 0.0
        %461 = vmatmul.mubr.f32.gmra.mrb[0].mxu0 %v253
        %v462 = vpop.f32.mrb[0].mxu0
        %v463 = vadd.f32 %v347, %v462
        %v464 = vpop.f32.mrb[0].mxu0
        %v465 = vadd.f32 %v351, %v464
        %466 = vmatprep.mubr.f32.mxu0 0.0
        %467 = vmatmul.mubr.f32.gmra.mrb[0].mxu0 %v254
        %v468 = vpop.f32.mrb[0].mxu0
        %v469 = vadd.f32 %v347, %v468
        %v470 = vpop.f32.mrb[0].mxu0
        %v471 = vadd.f32 %v351, %v470
        %472 = vmatprep.mubr.f32.mxu0 0.0
        %473 = vmatmul.mubr.f32.gmra.mrb[0].mxu0 %v255
        %v474 = vpop.f32.mrb[0].mxu0
        %v475 = vadd.f32 %v347, %v474
        %v476 = vpop.f32.mrb[0].mxu0
        %v477 = vadd.f32 %v351, %v476
        %478 = vmatprep.mubr.f32.mxu0 0.0
        %479 = vmatmul.mubr.f32.gmra.mrb[0].mxu0 %v256
        %v480 = vpop.f32.mrb[0].mxu0
        %v481 = vadd.f32 %v347, %v480
        %v482 = vpop.f32.mrb[0].mxu0
        %v483 = vadd.f32 %v351, %v482
        %484 = vmatprep.mubr.f32.mxu0 0.0
        %485 = vmatmul.mubr.f32.gmra.mrb[0].mxu0 %v257
        %v486 = vpop.f32.mrb[0].mxu0
        %v487 = vadd.f32 %v347, %v486
        %v488 = vpop.f32.mrb[0].mxu0
        %v489 = vadd.f32 %v351, %v488
        %490 = vmatprep.mubr.f32.mxu0 0.0
        %491 = vmatmul.mubr.f32.gmra.mrb[0].mxu0 %v258
        %v492 = vpop.f32.mrb[0].mxu0
        %v493 = vadd.f32 %v347, %v492
        %v494 = vpop.f32.mrb[0].mxu0
        %v495 = vadd.f32 %v351, %v494
        %496 = vmatprep.mubr.f32.mxu0 0.0
        %497 = vmatmul.mubr.f32.gmra.mrb[0].mxu0 %v259
        %v498 = vpop.f32.mrb[0].mxu0
        %v499 = vadd.f32 %v347, %v498
        %v500 = vpop.f32.mrb[0].mxu0
        %v501 = vadd.f32 %v351, %v500
        %502 = vmatprep.mubr.f32.mxu0 0.0
        %503 = vmatmul.mubr.f32.gmra.mrb[0].mxu0 %v260
        %v504 = vpop.f32.mrb[0].mxu0
        %v505 = vadd.f32 %v347, %v504
        %v506 = vpop.f32.mrb[0].mxu0
        %v507 = vadd.f32 %v351, %v506
        %508 = vmatprep.mubr.f32.mxu0 0.0
        %509 = vmatmul.mubr.f32.gmra.mrb[0].mxu0 %v261
        %v510 = vpop.f32.mrb[0].mxu0
        %v511 = vadd.f32 %v347, %v510
        %v512 = vpop.f32.mrb[0].mxu0
        %v513 = vadd.f32 %v351, %v512
        %514 = vmatprep.mubr.f32.mxu0 0.0
        %515 = vmatmul.mubr.f32.gmra.mrb[0].mxu0 %v262
        %v516 = vpop.f32.mrb[0].mxu0
        %v517 = vadd.f32 %v347, %v516
        %v518 = vpop.f32.mrb[0].mxu0
        %v519 = vadd.f32 %v351, %v518
        %520 = vmatprep.mubr.f32.mxu0 0.0
        %521 = vmatmul.mubr.f32.gmra.mrb[0].mxu0 %v263
        %v522 = vpop.f32.mrb[0].mxu0
        %v523 = vadd.f32 %v347, %v522
        %v524 = vpop.f32.mrb[0].mxu0
        %v525 = vadd.f32 %v351, %v524
        %526 = vmatprep.mubr.f32.mxu0 0.0
        %527 = vmatmul.mubr.f32.gmra.mrb[0].mxu0 %v264
        %v528 = vpop.f32.mrb[0].mxu0
        %v529 = vadd.f32 %v347, %v528
        %v530 = vpop.f32.mrb[0].mxu0
        %v531 = vadd.f32 %v351, %v530
        %532 = vmatprep.mubr.f32.mxu0 0.0
        %533 = vmatmul.mubr.f32.gmra.mrb[0].mxu0 %v265
        %v534 = vpop.f32.mrb[0].mxu0
        %v535 = vadd.f32 %v347, %v534
        %v536 = vpop.f32.mrb[0].mxu0
        %v537 = vadd.f32 %v351, %v536
        %538 = vmatprep.mubr.f32.mxu0 0.0
        %539 = vmatmul.mubr.f32.gmra.mrb[0].mxu0 %v266
        %v540 = vpop.f32.mrb[0].mxu0
        %v541 = vadd.f32 %v347, %v540
        %v542 = vpop.f32.mrb[0].mxu0
        %v543 = vadd.f32 %v351, %v542
        %544 = vmatprep.mubr.f32.mxu0 0.0
        %545 = vmatmul.mubr.f32.gmra.mrb[0].mxu0 %v267
        %v546 = vpop.f32.mrb[0].mxu0
        %v547 = vadd.f32 %v347, %v546
        %v548 = vpop.f32.mrb[0].mxu0
        %v549 = vadd.f32 %v351, %v548
        %550 = vmatprep.mubr.f32.mxu0 0.0
        %551 = vmatmul.mubr.f32.gmra.mrb[0].mxu0 %v268
        %v552 = vpop.f32.mrb[0].mxu0
        %v553 = vadd.f32 %v347, %v552
        %v554 = vpop.f32.mrb[0].mxu0
        %v555 = vadd.f32 %v351, %v554
        %556 = vmatprep.mubr.f32.mxu0 0.0
        %557 = vmatmul.mubr.f32.gmra.mrb[0].mxu0 %v269
        %v558 = vpop.f32.mrb[0].mxu0
        %v559 = vadd.f32 %v347, %v558
        %v560 = vpop.f32.mrb[0].mxu0
        %v561 = vadd.f32 %v351, %v560
        %562 = vmatprep.mubr.f32.mxu0 0.0
        %563 = vmatmul.mubr.f32.gmra.mrb[0].mxu0 %v270
        %v564 = vpop.f32.mrb[0].mxu0
        %v565 = vadd.f32 %v347, %v564
        %v566 = vpop.f32.mrb[0].mxu0
        %v567 = vadd.f32 %v351, %v566
        %568 = vmatprep.mubr.f32.mxu0 0.0
        %569 = vmatmul.mubr.f32.gmra.mrb[0].mxu0 %v271
        %v570 = vpop.f32.mrb[0].mxu0
        %v571 = vadd.f32 %v347, %v570
        %v572 = vpop.f32.mrb[0].mxu0
        %v573 = vadd.f32 %v351, %v572
        %574 = vmatprep.mubr.f32.mxu0 0.0
        %575 = vmatmul.mubr.f32.gmra.mrb[0].mxu0 %v272
        %v576 = vpop.f32.mrb[0].mxu0
        %v577 = vadd.f32 %v347, %v576
        %v578 = vpop.f32.mrb[0].mxu0
        %v579 = vadd.f32 %v351, %v578
        %580 = vmatprep.mubr.f32.mxu0 0.0
        %581 = vmatmul.mubr.f32.gmra.mrb[0].mxu0 %v273
        %v582 = vpop.f32.mrb[0].mxu0
        %v583 = vadd.f32 %v347, %v582
        %v584 = vpop.f32.mrb[0].mxu0
        %v585 = vadd.f32 %v351, %v584
        %586 = vmatprep.mubr.f32.mxu0 0.0
        %587 = vmatmul.mubr.f32.gmra.mrb[0].mxu0 %v274
        %v588 = vpop.f32.mrb[0].mxu0
        %v589 = vadd.f32 %v347, %v588
        %v590 = vpop.f32.mrb[0].mxu0
        %v591 = vadd.f32 %v351, %v590
        %592 = vmatprep.mubr.f32.mxu0 0.0
        %593 = vmatmul.mubr.f32.gmra.mrb[0].mxu0 %v275
        %v594 = vpop.f32.mrb[0].mxu0
        %v595 = vadd.f32 %v347, %v594
        %v596 = vpop.f32.mrb[0].mxu0
        %v597 = vadd.f32 %v351, %v596
        %598 = vmatprep.mubr.f32.mxu0 0.0
        %599 = vmatmul.mubr.f32.gmra.mrb[0].mxu0 %v276
        %v600 = vpop.f32.mrb[0].mxu0
        %v601 = vadd.f32 %v347, %v600
        %v602 = vpop.f32.mrb[0].mxu0
        %v603 = vadd.f32 %v351, %v602
        %604 = vmatprep.mubr.f32.mxu0 0.0
        %605 = vmatmul.mubr.f32.gmra.mrb[0].mxu0 %v277
        %v606 = vpop.f32.mrb[0].mxu0
        %v607 = vadd.f32 %v347, %v606
        %v608 = vpop.f32.mrb[0].mxu0
        %v609 = vadd.f32 %v351, %v608
        %610 = vdwg.mxu0
        %v611 = vmul.f32 %v421, 0.5
        %v612 = vmul.f32 %v423, 0.5
        %v613 = vmul.f32 %v427, 0.5
        %v614 = vmul.f32 %v429, 0.5
        %v615 = vmul.f32 %v433, 0.5
        %v616 = vmul.f32 %v435, 0.5
        %v617 = vmul.f32 %v439, 0.5
        %v618 = vmul.f32 %v441, 0.5
        %v619 = vmul.f32 %v445, 0.5
        %v620 = vmul.f32 %v447, 0.5
        %v621 = vmul.f32 %v451, 0.5
        %v622 = vmul.f32 %v453, 0.5
        %v623 = vmul.f32 %v457, 0.5
        %v624 = vmul.f32 %v459, 0.5
        %v625 = vmul.f32 %v463, 0.5
        %v626 = vmul.f32 %v465, 0.5
        %v627 = vmul.f32 %v469, 0.5
        %v628 = vmul.f32 %v471, 0.5
        %v629 = vmul.f32 %v475, 0.5
        %v630 = vmul.f32 %v477, 0.5
        %v631 = vmul.f32 %v481, 0.5
        %v632 = vmul.f32 %v483, 0.5
        %v633 = vmul.f32 %v487, 0.5
        %v634 = vmul.f32 %v489, 0.5
        %v635 = vmul.f32 %v493, 0.5
        %v636 = vmul.f32 %v495, 0.5
        %v637 = vmul.f32 %v499, 0.5
        %v638 = vmul.f32 %v501, 0.5
        %v639 = vmul.f32 %v505, 0.5
        %v640 = vmul.f32 %v507, 0.5
        %v641 = vmul.f32 %v511, 0.5
        %v642 = vmul.f32 %v513, 0.5
        %v643 = vmul.f32 %v517, 0.5
        %v644 = vmul.f32 %v519, 0.5
        %v645 = vmul.f32 %v523, 0.5
        %v646 = vmul.f32 %v525, 0.5
        %v647 = vmul.f32 %v529, 0.5
        %v648 = vmul.f32 %v531, 0.5
        %v649 = vmul.f32 %v535, 0.5
        %v650 = vmul.f32 %v537, 0.5
        %v651 = vmul.f32 %v541, 0.5
        %v652 = vmul.f32 %v543, 0.5
        %v653 = vmul.f32 %v547, 0.5
        %v654 = vmul.f32 %v549, 0.5
        %v655 = vmul.f32 %v553, 0.5
        %v656 = vmul.f32 %v555, 0.5
        %v657 = vmul.f32 %v559, 0.5
        %v658 = vmul.f32 %v561, 0.5
        %v659 = vmul.f32 %v565, 0.5
        %v660 = vmul.f32 %v567, 0.5
        %v661 = vmul.f32 %v571, 0.5
        %v662 = vmul.f32 %v573, 0.5
        %v663 = vmul.f32 %v577, 0.5
        %v664 = vmul.f32 %v579, 0.5
        %v665 = vmul.f32 %v583, 0.5
        %v666 = vmul.f32 %v585, 0.5
        %v667 = vmul.f32 %v589, 0.5
        %v668 = vmul.f32 %v591, 0.5
        %v669 = vmul.f32 %v595, 0.5
        %v670 = vmul.f32 %v597, 0.5
        %v671 = vmul.f32 %v601, 0.5
        %v672 = vmul.f32 %v603, 0.5
        %v673 = vmul.f32 %v607, 0.5
        %v674 = vmul.f32 %v609, 0.5
        %v675 = vmul.f32 %v421, 0.70710677
        %v676 = vmul.f32 %v423, 0.70710677
        %v677 = vmul.f32 %v427, 0.70710677
        %v678 = vmul.f32 %v429, 0.70710677
        %v679 = vmul.f32 %v433, 0.70710677
        %v680 = vmul.f32 %v435, 0.70710677
        %v681 = vmul.f32 %v439, 0.70710677
        %v682 = vmul.f32 %v441, 0.70710677
        %v683 = vmul.f32 %v445, 0.70710677
        %v684 = vmul.f32 %v447, 0.70710677
        %v685 = vmul.f32 %v451, 0.70710677
        %v686 = vmul.f32 %v453, 0.70710677
        %v687 = vmul.f32 %v457, 0.70710677
        %v688 = vmul.f32 %v459, 0.70710677
        %v689 = vmul.f32 %v463, 0.70710677
        %v690 = vmul.f32 %v465, 0.70710677
        %v691 = vmul.f32 %v469, 0.70710677
        %v692 = vmul.f32 %v471, 0.70710677
        %v693 = vmul.f32 %v475, 0.70710677
        %v694 = vmul.f32 %v477, 0.70710677
        %v695 = vmul.f32 %v481, 0.70710677
        %v696 = vmul.f32 %v483, 0.70710677
        %v697 = vmul.f32 %v487, 0.70710677
        %v698 = vmul.f32 %v489, 0.70710677
        %v699 = vmul.f32 %v493, 0.70710677
        %v700 = vmul.f32 %v495, 0.70710677
        %v701 = vmul.f32 %v499, 0.70710677
        %v702 = vmul.f32 %v501, 0.70710677
        %v703 = vmul.f32 %v505, 0.70710677
        %v704 = vmul.f32 %v507, 0.70710677
        %v705 = vmul.f32 %v511, 0.70710677
        %v706 = vmul.f32 %v513, 0.70710677
        %v707 = vmul.f32 %v517, 0.70710677
        %v708 = vmul.f32 %v519, 0.70710677
        %v709 = vmul.f32 %v523, 0.70710677
        %v710 = vmul.f32 %v525, 0.70710677
        %v711 = vmul.f32 %v529, 0.70710677
        %v712 = vmul.f32 %v531, 0.70710677
        %v713 = vmul.f32 %v535, 0.70710677
        %v714 = vmul.f32 %v537, 0.70710677
        %v715 = vmul.f32 %v541, 0.70710677
        %v716 = vmul.f32 %v543, 0.70710677
        %v717 = vmul.f32 %v547, 0.70710677
        %v718 = vmul.f32 %v549, 0.70710677
        %v719 = vmul.f32 %v553, 0.70710677
        %v720 = vmul.f32 %v555, 0.70710677
        %v721 = vmul.f32 %v559, 0.70710677
        %v722 = vmul.f32 %v561, 0.70710677
        %v723 = vmul.f32 %v565, 0.70710677
        %v724 = vmul.f32 %v567, 0.70710677
        %v725 = vmul.f32 %v571, 0.70710677
        %v726 = vmul.f32 %v573, 0.70710677
        %v727 = vmul.f32 %v577, 0.70710677
        %v728 = vmul.f32 %v579, 0.70710677
        %v729 = vmul.f32 %v583, 0.70710677
        %v730 = vmul.f32 %v585, 0.70710677
        %v731 = vmul.f32 %v589, 0.70710677
        %v732 = vmul.f32 %v591, 0.70710677
        %v733 = vmul.f32 %v595, 0.70710677
        %v734 = vmul.f32 %v597, 0.70710677
        %v735 = vmul.f32 %v601, 0.70710677
        %v736 = vmul.f32 %v603, 0.70710677
        %v737 = vmul.f32 %v607, 0.70710677
        %v738 = vmul.f32 %v609, 0.70710677
        %v739 = verf.f32.pop %v675
        %v740 = verf.f32.pop %v676
        %v741 = verf.f32.pop %v677
        %v742 = verf.f32.pop %v678
        %v743 = verf.f32.pop %v679
        %v744 = verf.f32.pop %v680
        %v745 = verf.f32.pop %v681
        %v746 = verf.f32.pop %v682
        %v747 = verf.f32.pop %v683
        %v748 = verf.f32.pop %v684
        %v749 = verf.f32.pop %v685
        %v750 = verf.f32.pop %v686
        %v751 = verf.f32.pop %v687
        %v752 = verf.f32.pop %v688
        %v753 = verf.f32.pop %v689
        %v754 = verf.f32.pop %v690
        %v755 = verf.f32.pop %v691
        %v756 = verf.f32.pop %v692
        %v757 = verf.f32.pop %v693
        %v758 = verf.f32.pop %v694
        %v759 = verf.f32.pop %v695
        %v760 = verf.f32.pop %v696
        %v761 = verf.f32.pop %v697
        %v762 = verf.f32.pop %v698
        %v763 = verf.f32.pop %v699
        %v764 = verf.f32.pop %v700
        %v765 = verf.f32.pop %v701
        %v766 = verf.f32.pop %v702
        %v767 = verf.f32.pop %v703
        %v768 = verf.f32.pop %v704
        %v769 = verf.f32.pop %v705
        %v770 = verf.f32.pop %v706
        %v771 = verf.f32.pop %v707
        %v772 = verf.f32.pop %v708
        %v773 = verf.f32.pop %v709
        %v774 = verf.f32.pop %v710
        %v775 = verf.f32.pop %v711
        %v776 = verf.f32.pop %v712
        %v777 = verf.f32.pop %v713
        %v778 = verf.f32.pop %v714
        %v779 = verf.f32.pop %v715
        %v780 = verf.f32.pop %v716
        %v781 = verf.f32.pop %v717
        %v782 = verf.f32.pop %v718
        %v783 = verf.f32.pop %v719
        %v784 = verf.f32.pop %v720
        %v785 = verf.f32.pop %v721
        %v786 = verf.f32.pop %v722
        %v787 = verf.f32.pop %v723
        %v788 = verf.f32.pop %v724
        %v789 = verf.f32.pop %v725
        %v790 = verf.f32.pop %v726
        %v791 = verf.f32.pop %v727
        %v792 = verf.f32.pop %v728
        %v793 = verf.f32.pop %v729
        %v794 = verf.f32.pop %v730
        %v795 = verf.f32.pop %v731
        %v796 = verf.f32.pop %v732
        %v797 = verf.f32.pop %v733
        %v798 = verf.f32.pop %v734
        %v799 = verf.f32.pop %v735
        %v800 = verf.f32.pop %v736
        %v801 = verf.f32.pop %v737
        %v802 = verf.f32.pop %v738
        %v803 = vadd.f32 %v739, 1.0
        %v804 = vadd.f32 %v740, 1.0
        %v805 = vadd.f32 %v741, 1.0
        %v806 = vadd.f32 %v742, 1.0
        %v807 = vadd.f32 %v743, 1.0
        %v808 = vadd.f32 %v744, 1.0
        %v809 = vadd.f32 %v745, 1.0
        %v810 = vadd.f32 %v746, 1.0
        %v811 = vadd.f32 %v747, 1.0
        %v812 = vadd.f32 %v748, 1.0
        %v813 = vadd.f32 %v749, 1.0
        %v814 = vadd.f32 %v750, 1.0
        %v815 = vadd.f32 %v751, 1.0
        %v816 = vadd.f32 %v752, 1.0
        %v817 = vadd.f32 %v753, 1.0
        %v818 = vadd.f32 %v754, 1.0
        %v819 = vadd.f32 %v755, 1.0
        %v820 = vadd.f32 %v756, 1.0
        %v821 = vadd.f32 %v757, 1.0
        %v822 = vadd.f32 %v758, 1.0
        %v823 = vadd.f32 %v759, 1.0
        %v824 = vadd.f32 %v760, 1.0
        %v825 = vadd.f32 %v761, 1.0
        %v826 = vadd.f32 %v762, 1.0
        %v827 = vadd.f32 %v763, 1.0
        %v828 = vadd.f32 %v764, 1.0
        %v829 = vadd.f32 %v765, 1.0
        %v830 = vadd.f32 %v766, 1.0
        %v831 = vadd.f32 %v767, 1.0
        %v832 = vadd.f32 %v768, 1.0
        %v833 = vadd.f32 %v769, 1.0
        %v834 = vadd.f32 %v770, 1.0
        %v835 = vadd.f32 %v771, 1.0
        %v836 = vadd.f32 %v772, 1.0
        %v837 = vadd.f32 %v773, 1.0
        %v838 = vadd.f32 %v774, 1.0
        %v839 = vadd.f32 %v775, 1.0
        %v840 = vadd.f32 %v776, 1.0
        %v841 = vadd.f32 %v777, 1.0
        %v842 = vadd.f32 %v778, 1.0
        %v843 = vadd.f32 %v779, 1.0
        %v844 = vadd.f32 %v780, 1.0
        %v845 = vadd.f32 %v781, 1.0
        %v846 = vadd.f32 %v782, 1.0
        %v847 = vadd.f32 %v783, 1.0
        %v848 = vadd.f32 %v784, 1.0
        %v849 = vadd.f32 %v785, 1.0
        %v850 = vadd.f32 %v786, 1.0
        %v851 = vadd.f32 %v787, 1.0
        %v852 = vadd.f32 %v788, 1.0
        %v853 = vadd.f32 %v789, 1.0
        %v854 = vadd.f32 %v790, 1.0
        %v855 = vadd.f32 %v791, 1.0
        %v856 = vadd.f32 %v792, 1.0
        %v857 = vadd.f32 %v793, 1.0
        %v858 = vadd.f32 %v794, 1.0
        %v859 = vadd.f32 %v795, 1.0
        %v860 = vadd.f32 %v796, 1.0
        %v861 = vadd.f32 %v797, 1.0
        %v862 = vadd.f32 %v798, 1.0
        %v863 = vadd.f32 %v799, 1.0
        %v864 = vadd.f32 %v800, 1.0
        %v865 = vadd.f32 %v801, 1.0
        %v866 = vadd.f32 %v802, 1.0
        %v867 = vmul.f32 %v611, %v803
        %v868 = vmul.f32 %v612, %v804
        %v869 = vmul.f32 %v613, %v805
        %v870 = vmul.f32 %v614, %v806
        %v871 = vmul.f32 %v615, %v807
        %v872 = vmul.f32 %v616, %v808
        %v873 = vmul.f32 %v617, %v809
        %v874 = vmul.f32 %v618, %v810
        %v875 = vmul.f32 %v619, %v811
        %v876 = vmul.f32 %v620, %v812
        %v877 = vmul.f32 %v621, %v813
        %v878 = vmul.f32 %v622, %v814
        %v879 = vmul.f32 %v623, %v815
        %v880 = vmul.f32 %v624, %v816
        %v881 = vmul.f32 %v625, %v817
        %v882 = vmul.f32 %v626, %v818
        %v883 = vmul.f32 %v627, %v819
        %v884 = vmul.f32 %v628, %v820
        %v885 = vmul.f32 %v629, %v821
        %v886 = vmul.f32 %v630, %v822
        %v887 = vmul.f32 %v631, %v823
        %v888 = vmul.f32 %v632, %v824
        %v889 = vmul.f32 %v633, %v825
        %v890 = vmul.f32 %v634, %v826
        %v891 = vmul.f32 %v635, %v827
        %v892 = vmul.f32 %v636, %v828
        %v893 = vmul.f32 %v637, %v829
        %v894 = vmul.f32 %v638, %v830
        %v895 = vmul.f32 %v639, %v831
        %v896 = vmul.f32 %v640, %v832
        %v897 = vmul.f32 %v641, %v833
        %v898 = vmul.f32 %v642, %v834
        %v899 = vmul.f32 %v643, %v835
        %v900 = vmul.f32 %v644, %v836
        %v901 = vmul.f32 %v645, %v837
        %v902 = vmul.f32 %v646, %v838
        %v903 = vmul.f32 %v647, %v839
        %v904 = vmul.f32 %v648, %v840
        %v905 = vmul.f32 %v649, %v841
        %v906 = vmul.f32 %v650, %v842
        %v907 = vmul.f32 %v651, %v843
        %v908 = vmul.f32 %v652, %v844
        %v909 = vmul.f32 %v653, %v845
        %v910 = vmul.f32 %v654, %v846
        %v911 = vmul.f32 %v655, %v847
        %v912 = vmul.f32 %v656, %v848
        %v913 = vmul.f32 %v657, %v849
        %v914 = vmul.f32 %v658, %v850
        %v915 = vmul.f32 %v659, %v851
        %v916 = vmul.f32 %v660, %v852
        %v917 = vmul.f32 %v661, %v853
        %v918 = vmul.f32 %v662, %v854
        %v919 = vmul.f32 %v663, %v855
        %v920 = vmul.f32 %v664, %v856
        %v921 = vmul.f32 %v665, %v857
        %v922 = vmul.f32 %v666, %v858
        %v923 = vmul.f32 %v667, %v859
        %v924 = vmul.f32 %v668, %v860
        %v925 = vmul.f32 %v669, %v861
        %v926 = vmul.f32 %v670, %v862
        %v927 = vmul.f32 %v671, %v863
        %v928 = vmul.f32 %v672, %v864
        %v929 = vmul.f32 %v673, %v865
        %v930 = vmul.f32 %v674, %v866
        %v931 = vld [vmem:[#allocation2] sm:$0xff]
        %v932 = vld [vmem:[#allocation2 + $0x8] sm:$0xff]
        %v933 = vld [vmem:[#allocation2 + $0x10] sm:$0xff]
        %v934 = vld [vmem:[#allocation2 + $0x18] sm:$0xff]
        %v935 = vld [vmem:[#allocation2 + $0x20] sm:$0xff]
        %v936 = vld [vmem:[#allocation2 + $0x28] sm:$0xff]
        %v937 = vld [vmem:[#allocation2 + $0x30] sm:$0xff]
        %v938 = vld [vmem:[#allocation2 + $0x38] sm:$0xff]
        %v939 = vld [vmem:[#allocation2 + $0x40] sm:$0xff]
        %v940 = vld [vmem:[#allocation2 + $0x48] sm:$0xff]
        %v941 = vld [vmem:[#allocation2 + $0x50] sm:$0xff]
        %v942 = vld [vmem:[#allocation2 + $0x58] sm:$0xff]
        %v943 = vld [vmem:[#allocation2 + $0x60] sm:$0xff]
        %v944 = vld [vmem:[#allocation2 + $0x68] sm:$0xff]
        %v945 = vld [vmem:[#allocation2 + $0x70] sm:$0xff]
        %v946 = vld [vmem:[#allocation2 + $0x78] sm:$0xff]
        %v947 = vld [vmem:[#allocation2 + $0x80] sm:$0xff]
        %v948 = vld [vmem:[#allocation2 + $0x88] sm:$0xff]
        %v949 = vld [vmem:[#allocation2 + $0x90] sm:$0xff]
        %v950 = vld [vmem:[#allocation2 + $0x98] sm:$0xff]
        %v951 = vld [vmem:[#allocation2 + $0xa0] sm:$0xff]
        %v952 = vld [vmem:[#allocation2 + $0xa8] sm:$0xff]
        %v953 = vld [vmem:[#allocation2 + $0xb0] sm:$0xff]
        %v954 = vld [vmem:[#allocation2 + $0xb8] sm:$0xff]
        %v955 = vld [vmem:[#allocation2 + $0xc0] sm:$0xff]
        %v956 = vld [vmem:[#allocation2 + $0xc8] sm:$0xff]
        %v957 = vld [vmem:[#allocation2 + $0xd0] sm:$0xff]
        %v958 = vld [vmem:[#allocation2 + $0xd8] sm:$0xff]
        %v959 = vld [vmem:[#allocation2 + $0xe0] sm:$0xff]
        %v960 = vld [vmem:[#allocation2 + $0xe8] sm:$0xff]
        %v961 = vld [vmem:[#allocation2 + $0xf0] sm:$0xff]
        %v962 = vld [vmem:[#allocation2 + $0xf8] sm:$0xff]
        %v963 = vld [vmem:[%s3] sm:$0xff]
        %v964 = vld [vmem:[%s3 + $0x8] sm:$0xff]
        %v965 = vld [vmem:[%s3 + $0x10] sm:$0xff]
        %v966 = vld [vmem:[%s3 + $0x18] sm:$0xff]
        %v967 = vld [vmem:[%s3 + $0x20] sm:$0xff]
        %v968 = vld [vmem:[%s3 + $0x28] sm:$0xff]
        %v969 = vld [vmem:[%s3 + $0x30] sm:$0xff]
        %v970 = vld [vmem:[%s3 + $0x38] sm:$0xff]
        %v971 = vld [vmem:[%s3 + $0x40] sm:$0xff]
        %v972 = vld [vmem:[%s3 + $0x48] sm:$0xff]
        %v973 = vld [vmem:[%s3 + $0x50] sm:$0xff]
        %v974 = vld [vmem:[%s3 + $0x58] sm:$0xff]
        %v975 = vld [vmem:[%s3 + $0x60] sm:$0xff]
        %v976 = vld [vmem:[%s3 + $0x68] sm:$0xff]
        %v977 = vld [vmem:[%s3 + $0x70] sm:$0xff]
        %v978 = vld [vmem:[%s3 + $0x78] sm:$0xff]
        %v979 = vld [vmem:[%s3 + $0x80] sm:$0xff]
        %v980 = vld [vmem:[%s3 + $0x88] sm:$0xff]
        %v981 = vld [vmem:[%s3 + $0x90] sm:$0xff]
        %v982 = vld [vmem:[%s3 + $0x98] sm:$0xff]
        %v983 = vld [vmem:[%s3 + $0xa0] sm:$0xff]
        %v984 = vld [vmem:[%s3 + $0xa8] sm:$0xff]
        %v985 = vld [vmem:[%s3 + $0xb0] sm:$0xff]
        %v986 = vld [vmem:[%s3 + $0xb8] sm:$0xff]
        %v987 = vld [vmem:[%s3 + $0xc0] sm:$0xff]
        %v988 = vld [vmem:[%s3 + $0xc8] sm:$0xff]
        %v989 = vld [vmem:[%s3 + $0xd0] sm:$0xff]
        %v990 = vld [vmem:[%s3 + $0xd8] sm:$0xff]
        %v991 = vld [vmem:[%s3 + $0xe0] sm:$0xff]
        %v992 = vld [vmem:[%s3 + $0xe8] sm:$0xff]
        %v993 = vld [vmem:[%s3 + $0xf0] sm:$0xff]
        %v994 = vld [vmem:[%s3 + $0xf8] sm:$0xff]
        %995 = vmatprep.subr.mxu0 0.0
        %996 = vmatpush1.msra.mxu0 %v963
        %997 = vmatprep.subr.mxu0 0.0
        %998 = vmatpush1.msra.mxu0 %v964
        %999 = vmatprep.subr.mxu0 0.0
        %1000 = vmatpush1.msra.mxu0 %v965
        %1001 = vmatprep.subr.mxu0 0.0
        %1002 = vmatpush1.msra.mxu0 %v966
        %1003 = vmatprep.subr.mxu0 0.0
        %1004 = vmatpush1.msra.mxu0 %v967
        %1005 = vmatprep.subr.mxu0 0.0
        %1006 = vmatpush1.msra.mxu0 %v968
        %1007 = vmatprep.subr.mxu0 0.0
        %1008 = vmatpush1.msra.mxu0 %v969
        %1009 = vmatprep.subr.mxu0 0.0
        %1010 = vmatpush1.msra.mxu0 %v970
        %1011 = vmatprep.subr.mxu0 0.0
        %1012 = vmatpush1.msra.mxu0 %v971
        %1013 = vmatprep.subr.mxu0 0.0
        %1014 = vmatpush1.msra.mxu0 %v972
        %1015 = vmatprep.subr.mxu0 0.0
        %1016 = vmatpush1.msra.mxu0 %v973
        %1017 = vmatprep.subr.mxu0 0.0
        %1018 = vmatpush1.msra.mxu0 %v974
        %1019 = vmatprep.subr.mxu0 0.0
        %1020 = vmatpush1.msra.mxu0 %v975
        %1021 = vmatprep.subr.mxu0 0.0
        %1022 = vmatpush1.msra.mxu0 %v976
        %1023 = vmatprep.subr.mxu0 0.0
        %1024 = vmatpush1.msra.mxu0 %v977
        %1025 = vmatprep.subr.mxu0 0.0
        %1026 = vmatpush1.msra.mxu0 %v978
        %1027 = vmatprep.subr.mxu0 0.0
        %1028 = vmatpush1.msra.mxu0 %v979
        %1029 = vmatprep.subr.mxu0 0.0
        %1030 = vmatpush1.msra.mxu0 %v980
        %1031 = vmatprep.subr.mxu0 0.0
        %1032 = vmatpush1.msra.mxu0 %v981
        %1033 = vmatprep.subr.mxu0 0.0
        %1034 = vmatpush1.msra.mxu0 %v982
        %1035 = vmatprep.subr.mxu0 0.0
        %1036 = vmatpush1.msra.mxu0 %v983
        %1037 = vmatprep.subr.mxu0 0.0
        %1038 = vmatpush1.msra.mxu0 %v984
        %1039 = vmatprep.subr.mxu0 0.0
        %1040 = vmatpush1.msra.mxu0 %v985
        %1041 = vmatprep.subr.mxu0 0.0
        %1042 = vmatpush1.msra.mxu0 %v986
        %1043 = vmatprep.subr.mxu0 0.0
        %1044 = vmatpush1.msra.mxu0 %v987
        %1045 = vmatprep.subr.mxu0 0.0
        %1046 = vmatpush1.msra.mxu0 %v988
        %1047 = vmatprep.subr.mxu0 0.0
        %1048 = vmatpush1.msra.mxu0 %v989
        %1049 = vmatprep.subr.mxu0 0.0
        %1050 = vmatpush1.msra.mxu0 %v990
        %1051 = vmatprep.subr.mxu0 0.0
        %1052 = vmatpush1.msra.mxu0 %v991
        %1053 = vmatprep.subr.mxu0 0.0
        %1054 = vmatpush1.msra.mxu0 %v992
        %1055 = vmatprep.subr.mxu0 0.0
        %1056 = vmatpush1.msra.mxu0 %v993
        %1057 = vmatprep.subr.mxu0 0.0
        %1058 = vmatpush1.msra.mxu0 %v994
        %1059 = vmatprep.mubr.f32.mxu0 %v868
        %1060 = vmatmul.mubr.f32.gmra.mrb[0].mxu0 %v867
        %v1061 = vpop.f32.mrb[0].mxu0
        %v1062 = vadd.f32 0.0, %v1061
        %v1063 = vpop.f32.mrb[0].mxu0
        %1064 = vmatprep.mubr.f32.mxu0 %v870
        %1065 = vmatmul.mubr.f32.gmra.mrb[0].mxu0 %v869
        %v1066 = vpop.f32.mrb[0].mxu0
        %v1067 = vadd.f32 0.0, %v1066
        %v1068 = vpop.f32.mrb[0].mxu0
        %1069 = vmatprep.mubr.f32.mxu0 %v872
        %1070 = vmatmul.mubr.f32.gmra.mrb[0].mxu0 %v871
        %v1071 = vpop.f32.mrb[0].mxu0
        %v1072 = vadd.f32 0.0, %v1071
        %v1073 = vpop.f32.mrb[0].mxu0
        %1074 = vmatprep.mubr.f32.mxu0 %v874
        %1075 = vmatmul.mubr.f32.gmra.mrb[0].mxu0 %v873
        %v1076 = vpop.f32.mrb[0].mxu0
        %v1077 = vadd.f32 0.0, %v1076
        %v1078 = vpop.f32.mrb[0].mxu0
        %1079 = vmatprep.mubr.f32.mxu0 %v876
        %1080 = vmatmul.mubr.f32.gmra.mrb[0].mxu0 %v875
        %v1081 = vpop.f32.mrb[0].mxu0
        %v1082 = vadd.f32 0.0, %v1081
        %v1083 = vpop.f32.mrb[0].mxu0
        %1084 = vmatprep.mubr.f32.mxu0 %v878
        %1085 = vmatmul.mubr.f32.gmra.mrb[0].mxu0 %v877
        %v1086 = vpop.f32.mrb[0].mxu0
        %v1087 = vadd.f32 0.0, %v1086
        %v1088 = vpop.f32.mrb[0].mxu0
        %1089 = vmatprep.mubr.f32.mxu0 %v880
        %1090 = vmatmul.mubr.f32.gmra.mrb[0].mxu0 %v879
        %v1091 = vpop.f32.mrb[0].mxu0
        %v1092 = vadd.f32 0.0, %v1091
        %v1093 = vpop.f32.mrb[0].mxu0
        %1094 = vmatprep.mubr.f32.mxu0 %v882
        %1095 = vmatmul.mubr.f32.gmra.mrb[0].mxu0 %v881
        %v1096 = vpop.f32.mrb[0].mxu0
        %v1097 = vadd.f32 0.0, %v1096
        %v1098 = vpop.f32.mrb[0].mxu0
        %1099 = vmatprep.mubr.f32.mxu0 %v884
        %1100 = vmatmul.mubr.f32.gmra.mrb[0].mxu0 %v883
        %v1101 = vpop.f32.mrb[0].mxu0
        %v1102 = vadd.f32 0.0, %v1101
        %v1103 = vpop.f32.mrb[0].mxu0
        %1104 = vmatprep.mubr.f32.mxu0 %v886
        %1105 = vmatmul.mubr.f32.gmra.mrb[0].mxu0 %v885
        %v1106 = vpop.f32.mrb[0].mxu0
        %v1107 = vadd.f32 0.0, %v1106
        %v1108 = vpop.f32.mrb[0].mxu0
        %1109 = vmatprep.mubr.f32.mxu0 %v888
        %1110 = vmatmul.mubr.f32.gmra.mrb[0].mxu0 %v887
        %v1111 = vpop.f32.mrb[0].mxu0
        %v1112 = vadd.f32 0.0, %v1111
        %v1113 = vpop.f32.mrb[0].mxu0
        %1114 = vmatprep.mubr.f32.mxu0 %v890
        %1115 = vmatmul.mubr.f32.gmra.mrb[0].mxu0 %v889
        %v1116 = vpop.f32.mrb[0].mxu0
        %v1117 = vadd.f32 0.0, %v1116
        %v1118 = vpop.f32.mrb[0].mxu0
        %1119 = vmatprep.mubr.f32.mxu0 %v892
        %1120 = vmatmul.mubr.f32.gmra.mrb[0].mxu0 %v891
        %v1121 = vpop.f32.mrb[0].mxu0
        %v1122 = vadd.f32 0.0, %v1121
        %v1123 = vpop.f32.mrb[0].mxu0
        %1124 = vmatprep.mubr.f32.mxu0 %v894
        %1125 = vmatmul.mubr.f32.gmra.mrb[0].mxu0 %v893
        %v1126 = vpop.f32.mrb[0].mxu0
        %v1127 = vadd.f32 0.0, %v1126
        %v1128 = vpop.f32.mrb[0].mxu0
        %1129 = vmatprep.mubr.f32.mxu0 %v896
        %1130 = vmatmul.mubr.f32.gmra.mrb[0].mxu0 %v895
        %v1131 = vpop.f32.mrb[0].mxu0
        %v1132 = vadd.f32 0.0, %v1131
        %v1133 = vpop.f32.mrb[0].mxu0
        %1134 = vmatprep.mubr.f32.mxu0 %v898
        %1135 = vmatmul.mubr.f32.gmra.mrb[0].mxu0 %v897
        %v1136 = vpop.f32.mrb[0].mxu0
        %v1137 = vadd.f32 0.0, %v1136
        %v1138 = vpop.f32.mrb[0].mxu0
        %1139 = vmatprep.mubr.f32.mxu0 %v900
        %1140 = vmatmul.mubr.f32.gmra.mrb[0].mxu0 %v899
        %v1141 = vpop.f32.mrb[0].mxu0
        %v1142 = vadd.f32 0.0, %v1141
        %v1143 = vpop.f32.mrb[0].mxu0
        %1144 = vmatprep.mubr.f32.mxu0 %v902
        %1145 = vmatmul.mubr.f32.gmra.mrb[0].mxu0 %v901
        %v1146 = vpop.f32.mrb[0].mxu0
        %v1147 = vadd.f32 0.0, %v1146
        %v1148 = vpop.f32.mrb[0].mxu0
        %1149 = vmatprep.mubr.f32.mxu0 %v904
        %1150 = vmatmul.mubr.f32.gmra.mrb[0].mxu0 %v903
        %v1151 = vpop.f32.mrb[0].mxu0
        %v1152 = vadd.f32 0.0, %v1151
        %v1153 = vpop.f32.mrb[0].mxu0
        %1154 = vmatprep.mubr.f32.mxu0 %v906
        %1155 = vmatmul.mubr.f32.gmra.mrb[0].mxu0 %v905
        %v1156 = vpop.f32.mrb[0].mxu0
        %v1157 = vadd.f32 0.0, %v1156
        %v1158 = vpop.f32.mrb[0].mxu0
        %1159 = vmatprep.mubr.f32.mxu0 %v908
        %1160 = vmatmul.mubr.f32.gmra.mrb[0].mxu0 %v907
        %v1161 = vpop.f32.mrb[0].mxu0
        %v1162 = vadd.f32 0.0, %v1161
        %v1163 = vpop.f32.mrb[0].mxu0
        %1164 = vmatprep.mubr.f32.mxu0 %v910
        %1165 = vmatmul.mubr.f32.gmra.mrb[0].mxu0 %v909
        %v1166 = vpop.f32.mrb[0].mxu0
        %v1167 = vadd.f32 0.0, %v1166
        %v1168 = vpop.f32.mrb[0].mxu0
        %1169 = vmatprep.mubr.f32.mxu0 %v912
        %1170 = vmatmul.mubr.f32.gmra.mrb[0].mxu0 %v911
        %v1171 = vpop.f32.mrb[0].mxu0
        %v1172 = vadd.f32 0.0, %v1171
        %v1173 = vpop.f32.mrb[0].mxu0
        %1174 = vmatprep.mubr.f32.mxu0 %v914
        %1175 = vmatmul.mubr.f32.gmra.mrb[0].mxu0 %v913
        %v1176 = vpop.f32.mrb[0].mxu0
        %v1177 = vadd.f32 0.0, %v1176
        %v1178 = vpop.f32.mrb[0].mxu0
        %1179 = vmatprep.mubr.f32.mxu0 %v916
        %1180 = vmatmul.mubr.f32.gmra.mrb[0].mxu0 %v915
        %v1181 = vpop.f32.mrb[0].mxu0
        %v1182 = vadd.f32 0.0, %v1181
        %v1183 = vpop.f32.mrb[0].mxu0
        %1184 = vmatprep.mubr.f32.mxu0 %v918
        %1185 = vmatmul.mubr.f32.gmra.mrb[0].mxu0 %v917
        %v1186 = vpop.f32.mrb[0].mxu0
        %v1187 = vadd.f32 0.0, %v1186
        %v1188 = vpop.f32.mrb[0].mxu0
        %1189 = vmatprep.mubr.f32.mxu0 %v920
        %1190 = vmatmul.mubr.f32.gmra.mrb[0].mxu0 %v919
        %v1191 = vpop.f32.mrb[0].mxu0
        %v1192 = vadd.f32 0.0, %v1191
        %v1193 = vpop.f32.mrb[0].mxu0
        %1194 = vmatprep.mubr.f32.mxu0 %v922
        %1195 = vmatmul.mubr.f32.gmra.mrb[0].mxu0 %v921
        %v1196 = vpop.f32.mrb[0].mxu0
        %v1197 = vadd.f32 0.0, %v1196
        %v1198 = vpop.f32.mrb[0].mxu0
        %1199 = vmatprep.mubr.f32.mxu0 %v924
        %1200 = vmatmul.mubr.f32.gmra.mrb[0].mxu0 %v923
        %v1201 = vpop.f32.mrb[0].mxu0
        %v1202 = vadd.f32 0.0, %v1201
        %v1203 = vpop.f32.mrb[0].mxu0
        %1204 = vmatprep.mubr.f32.mxu0 %v926
        %1205 = vmatmul.mubr.f32.gmra.mrb[0].mxu0 %v925
        %v1206 = vpop.f32.mrb[0].mxu0
        %v1207 = vadd.f32 0.0, %v1206
        %v1208 = vpop.f32.mrb[0].mxu0
        %1209 = vmatprep.mubr.f32.mxu0 %v928
        %1210 = vmatmul.mubr.f32.gmra.mrb[0].mxu0 %v927
        %v1211 = vpop.f32.mrb[0].mxu0
        %v1212 = vadd.f32 0.0, %v1211
        %v1213 = vpop.f32.mrb[0].mxu0
        %1214 = vmatprep.mubr.f32.mxu0 %v930
        %1215 = vmatmul.mubr.f32.gmra.mrb[0].mxu0 %v929
        %v1216 = vpop.f32.mrb[0].mxu0
        %v1217 = vadd.f32 0.0, %v1216
        %v1218 = vpop.f32.mrb[0].mxu0
        %1219 = vdwg.mxu0
        %v1220 = vadd.f32 %v931, %v1062
        %v1221 = vadd.f32 %v932, %v1067
        %v1222 = vadd.f32 %v933, %v1072
        %v1223 = vadd.f32 %v934, %v1077
        %v1224 = vadd.f32 %v935, %v1082
        %v1225 = vadd.f32 %v936, %v1087
        %v1226 = vadd.f32 %v937, %v1092
        %v1227 = vadd.f32 %v938, %v1097
        %v1228 = vadd.f32 %v939, %v1102
        %v1229 = vadd.f32 %v940, %v1107
        %v1230 = vadd.f32 %v941, %v1112
        %v1231 = vadd.f32 %v942, %v1117
        %v1232 = vadd.f32 %v943, %v1122
        %v1233 = vadd.f32 %v944, %v1127
        %v1234 = vadd.f32 %v945, %v1132
        %v1235 = vadd.f32 %v946, %v1137
        %v1236 = vadd.f32 %v947, %v1142
        %v1237 = vadd.f32 %v948, %v1147
        %v1238 = vadd.f32 %v949, %v1152
        %v1239 = vadd.f32 %v950, %v1157
        %v1240 = vadd.f32 %v951, %v1162
        %v1241 = vadd.f32 %v952, %v1167
        %v1242 = vadd.f32 %v953, %v1172
        %v1243 = vadd.f32 %v954, %v1177
        %v1244 = vadd.f32 %v955, %v1182
        %v1245 = vadd.f32 %v956, %v1187
        %v1246 = vadd.f32 %v957, %v1192
        %v1247 = vadd.f32 %v958, %v1197
        %v1248 = vadd.f32 %v959, %v1202
        %v1249 = vadd.f32 %v960, %v1207
        %v1250 = vadd.f32 %v961, %v1212
        %v1251 = vadd.f32 %v962, %v1217
        %1252 = vst [vmem:[#allocation2] sm:$0xff] %v1220
        %1253 = vst [vmem:[#allocation2 + $0x8] sm:$0xff] %v1221
        %1254 = vst [vmem:[#allocation2 + $0x10] sm:$0xff] %v1222
        %1255 = vst [vmem:[#allocation2 + $0x18] sm:$0xff] %v1223
        %1256 = vst [vmem:[#allocation2 + $0x20] sm:$0xff] %v1224
        %1257 = vst [vmem:[#allocation2 + $0x28] sm:$0xff] %v1225
        %1258 = vst [vmem:[#allocation2 + $0x30] sm:$0xff] %v1226
        %1259 = vst [vmem:[#allocation2 + $0x38] sm:$0xff] %v1227
        %1260 = vst [vmem:[#allocation2 + $0x40] sm:$0xff] %v1228
        %1261 = vst [vmem:[#allocation2 + $0x48] sm:$0xff] %v1229
        %1262 = vst [vmem:[#allocation2 + $0x50] sm:$0xff] %v1230
        %1263 = vst [vmem:[#allocation2 + $0x58] sm:$0xff] %v1231
        %1264 = vst [vmem:[#allocation2 + $0x60] sm:$0xff] %v1232
        %1265 = vst [vmem:[#allocation2 + $0x68] sm:$0xff] %v1233
        %1266 = vst [vmem:[#allocation2 + $0x70] sm:$0xff] %v1234
        %1267 = vst [vmem:[#allocation2 + $0x78] sm:$0xff] %v1235
        %1268 = vst [vmem:[#allocation2 + $0x80] sm:$0xff] %v1236
        %1269 = vst [vmem:[#allocation2 + $0x88] sm:$0xff] %v1237
        %1270 = vst [vmem:[#allocation2 + $0x90] sm:$0xff] %v1238
        %1271 = vst [vmem:[#allocation2 + $0x98] sm:$0xff] %v1239
        %1272 = vst [vmem:[#allocation2 + $0xa0] sm:$0xff] %v1240
        %1273 = vst [vmem:[#allocation2 + $0xa8] sm:$0xff] %v1241
        %1274 = vst [vmem:[#allocation2 + $0xb0] sm:$0xff] %v1242
        %1275 = vst [vmem:[#allocation2 + $0xb8] sm:$0xff] %v1243
        %1276 = vst [vmem:[#allocation2 + $0xc0] sm:$0xff] %v1244
        %1277 = vst [vmem:[#allocation2 + $0xc8] sm:$0xff] %v1245
        %1278 = vst [vmem:[#allocation2 + $0xd0] sm:$0xff] %v1246
        %1279 = vst [vmem:[#allocation2 + $0xd8] sm:$0xff] %v1247
        %1280 = vst [vmem:[#allocation2 + $0xe0] sm:$0xff] %v1248
        %1281 = vst [vmem:[#allocation2 + $0xe8] sm:$0xff] %v1249
        %1282 = vst [vmem:[#allocation2 + $0xf0] sm:$0xff] %v1250
        %1283 = vst [vmem:[#allocation2 + $0xf8] sm:$0xff] %v1251
        %v1284 = vld [vmem:[%s1 + $0x10] sm:$0xff]
        %v1285 = vld [vmem:[%s1 + $0x18] sm:$0xff]
        %v1286 = vld [vmem:[%s1 + $0x30] sm:$0xff]
        %v1287 = vld [vmem:[%s1 + $0x38] sm:$0xff]
        %v1288 = vld [vmem:[%s1 + $0x50] sm:$0xff]
        %v1289 = vld [vmem:[%s1 + $0x58] sm:$0xff]
        %v1290 = vld [vmem:[%s1 + $0x70] sm:$0xff]
        %v1291 = vld [vmem:[%s1 + $0x78] sm:$0xff]
        %v1292 = vld [vmem:[%s1 + $0x90] sm:$0xff]
        %v1293 = vld [vmem:[%s1 + $0x98] sm:$0xff]
        %v1294 = vld [vmem:[%s1 + $0xb0] sm:$0xff]
        %v1295 = vld [vmem:[%s1 + $0xb8] sm:$0xff]
        %v1296 = vld [vmem:[%s1 + $0xd0] sm:$0xff]
        %v1297 = vld [vmem:[%s1 + $0xd8] sm:$0xff]
        %v1298 = vld [vmem:[%s1 + $0xf0] sm:$0xff]
        %v1299 = vld [vmem:[%s1 + $0xf8] sm:$0xff]
        %v1300 = vld [vmem:[%s1 + $0x110] sm:$0xff]
        %v1301 = vld [vmem:[%s1 + $0x118] sm:$0xff]
        %v1302 = vld [vmem:[%s1 + $0x130] sm:$0xff]
        %v1303 = vld [vmem:[%s1 + $0x138] sm:$0xff]
        %v1304 = vld [vmem:[%s1 + $0x150] sm:$0xff]
        %v1305 = vld [vmem:[%s1 + $0x158] sm:$0xff]
        %v1306 = vld [vmem:[%s1 + $0x170] sm:$0xff]
        %v1307 = vld [vmem:[%s1 + $0x178] sm:$0xff]
        %v1308 = vld [vmem:[%s1 + $0x190] sm:$0xff]
        %v1309 = vld [vmem:[%s1 + $0x198] sm:$0xff]
        %v1310 = vld [vmem:[%s1 + $0x1b0] sm:$0xff]
        %v1311 = vld [vmem:[%s1 + $0x1b8] sm:$0xff]
        %v1312 = vld [vmem:[%s1 + $0x1d0] sm:$0xff]
        %v1313 = vld [vmem:[%s1 + $0x1d8] sm:$0xff]
        %v1314 = vld [vmem:[%s1 + $0x1f0] sm:$0xff]
        %v1315 = vld [vmem:[%s1 + $0x1f8] sm:$0xff]
        %v1316 = vld [vmem:[%s2 + $0x2] sm:$0x3]
        %v1318 = vlaneseq
        %v1319 = vshrl.u32 %v1318, 7
        %v1320 = vsub.s32 0, %v1319
        %v1321 = vrot.slane %v1316, %v1320
        %v1322 = vlaneseq
        %v1323 = vshrl.u32 %v1322, 7
        %v1324 = vsub.s32 1, %v1323
        %v1325 = vrot.slane %v1316, %v1324
        %1328 = vmatprep.subr.mxu0 %v1285
        %1329 = vmatpush1.msra.mxu0 %v1284
        %1330 = vmatprep.subr.mxu0 %v1287
        %1331 = vmatpush1.msra.mxu0 %v1286
        %1332 = vmatprep.subr.mxu0 %v1289
        %1333 = vmatpush1.msra.mxu0 %v1288
        %1334 = vmatprep.subr.mxu0 %v1291
        %1335 = vmatpush1.msra.mxu0 %v1290
        %1336 = vmatprep.subr.mxu0 %v1293
        %1337 = vmatpush1.msra.mxu0 %v1292
        %1338 = vmatprep.subr.mxu0 %v1295
        %1339 = vmatpush1.msra.mxu0 %v1294
        %1340 = vmatprep.subr.mxu0 %v1297
        %1341 = vmatpush1.msra.mxu0 %v1296
        %1342 = vmatprep.subr.mxu0 %v1299
        %1343 = vmatpush1.msra.mxu0 %v1298
        %1344 = vmatprep.subr.mxu0 %v1301
        %1345 = vmatpush1.msra.mxu0 %v1300
        %1346 = vmatprep.subr.mxu0 %v1303
        %1347 = vmatpush1.msra.mxu0 %v1302
        %1348 = vmatprep.subr.mxu0 %v1305
        %1349 = vmatpush1.msra.mxu0 %v1304
        %1350 = vmatprep.subr.mxu0 %v1307
        %1351 = vmatpush1.msra.mxu0 %v1306
        %1352 = vmatprep.subr.mxu0 %v1309
        %1353 = vmatpush1.msra.mxu0 %v1308
        %1354 = vmatprep.subr.mxu0 %v1311
        %1355 = vmatpush1.msra.mxu0 %v1310
        %1356 = vmatprep.subr.mxu0 %v1313
        %1357 = vmatpush1.msra.mxu0 %v1312
        %1358 = vmatprep.subr.mxu0 %v1315
        %1359 = vmatpush1.msra.mxu0 %v1314
        %1360 = vmatprep.subr.mxu0 0.0
        %1361 = vmatpush1.msra.mxu0 0.0
        %1362 = vmatprep.subr.mxu0 0.0
        %1363 = vmatpush1.msra.mxu0 0.0
        %1364 = vmatprep.subr.mxu0 0.0
        %1365 = vmatpush1.msra.mxu0 0.0
        %1366 = vmatprep.subr.mxu0 0.0
        %1367 = vmatpush1.msra.mxu0 0.0
        %1368 = vmatprep.subr.mxu0 0.0
        %1369 = vmatpush1.msra.mxu0 0.0
        %1370 = vmatprep.subr.mxu0 0.0
        %1371 = vmatpush1.msra.mxu0 0.0
        %1372 = vmatprep.subr.mxu0 0.0
        %1373 = vmatpush1.msra.mxu0 0.0
        %1374 = vmatprep.subr.mxu0 0.0
        %1375 = vmatpush1.msra.mxu0 0.0
        %1376 = vmatprep.subr.mxu0 0.0
        %1377 = vmatpush1.msra.mxu0 0.0
        %1378 = vmatprep.subr.mxu0 0.0
        %1379 = vmatpush1.msra.mxu0 0.0
        %1380 = vmatprep.subr.mxu0 0.0
        %1381 = vmatpush1.msra.mxu0 0.0
        %1382 = vmatprep.subr.mxu0 0.0
        %1383 = vmatpush1.msra.mxu0 0.0
        %1384 = vmatprep.subr.mxu0 0.0
        %1385 = vmatpush1.msra.mxu0 0.0
        %1386 = vmatprep.subr.mxu0 0.0
        %1387 = vmatpush1.msra.mxu0 0.0
        %1388 = vmatprep.subr.mxu0 0.0
        %1389 = vmatpush1.msra.mxu0 0.0
        %1390 = vmatprep.subr.mxu0 0.0
        %1391 = vmatpush1.msra.mxu0 0.0
        %1392 = vmatprep.mubr.f32.mxu0 0.0
        %1393 = vmatmul.mubr.f32.gmra.mrb[0].mxu0 %v246
        %v1394 = vpop.f32.mrb[0].mxu0
        %v1395 = vadd.f32 %v1321, %v1394
        %v1396 = vpop.f32.mrb[0].mxu0
        %v1397 = vadd.f32 %v1325, %v1396
        %1398 = vmatprep.mubr.f32.mxu0 0.0
        %1399 = vmatmul.mubr.f32.gmra.mrb[0].mxu0 %v247
        %v1400 = vpop.f32.mrb[0].mxu0
        %v1401 = vadd.f32 %v1321, %v1400
        %v1402 = vpop.f32.mrb[0].mxu0
        %v1403 = vadd.f32 %v1325, %v1402
        %1404 = vmatprep.mubr.f32.mxu0 0.0
        %1405 = vmatmul.mubr.f32.gmra.mrb[0].mxu0 %v248
        %v1406 = vpop.f32.mrb[0].mxu0
        %v1407 = vadd.f32 %v1321, %v1406
        %v1408 = vpop.f32.mrb[0].mxu0
        %v1409 = vadd.f32 %v1325, %v1408
        %1410 = vmatprep.mubr.f32.mxu0 0.0
        %1411 = vmatmul.mubr.f32.gmra.mrb[0].mxu0 %v249
        %v1412 = vpop.f32.mrb[0].mxu0
        %v1413 = vadd.f32 %v1321, %v1412
        %v1414 = vpop.f32.mrb[0].mxu0
        %v1415 = vadd.f32 %v1325, %v1414
        %1416 = vmatprep.mubr.f32.mxu0 0.0
        %1417 = vmatmul.mubr.f32.gmra.mrb[0].mxu0 %v250
        %v1418 = vpop.f32.mrb[0].mxu0
        %v1419 = vadd.f32 %v1321, %v1418
        %v1420 = vpop.f32.mrb[0].mxu0
        %v1421 = vadd.f32 %v1325, %v1420
        %1422 = vmatprep.mubr.f32.mxu0 0.0
        %1423 = vmatmul.mubr.f32.gmra.mrb[0].mxu0 %v251
        %v1424 = vpop.f32.mrb[0].mxu0
        %v1425 = vadd.f32 %v1321, %v1424
        %v1426 = vpop.f32.mrb[0].mxu0
        %v1427 = vadd.f32 %v1325, %v1426
        %1428 = vmatprep.mubr.f32.mxu0 0.0
        %1429 = vmatmul.mubr.f32.gmra.mrb[0].mxu0 %v252
        %v1430 = vpop.f32.mrb[0].mxu0
        %v1431 = vadd.f32 %v1321, %v1430
        %v1432 = vpop.f32.mrb[0].mxu0
        %v1433 = vadd.f32 %v1325, %v1432
        %1434 = vmatprep.mubr.f32.mxu0 0.0
        %1435 = vmatmul.mubr.f32.gmra.mrb[0].mxu0 %v253
        %v1436 = vpop.f32.mrb[0].mxu0
        %v1437 = vadd.f32 %v1321, %v1436
        %v1438 = vpop.f32.mrb[0].mxu0
        %v1439 = vadd.f32 %v1325, %v1438
        %1440 = vmatprep.mubr.f32.mxu0 0.0
        %1441 = vmatmul.mubr.f32.gmra.mrb[0].mxu0 %v254
        %v1442 = vpop.f32.mrb[0].mxu0
        %v1443 = vadd.f32 %v1321, %v1442
        %v1444 = vpop.f32.mrb[0].mxu0
        %v1445 = vadd.f32 %v1325, %v1444
        %1446 = vmatprep.mubr.f32.mxu0 0.0
        %1447 = vmatmul.mubr.f32.gmra.mrb[0].mxu0 %v255
        %v1448 = vpop.f32.mrb[0].mxu0
        %v1449 = vadd.f32 %v1321, %v1448
        %v1450 = vpop.f32.mrb[0].mxu0
        %v1451 = vadd.f32 %v1325, %v1450
        %1452 = vmatprep.mubr.f32.mxu0 0.0
        %1453 = vmatmul.mubr.f32.gmra.mrb[0].mxu0 %v256
        %v1454 = vpop.f32.mrb[0].mxu0
        %v1455 = vadd.f32 %v1321, %v1454
        %v1456 = vpop.f32.mrb[0].mxu0
        %v1457 = vadd.f32 %v1325, %v1456
        %1458 = vmatprep.mubr.f32.mxu0 0.0
        %1459 = vmatmul.mubr.f32.gmra.mrb[0].mxu0 %v257
        %v1460 = vpop.f32.mrb[0].mxu0
        %v1461 = vadd.f32 %v1321, %v1460
        %v1462 = vpop.f32.mrb[0].mxu0
        %v1463 = vadd.f32 %v1325, %v1462
        %1464 = vmatprep.mubr.f32.mxu0 0.0
        %1465 = vmatmul.mubr.f32.gmra.mrb[0].mxu0 %v258
        %v1466 = vpop.f32.mrb[0].mxu0
        %v1467 = vadd.f32 %v1321, %v1466
        %v1468 = vpop.f32.mrb[0].mxu0
        %v1469 = vadd.f32 %v1325, %v1468
        %1470 = vmatprep.mubr.f32.mxu0 0.0
        %1471 = vmatmul.mubr.f32.gmra.mrb[0].mxu0 %v259
        %v1472 = vpop.f32.mrb[0].mxu0
        %v1473 = vadd.f32 %v1321, %v1472
        %v1474 = vpop.f32.mrb[0].mxu0
        %v1475 = vadd.f32 %v1325, %v1474
        %1476 = vmatprep.mubr.f32.mxu0 0.0
        %1477 = vmatmul.mubr.f32.gmra.mrb[0].mxu0 %v260
        %v1478 = vpop.f32.mrb[0].mxu0
        %v1479 = vadd.f32 %v1321, %v1478
        %v1480 = vpop.f32.mrb[0].mxu0
        %v1481 = vadd.f32 %v1325, %v1480
        %1482 = vmatprep.mubr.f32.mxu0 0.0
        %1483 = vmatmul.mubr.f32.gmra.mrb[0].mxu0 %v261
        %v1484 = vpop.f32.mrb[0].mxu0
        %v1485 = vadd.f32 %v1321, %v1484
        %v1486 = vpop.f32.mrb[0].mxu0
        %v1487 = vadd.f32 %v1325, %v1486
        %1488 = vmatprep.mubr.f32.mxu0 0.0
        %1489 = vmatmul.mubr.f32.gmra.mrb[0].mxu0 %v262
        %v1490 = vpop.f32.mrb[0].mxu0
        %v1491 = vadd.f32 %v1321, %v1490
        %v1492 = vpop.f32.mrb[0].mxu0
        %v1493 = vadd.f32 %v1325, %v1492
        %1494 = vmatprep.mubr.f32.mxu0 0.0
        %1495 = vmatmul.mubr.f32.gmra.mrb[0].mxu0 %v263
        %v1496 = vpop.f32.mrb[0].mxu0
        %v1497 = vadd.f32 %v1321, %v1496
        %v1498 = vpop.f32.mrb[0].mxu0
        %v1499 = vadd.f32 %v1325, %v1498
        %1500 = vmatprep.mubr.f32.mxu0 0.0
        %1501 = vmatmul.mubr.f32.gmra.mrb[0].mxu0 %v264
        %v1502 = vpop.f32.mrb[0].mxu0
        %v1503 = vadd.f32 %v1321, %v1502
        %v1504 = vpop.f32.mrb[0].mxu0
        %v1505 = vadd.f32 %v1325, %v1504
        %1506 = vmatprep.mubr.f32.mxu0 0.0
        %1507 = vmatmul.mubr.f32.gmra.mrb[0].mxu0 %v265
        %v1508 = vpop.f32.mrb[0].mxu0
        %v1509 = vadd.f32 %v1321, %v1508
        %v1510 = vpop.f32.mrb[0].mxu0
        %v1511 = vadd.f32 %v1325, %v1510
        %1512 = vmatprep.mubr.f32.mxu0 0.0
        %1513 = vmatmul.mubr.f32.gmra.mrb[0].mxu0 %v266
        %v1514 = vpop.f32.mrb[0].mxu0
        %v1515 = vadd.f32 %v1321, %v1514
        %v1516 = vpop.f32.mrb[0].mxu0
        %v1517 = vadd.f32 %v1325, %v1516
        %1518 = vmatprep.mubr.f32.mxu0 0.0
        %1519 = vmatmul.mubr.f32.gmra.mrb[0].mxu0 %v267
        %v1520 = vpop.f32.mrb[0].mxu0
        %v1521 = vadd.f32 %v1321, %v1520
        %v1522 = vpop.f32.mrb[0].mxu0
        %v1523 = vadd.f32 %v1325, %v1522
        %1524 = vmatprep.mubr.f32.mxu0 0.0
        %1525 = vmatmul.mubr.f32.gmra.mrb[0].mxu0 %v268
        %v1526 = vpop.f32.mrb[0].mxu0
        %v1527 = vadd.f32 %v1321, %v1526
        %v1528 = vpop.f32.mrb[0].mxu0
        %v1529 = vadd.f32 %v1325, %v1528
        %1530 = vmatprep.mubr.f32.mxu0 0.0
        %1531 = vmatmul.mubr.f32.gmra.mrb[0].mxu0 %v269
        %v1532 = vpop.f32.mrb[0].mxu0
        %v1533 = vadd.f32 %v1321, %v1532
        %v1534 = vpop.f32.mrb[0].mxu0
        %v1535 = vadd.f32 %v1325, %v1534
        %1536 = vmatprep.mubr.f32.mxu0 0.0
        %1537 = vmatmul.mubr.f32.gmra.mrb[0].mxu0 %v270
        %v1538 = vpop.f32.mrb[0].mxu0
        %v1539 = vadd.f32 %v1321, %v1538
        %v1540 = vpop.f32.mrb[0].mxu0
        %v1541 = vadd.f32 %v1325, %v1540
        %1542 = vmatprep.mubr.f32.mxu0 0.0
        %1543 = vmatmul.mubr.f32.gmra.mrb[0].mxu0 %v271
        %v1544 = vpop.f32.mrb[0].mxu0
        %v1545 = vadd.f32 %v1321, %v1544
        %v1546 = vpop.f32.mrb[0].mxu0
        %v1547 = vadd.f32 %v1325, %v1546
        %1548 = vmatprep.mubr.f32.mxu0 0.0
        %1549 = vmatmul.mubr.f32.gmra.mrb[0].mxu0 %v272
        %v1550 = vpop.f32.mrb[0].mxu0
        %v1551 = vadd.f32 %v1321, %v1550
        %v1552 = vpop.f32.mrb[0].mxu0
        %v1553 = vadd.f32 %v1325, %v1552
        %1554 = vmatprep.mubr.f32.mxu0 0.0
        %1555 = vmatmul.mubr.f32.gmra.mrb[0].mxu0 %v273
        %v1556 = vpop.f32.mrb[0].mxu0
        %v1557 = vadd.f32 %v1321, %v1556
        %v1558 = vpop.f32.mrb[0].mxu0
        %v1559 = vadd.f32 %v1325, %v1558
        %1560 = vmatprep.mubr.f32.mxu0 0.0
        %1561 = vmatmul.mubr.f32.gmra.mrb[0].mxu0 %v274
        %v1562 = vpop.f32.mrb[0].mxu0
        %v1563 = vadd.f32 %v1321, %v1562
        %v1564 = vpop.f32.mrb[0].mxu0
        %v1565 = vadd.f32 %v1325, %v1564
        %1566 = vmatprep.mubr.f32.mxu0 0.0
        %1567 = vmatmul.mubr.f32.gmra.mrb[0].mxu0 %v275
        %v1568 = vpop.f32.mrb[0].mxu0
        %v1569 = vadd.f32 %v1321, %v1568
        %v1570 = vpop.f32.mrb[0].mxu0
        %v1571 = vadd.f32 %v1325, %v1570
        %1572 = vmatprep.mubr.f32.mxu0 0.0
        %1573 = vmatmul.mubr.f32.gmra.mrb[0].mxu0 %v276
        %v1574 = vpop.f32.mrb[0].mxu0
        %v1575 = vadd.f32 %v1321, %v1574
        %v1576 = vpop.f32.mrb[0].mxu0
        %v1577 = vadd.f32 %v1325, %v1576
        %1578 = vmatprep.mubr.f32.mxu0 0.0
        %1579 = vmatmul.mubr.f32.gmra.mrb[0].mxu0 %v277
        %v1580 = vpop.f32.mrb[0].mxu0
        %v1581 = vadd.f32 %v1321, %v1580
        %v1582 = vpop.f32.mrb[0].mxu0
        %v1583 = vadd.f32 %v1325, %v1582
        %1584 = vdwg.mxu0
        %v1585 = vmul.f32 %v1395, 0.5
        %v1586 = vmul.f32 %v1397, 0.5
        %v1587 = vmul.f32 %v1401, 0.5
        %v1588 = vmul.f32 %v1403, 0.5
        %v1589 = vmul.f32 %v1407, 0.5
        %v1590 = vmul.f32 %v1409, 0.5
        %v1591 = vmul.f32 %v1413, 0.5
        %v1592 = vmul.f32 %v1415, 0.5
        %v1593 = vmul.f32 %v1419, 0.5
        %v1594 = vmul.f32 %v1421, 0.5
        %v1595 = vmul.f32 %v1425, 0.5
        %v1596 = vmul.f32 %v1427, 0.5
        %v1597 = vmul.f32 %v1431, 0.5
        %v1598 = vmul.f32 %v1433, 0.5
        %v1599 = vmul.f32 %v1437, 0.5
        %v1600 = vmul.f32 %v1439, 0.5
        %v1601 = vmul.f32 %v1443, 0.5
        %v1602 = vmul.f32 %v1445, 0.5
        %v1603 = vmul.f32 %v1449, 0.5
        %v1604 = vmul.f32 %v1451, 0.5
        %v1605 = vmul.f32 %v1455, 0.5
        %v1606 = vmul.f32 %v1457, 0.5
        %v1607 = vmul.f32 %v1461, 0.5
        %v1608 = vmul.f32 %v1463, 0.5
        %v1609 = vmul.f32 %v1467, 0.5
        %v1610 = vmul.f32 %v1469, 0.5
        %v1611 = vmul.f32 %v1473, 0.5
        %v1612 = vmul.f32 %v1475, 0.5
        %v1613 = vmul.f32 %v1479, 0.5
        %v1614 = vmul.f32 %v1481, 0.5
        %v1615 = vmul.f32 %v1485, 0.5
        %v1616 = vmul.f32 %v1487, 0.5
        %v1617 = vmul.f32 %v1491, 0.5
        %v1618 = vmul.f32 %v1493, 0.5
        %v1619 = vmul.f32 %v1497, 0.5
        %v1620 = vmul.f32 %v1499, 0.5
        %v1621 = vmul.f32 %v1503, 0.5
        %v1622 = vmul.f32 %v1505, 0.5
        %v1623 = vmul.f32 %v1509, 0.5
        %v1624 = vmul.f32 %v1511, 0.5
        %v1625 = vmul.f32 %v1515, 0.5
        %v1626 = vmul.f32 %v1517, 0.5
        %v1627 = vmul.f32 %v1521, 0.5
        %v1628 = vmul.f32 %v1523, 0.5
        %v1629 = vmul.f32 %v1527, 0.5
        %v1630 = vmul.f32 %v1529, 0.5
        %v1631 = vmul.f32 %v1533, 0.5
        %v1632 = vmul.f32 %v1535, 0.5
        %v1633 = vmul.f32 %v1539, 0.5
        %v1634 = vmul.f32 %v1541, 0.5
        %v1635 = vmul.f32 %v1545, 0.5
        %v1636 = vmul.f32 %v1547, 0.5
        %v1637 = vmul.f32 %v1551, 0.5
        %v1638 = vmul.f32 %v1553, 0.5
        %v1639 = vmul.f32 %v1557, 0.5
        %v1640 = vmul.f32 %v1559, 0.5
        %v1641 = vmul.f32 %v1563, 0.5
        %v1642 = vmul.f32 %v1565, 0.5
        %v1643 = vmul.f32 %v1569, 0.5
        %v1644 = vmul.f32 %v1571, 0.5
        %v1645 = vmul.f32 %v1575, 0.5
        %v1646 = vmul.f32 %v1577, 0.5
        %v1647 = vmul.f32 %v1581, 0.5
        %v1648 = vmul.f32 %v1583, 0.5
        %v1649 = vmul.f32 %v1395, 0.70710677
        %v1650 = vmul.f32 %v1397, 0.70710677
        %v1651 = vmul.f32 %v1401, 0.70710677
        %v1652 = vmul.f32 %v1403, 0.70710677
        %v1653 = vmul.f32 %v1407, 0.70710677
        %v1654 = vmul.f32 %v1409, 0.70710677
        %v1655 = vmul.f32 %v1413, 0.70710677
        %v1656 = vmul.f32 %v1415, 0.70710677
        %v1657 = vmul.f32 %v1419, 0.70710677
        %v1658 = vmul.f32 %v1421, 0.70710677
        %v1659 = vmul.f32 %v1425, 0.70710677
        %v1660 = vmul.f32 %v1427, 0.70710677
        %v1661 = vmul.f32 %v1431, 0.70710677
        %v1662 = vmul.f32 %v1433, 0.70710677
        %v1663 = vmul.f32 %v1437, 0.70710677
        %v1664 = vmul.f32 %v1439, 0.70710677
        %v1665 = vmul.f32 %v1443, 0.70710677
        %v1666 = vmul.f32 %v1445, 0.70710677
        %v1667 = vmul.f32 %v1449, 0.70710677
        %v1668 = vmul.f32 %v1451, 0.70710677
        %v1669 = vmul.f32 %v1455, 0.70710677
        %v1670 = vmul.f32 %v1457, 0.70710677
        %v1671 = vmul.f32 %v1461, 0.70710677
        %v1672 = vmul.f32 %v1463, 0.70710677
        %v1673 = vmul.f32 %v1467, 0.70710677
        %v1674 = vmul.f32 %v1469, 0.70710677
        %v1675 = vmul.f32 %v1473, 0.70710677
        %v1676 = vmul.f32 %v1475, 0.70710677
        %v1677 = vmul.f32 %v1479, 0.70710677
        %v1678 = vmul.f32 %v1481, 0.70710677
        %v1679 = vmul.f32 %v1485, 0.70710677
        %v1680 = vmul.f32 %v1487, 0.70710677
        %v1681 = vmul.f32 %v1491, 0.70710677
        %v1682 = vmul.f32 %v1493, 0.70710677
        %v1683 = vmul.f32 %v1497, 0.70710677
        %v1684 = vmul.f32 %v1499, 0.70710677
        %v1685 = vmul.f32 %v1503, 0.70710677
        %v1686 = vmul.f32 %v1505, 0.70710677
        %v1687 = vmul.f32 %v1509, 0.70710677
        %v1688 = vmul.f32 %v1511, 0.70710677
        %v1689 = vmul.f32 %v1515, 0.70710677
        %v1690 = vmul.f32 %v1517, 0.70710677
        %v1691 = vmul.f32 %v1521, 0.70710677
        %v1692 = vmul.f32 %v1523, 0.70710677
        %v1693 = vmul.f32 %v1527, 0.70710677
        %v1694 = vmul.f32 %v1529, 0.70710677
        %v1695 = vmul.f32 %v1533, 0.70710677
        %v1696 = vmul.f32 %v1535, 0.70710677
        %v1697 = vmul.f32 %v1539, 0.70710677
        %v1698 = vmul.f32 %v1541, 0.70710677
        %v1699 = vmul.f32 %v1545, 0.70710677
        %v1700 = vmul.f32 %v1547, 0.70710677
        %v1701 = vmul.f32 %v1551, 0.70710677
        %v1702 = vmul.f32 %v1553, 0.70710677
        %v1703 = vmul.f32 %v1557, 0.70710677
        %v1704 = vmul.f32 %v1559, 0.70710677
        %v1705 = vmul.f32 %v1563, 0.70710677
        %v1706 = vmul.f32 %v1565, 0.70710677
        %v1707 = vmul.f32 %v1569, 0.70710677
        %v1708 = vmul.f32 %v1571, 0.70710677
        %v1709 = vmul.f32 %v1575, 0.70710677
        %v1710 = vmul.f32 %v1577, 0.70710677
        %v1711 = vmul.f32 %v1581, 0.70710677
        %v1712 = vmul.f32 %v1583, 0.70710677
        %v1713 = verf.f32.pop %v1649
        %v1714 = verf.f32.pop %v1650
        %v1715 = verf.f32.pop %v1651
        %v1716 = verf.f32.pop %v1652
        %v1717 = verf.f32.pop %v1653
        %v1718 = verf.f32.pop %v1654
        %v1719 = verf.f32.pop %v1655
        %v1720 = verf.f32.pop %v1656
        %v1721 = verf.f32.pop %v1657
        %v1722 = verf.f32.pop %v1658
        %v1723 = verf.f32.pop %v1659
        %v1724 = verf.f32.pop %v1660
        %v1725 = verf.f32.pop %v1661
        %v1726 = verf.f32.pop %v1662
        %v1727 = verf.f32.pop %v1663
        %v1728 = verf.f32.pop %v1664
        %v1729 = verf.f32.pop %v1665
        %v1730 = verf.f32.pop %v1666
        %v1731 = verf.f32.pop %v1667
        %v1732 = verf.f32.pop %v1668
        %v1733 = verf.f32.pop %v1669
        %v1734 = verf.f32.pop %v1670
        %v1735 = verf.f32.pop %v1671
        %v1736 = verf.f32.pop %v1672
        %v1737 = verf.f32.pop %v1673
        %v1738 = verf.f32.pop %v1674
        %v1739 = verf.f32.pop %v1675
        %v1740 = verf.f32.pop %v1676
        %v1741 = verf.f32.pop %v1677
        %v1742 = verf.f32.pop %v1678
        %v1743 = verf.f32.pop %v1679
        %v1744 = verf.f32.pop %v1680
        %v1745 = verf.f32.pop %v1681
        %v1746 = verf.f32.pop %v1682
        %v1747 = verf.f32.pop %v1683
        %v1748 = verf.f32.pop %v1684
        %v1749 = verf.f32.pop %v1685
        %v1750 = verf.f32.pop %v1686
        %v1751 = verf.f32.pop %v1687
        %v1752 = verf.f32.pop %v1688
        %v1753 = verf.f32.pop %v1689
        %v1754 = verf.f32.pop %v1690
        %v1755 = verf.f32.pop %v1691
        %v1756 = verf.f32.pop %v1692
        %v1757 = verf.f32.pop %v1693
        %v1758 = verf.f32.pop %v1694
        %v1759 = verf.f32.pop %v1695
        %v1760 = verf.f32.pop %v1696
        %v1761 = verf.f32.pop %v1697
        %v1762 = verf.f32.pop %v1698
        %v1763 = verf.f32.pop %v1699
        %v1764 = verf.f32.pop %v1700
        %v1765 = verf.f32.pop %v1701
        %v1766 = verf.f32.pop %v1702
        %v1767 = verf.f32.pop %v1703
        %v1768 = verf.f32.pop %v1704
        %v1769 = verf.f32.pop %v1705
        %v1770 = verf.f32.pop %v1706
        %v1771 = verf.f32.pop %v1707
        %v1772 = verf.f32.pop %v1708
        %v1773 = verf.f32.pop %v1709
        %v1774 = verf.f32.pop %v1710
        %v1775 = verf.f32.pop %v1711
        %v1776 = verf.f32.pop %v1712
        %v1777 = vadd.f32 %v1713, 1.0
        %v1778 = vadd.f32 %v1714, 1.0
        %v1779 = vadd.f32 %v1715, 1.0
        %v1780 = vadd.f32 %v1716, 1.0
        %v1781 = vadd.f32 %v1717, 1.0
        %v1782 = vadd.f32 %v1718, 1.0
        %v1783 = vadd.f32 %v1719, 1.0
        %v1784 = vadd.f32 %v1720, 1.0
        %v1785 = vadd.f32 %v1721, 1.0
        %v1786 = vadd.f32 %v1722, 1.0
        %v1787 = vadd.f32 %v1723, 1.0
        %v1788 = vadd.f32 %v1724, 1.0
        %v1789 = vadd.f32 %v1725, 1.0
        %v1790 = vadd.f32 %v1726, 1.0
        %v1791 = vadd.f32 %v1727, 1.0
        %v1792 = vadd.f32 %v1728, 1.0
        %v1793 = vadd.f32 %v1729, 1.0
        %v1794 = vadd.f32 %v1730, 1.0
        %v1795 = vadd.f32 %v1731, 1.0
        %v1796 = vadd.f32 %v1732, 1.0
        %v1797 = vadd.f32 %v1733, 1.0
        %v1798 = vadd.f32 %v1734, 1.0
        %v1799 = vadd.f32 %v1735, 1.0
        %v1800 = vadd.f32 %v1736, 1.0
        %v1801 = vadd.f32 %v1737, 1.0
        %v1802 = vadd.f32 %v1738, 1.0
        %v1803 = vadd.f32 %v1739, 1.0
        %v1804 = vadd.f32 %v1740, 1.0
        %v1805 = vadd.f32 %v1741, 1.0
        %v1806 = vadd.f32 %v1742, 1.0
        %v1807 = vadd.f32 %v1743, 1.0
        %v1808 = vadd.f32 %v1744, 1.0
        %v1809 = vadd.f32 %v1745, 1.0
        %v1810 = vadd.f32 %v1746, 1.0
        %v1811 = vadd.f32 %v1747, 1.0
        %v1812 = vadd.f32 %v1748, 1.0
        %v1813 = vadd.f32 %v1749, 1.0
        %v1814 = vadd.f32 %v1750, 1.0
        %v1815 = vadd.f32 %v1751, 1.0
        %v1816 = vadd.f32 %v1752, 1.0
        %v1817 = vadd.f32 %v1753, 1.0
        %v1818 = vadd.f32 %v1754, 1.0
        %v1819 = vadd.f32 %v1755, 1.0
        %v1820 = vadd.f32 %v1756, 1.0
        %v1821 = vadd.f32 %v1757, 1.0
        %v1822 = vadd.f32 %v1758, 1.0
        %v1823 = vadd.f32 %v1759, 1.0
        %v1824 = vadd.f32 %v1760, 1.0
        %v1825 = vadd.f32 %v1761, 1.0
        %v1826 = vadd.f32 %v1762, 1.0
        %v1827 = vadd.f32 %v1763, 1.0
        %v1828 = vadd.f32 %v1764, 1.0
        %v1829 = vadd.f32 %v1765, 1.0
        %v1830 = vadd.f32 %v1766, 1.0
        %v1831 = vadd.f32 %v1767, 1.0
        %v1832 = vadd.f32 %v1768, 1.0
        %v1833 = vadd.f32 %v1769, 1.0
        %v1834 = vadd.f32 %v1770, 1.0
        %v1835 = vadd.f32 %v1771, 1.0
        %v1836 = vadd.f32 %v1772, 1.0
        %v1837 = vadd.f32 %v1773, 1.0
        %v1838 = vadd.f32 %v1774, 1.0
        %v1839 = vadd.f32 %v1775, 1.0
        %v1840 = vadd.f32 %v1776, 1.0
        %v1841 = vmul.f32 %v1585, %v1777
        %v1842 = vmul.f32 %v1586, %v1778
        %v1843 = vmul.f32 %v1587, %v1779
        %v1844 = vmul.f32 %v1588, %v1780
        %v1845 = vmul.f32 %v1589, %v1781
        %v1846 = vmul.f32 %v1590, %v1782
        %v1847 = vmul.f32 %v1591, %v1783
        %v1848 = vmul.f32 %v1592, %v1784
        %v1849 = vmul.f32 %v1593, %v1785
        %v1850 = vmul.f32 %v1594, %v1786
        %v1851 = vmul.f32 %v1595, %v1787
        %v1852 = vmul.f32 %v1596, %v1788
        %v1853 = vmul.f32 %v1597, %v1789
        %v1854 = vmul.f32 %v1598, %v1790
        %v1855 = vmul.f32 %v1599, %v1791
        %v1856 = vmul.f32 %v1600, %v1792
        %v1857 = vmul.f32 %v1601, %v1793
        %v1858 = vmul.f32 %v1602, %v1794
        %v1859 = vmul.f32 %v1603, %v1795
        %v1860 = vmul.f32 %v1604, %v1796
        %v1861 = vmul.f32 %v1605, %v1797
        %v1862 = vmul.f32 %v1606, %v1798
        %v1863 = vmul.f32 %v1607, %v1799
        %v1864 = vmul.f32 %v1608, %v1800
        %v1865 = vmul.f32 %v1609, %v1801
        %v1866 = vmul.f32 %v1610, %v1802
        %v1867 = vmul.f32 %v1611, %v1803
        %v1868 = vmul.f32 %v1612, %v1804
        %v1869 = vmul.f32 %v1613, %v1805
        %v1870 = vmul.f32 %v1614, %v1806
        %v1871 = vmul.f32 %v1615, %v1807
        %v1872 = vmul.f32 %v1616, %v1808
        %v1873 = vmul.f32 %v1617, %v1809
        %v1874 = vmul.f32 %v1618, %v1810
        %v1875 = vmul.f32 %v1619, %v1811
        %v1876 = vmul.f32 %v1620, %v1812
        %v1877 = vmul.f32 %v1621, %v1813
        %v1878 = vmul.f32 %v1622, %v1814
        %v1879 = vmul.f32 %v1623, %v1815
        %v1880 = vmul.f32 %v1624, %v1816
        %v1881 = vmul.f32 %v1625, %v1817
        %v1882 = vmul.f32 %v1626, %v1818
        %v1883 = vmul.f32 %v1627, %v1819
        %v1884 = vmul.f32 %v1628, %v1820
        %v1885 = vmul.f32 %v1629, %v1821
        %v1886 = vmul.f32 %v1630, %v1822
        %v1887 = vmul.f32 %v1631, %v1823
        %v1888 = vmul.f32 %v1632, %v1824
        %v1889 = vmul.f32 %v1633, %v1825
        %v1890 = vmul.f32 %v1634, %v1826
        %v1891 = vmul.f32 %v1635, %v1827
        %v1892 = vmul.f32 %v1636, %v1828
        %v1893 = vmul.f32 %v1637, %v1829
        %v1894 = vmul.f32 %v1638, %v1830
        %v1895 = vmul.f32 %v1639, %v1831
        %v1896 = vmul.f32 %v1640, %v1832
        %v1897 = vmul.f32 %v1641, %v1833
        %v1898 = vmul.f32 %v1642, %v1834
        %v1899 = vmul.f32 %v1643, %v1835
        %v1900 = vmul.f32 %v1644, %v1836
        %v1901 = vmul.f32 %v1645, %v1837
        %v1902 = vmul.f32 %v1646, %v1838
        %v1903 = vmul.f32 %v1647, %v1839
        %v1904 = vmul.f32 %v1648, %v1840
        %v1905 = vld [vmem:[#allocation2] sm:$0xff]
        %v1906 = vld [vmem:[#allocation2 + $0x8] sm:$0xff]
        %v1907 = vld [vmem:[#allocation2 + $0x10] sm:$0xff]
        %v1908 = vld [vmem:[#allocation2 + $0x18] sm:$0xff]
        %v1909 = vld [vmem:[#allocation2 + $0x20] sm:$0xff]
        %v1910 = vld [vmem:[#allocation2 + $0x28] sm:$0xff]
        %v1911 = vld [vmem:[#allocation2 + $0x30] sm:$0xff]
        %v1912 = vld [vmem:[#allocation2 + $0x38] sm:$0xff]
        %v1913 = vld [vmem:[#allocation2 + $0x40] sm:$0xff]
        %v1914 = vld [vmem:[#allocation2 + $0x48] sm:$0xff]
        %v1915 = vld [vmem:[#allocation2 + $0x50] sm:$0xff]
        %v1916 = vld [vmem:[#allocation2 + $0x58] sm:$0xff]
        %v1917 = vld [vmem:[#allocation2 + $0x60] sm:$0xff]
        %v1918 = vld [vmem:[#allocation2 + $0x68] sm:$0xff]
        %v1919 = vld [vmem:[#allocation2 + $0x70] sm:$0xff]
        %v1920 = vld [vmem:[#allocation2 + $0x78] sm:$0xff]
        %v1921 = vld [vmem:[#allocation2 + $0x80] sm:$0xff]
        %v1922 = vld [vmem:[#allocation2 + $0x88] sm:$0xff]
        %v1923 = vld [vmem:[#allocation2 + $0x90] sm:$0xff]
        %v1924 = vld [vmem:[#allocation2 + $0x98] sm:$0xff]
        %v1925 = vld [vmem:[#allocation2 + $0xa0] sm:$0xff]
        %v1926 = vld [vmem:[#allocation2 + $0xa8] sm:$0xff]
        %v1927 = vld [vmem:[#allocation2 + $0xb0] sm:$0xff]
        %v1928 = vld [vmem:[#allocation2 + $0xb8] sm:$0xff]
        %v1929 = vld [vmem:[#allocation2 + $0xc0] sm:$0xff]
        %v1930 = vld [vmem:[#allocation2 + $0xc8] sm:$0xff]
        %v1931 = vld [vmem:[#allocation2 + $0xd0] sm:$0xff]
        %v1932 = vld [vmem:[#allocation2 + $0xd8] sm:$0xff]
        %v1933 = vld [vmem:[#allocation2 + $0xe0] sm:$0xff]
        %v1934 = vld [vmem:[#allocation2 + $0xe8] sm:$0xff]
        %v1935 = vld [vmem:[#allocation2 + $0xf0] sm:$0xff]
        %v1936 = vld [vmem:[#allocation2 + $0xf8] sm:$0xff]
        %v1937 = vld [vmem:[%s3 + $0x100] sm:$0xff]
        %v1938 = vld [vmem:[%s3 + $0x108] sm:$0xff]
        %v1939 = vld [vmem:[%s3 + $0x110] sm:$0xff]
        %v1940 = vld [vmem:[%s3 + $0x118] sm:$0xff]
        %v1941 = vld [vmem:[%s3 + $0x120] sm:$0xff]
        %v1942 = vld [vmem:[%s3 + $0x128] sm:$0xff]
        %v1943 = vld [vmem:[%s3 + $0x130] sm:$0xff]
        %v1944 = vld [vmem:[%s3 + $0x138] sm:$0xff]
        %v1945 = vld [vmem:[%s3 + $0x140] sm:$0xff]
        %v1946 = vld [vmem:[%s3 + $0x148] sm:$0xff]
        %v1947 = vld [vmem:[%s3 + $0x150] sm:$0xff]
        %v1948 = vld [vmem:[%s3 + $0x158] sm:$0xff]
        %v1949 = vld [vmem:[%s3 + $0x160] sm:$0xff]
        %v1950 = vld [vmem:[%s3 + $0x168] sm:$0xff]
        %v1951 = vld [vmem:[%s3 + $0x170] sm:$0xff]
        %v1952 = vld [vmem:[%s3 + $0x178] sm:$0xff]
        %v1953 = vld [vmem:[%s3 + $0x180] sm:$0xff]
        %v1954 = vld [vmem:[%s3 + $0x188] sm:$0xff]
        %v1955 = vld [vmem:[%s3 + $0x190] sm:$0xff]
        %v1956 = vld [vmem:[%s3 + $0x198] sm:$0xff]
        %v1957 = vld [vmem:[%s3 + $0x1a0] sm:$0xff]
        %v1958 = vld [vmem:[%s3 + $0x1a8] sm:$0xff]
        %v1959 = vld [vmem:[%s3 + $0x1b0] sm:$0xff]
        %v1960 = vld [vmem:[%s3 + $0x1b8] sm:$0xff]
        %v1961 = vld [vmem:[%s3 + $0x1c0] sm:$0xff]
        %v1962 = vld [vmem:[%s3 + $0x1c8] sm:$0xff]
        %v1963 = vld [vmem:[%s3 + $0x1d0] sm:$0xff]
        %v1964 = vld [vmem:[%s3 + $0x1d8] sm:$0xff]
        %v1965 = vld [vmem:[%s3 + $0x1e0] sm:$0xff]
        %v1966 = vld [vmem:[%s3 + $0x1e8] sm:$0xff]
        %v1967 = vld [vmem:[%s3 + $0x1f0] sm:$0xff]
        %v1968 = vld [vmem:[%s3 + $0x1f8] sm:$0xff]
        %1969 = vmatprep.subr.mxu0 0.0
        %1970 = vmatpush1.msra.mxu0 %v1937
        %1971 = vmatprep.subr.mxu0 0.0
        %1972 = vmatpush1.msra.mxu0 %v1938
        %1973 = vmatprep.subr.mxu0 0.0
        %1974 = vmatpush1.msra.mxu0 %v1939
        %1975 = vmatprep.subr.mxu0 0.0
        %1976 = vmatpush1.msra.mxu0 %v1940
        %1977 = vmatprep.subr.mxu0 0.0
        %1978 = vmatpush1.msra.mxu0 %v1941
        %1979 = vmatprep.subr.mxu0 0.0
        %1980 = vmatpush1.msra.mxu0 %v1942
        %1981 = vmatprep.subr.mxu0 0.0
        %1982 = vmatpush1.msra.mxu0 %v1943
        %1983 = vmatprep.subr.mxu0 0.0
        %1984 = vmatpush1.msra.mxu0 %v1944
        %1985 = vmatprep.subr.mxu0 0.0
        %1986 = vmatpush1.msra.mxu0 %v1945
        %1987 = vmatprep.subr.mxu0 0.0
        %1988 = vmatpush1.msra.mxu0 %v1946
        %1989 = vmatprep.subr.mxu0 0.0
        %1990 = vmatpush1.msra.mxu0 %v1947
        %1991 = vmatprep.subr.mxu0 0.0
        %1992 = vmatpush1.msra.mxu0 %v1948
        %1993 = vmatprep.subr.mxu0 0.0
        %1994 = vmatpush1.msra.mxu0 %v1949
        %1995 = vmatprep.subr.mxu0 0.0
        %1996 = vmatpush1.msra.mxu0 %v1950
        %1997 = vmatprep.subr.mxu0 0.0
        %1998 = vmatpush1.msra.mxu0 %v1951
        %1999 = vmatprep.subr.mxu0 0.0
        %2000 = vmatpush1.msra.mxu0 %v1952
        %2001 = vmatprep.subr.mxu0 0.0
        %2002 = vmatpush1.msra.mxu0 %v1953
        %2003 = vmatprep.subr.mxu0 0.0
        %2004 = vmatpush1.msra.mxu0 %v1954
        %2005 = vmatprep.subr.mxu0 0.0
        %2006 = vmatpush1.msra.mxu0 %v1955
        %2007 = vmatprep.subr.mxu0 0.0
        %2008 = vmatpush1.msra.mxu0 %v1956
        %2009 = vmatprep.subr.mxu0 0.0
        %2010 = vmatpush1.msra.mxu0 %v1957
        %2011 = vmatprep.subr.mxu0 0.0
        %2012 = vmatpush1.msra.mxu0 %v1958
        %2013 = vmatprep.subr.mxu0 0.0
        %2014 = vmatpush1.msra.mxu0 %v1959
        %2015 = vmatprep.subr.mxu0 0.0
        %2016 = vmatpush1.msra.mxu0 %v1960
        %2017 = vmatprep.subr.mxu0 0.0
        %2018 = vmatpush1.msra.mxu0 %v1961
        %2019 = vmatprep.subr.mxu0 0.0
        %2020 = vmatpush1.msra.mxu0 %v1962
        %2021 = vmatprep.subr.mxu0 0.0
        %2022 = vmatpush1.msra.mxu0 %v1963
        %2023 = vmatprep.subr.mxu0 0.0
        %2024 = vmatpush1.msra.mxu0 %v1964
        %2025 = vmatprep.subr.mxu0 0.0
        %2026 = vmatpush1.msra.mxu0 %v1965
        %2027 = vmatprep.subr.mxu0 0.0
        %2028 = vmatpush1.msra.mxu0 %v1966
        %2029 = vmatprep.subr.mxu0 0.0
        %2030 = vmatpush1.msra.mxu0 %v1967
        %2031 = vmatprep.subr.mxu0 0.0
        %2032 = vmatpush1.msra.mxu0 %v1968
        %2033 = vmatprep.mubr.f32.mxu0 %v1842
        %2034 = vmatmul.mubr.f32.gmra.mrb[0].mxu0 %v1841
        %v2035 = vpop.f32.mrb[0].mxu0
        %v2036 = vadd.f32 0.0, %v2035
        %v2037 = vpop.f32.mrb[0].mxu0
        %2038 = vmatprep.mubr.f32.mxu0 %v1844
        %2039 = vmatmul.mubr.f32.gmra.mrb[0].mxu0 %v1843
        %v2040 = vpop.f32.mrb[0].mxu0
        %v2041 = vadd.f32 0.0, %v2040
        %v2042 = vpop.f32.mrb[0].mxu0
        %2043 = vmatprep.mubr.f32.mxu0 %v1846
        %2044 = vmatmul.mubr.f32.gmra.mrb[0].mxu0 %v1845
        %v2045 = vpop.f32.mrb[0].mxu0
        %v2046 = vadd.f32 0.0, %v2045
        %v2047 = vpop.f32.mrb[0].mxu0
        %2048 = vmatprep.mubr.f32.mxu0 %v1848
        %2049 = vmatmul.mubr.f32.gmra.mrb[0].mxu0 %v1847
        %v2050 = vpop.f32.mrb[0].mxu0
        %v2051 = vadd.f32 0.0, %v2050
        %v2052 = vpop.f32.mrb[0].mxu0
        %2053 = vmatprep.mubr.f32.mxu0 %v1850
        %2054 = vmatmul.mubr.f32.gmra.mrb[0].mxu0 %v1849
        %v2055 = vpop.f32.mrb[0].mxu0
        %v2056 = vadd.f32 0.0, %v2055
        %v2057 = vpop.f32.mrb[0].mxu0
        %2058 = vmatprep.mubr.f32.mxu0 %v1852
        %2059 = vmatmul.mubr.f32.gmra.mrb[0].mxu0 %v1851
        %v2060 = vpop.f32.mrb[0].mxu0
        %v2061 = vadd.f32 0.0, %v2060
        %v2062 = vpop.f32.mrb[0].mxu0
        %2063 = vmatprep.mubr.f32.mxu0 %v1854
        %2064 = vmatmul.mubr.f32.gmra.mrb[0].mxu0 %v1853
        %v2065 = vpop.f32.mrb[0].mxu0
        %v2066 = vadd.f32 0.0, %v2065
        %v2067 = vpop.f32.mrb[0].mxu0
        %2068 = vmatprep.mubr.f32.mxu0 %v1856
        %2069 = vmatmul.mubr.f32.gmra.mrb[0].mxu0 %v1855
        %v2070 = vpop.f32.mrb[0].mxu0
        %v2071 = vadd.f32 0.0, %v2070
        %v2072 = vpop.f32.mrb[0].mxu0
        %2073 = vmatprep.mubr.f32.mxu0 %v1858
        %2074 = vmatmul.mubr.f32.gmra.mrb[0].mxu0 %v1857
        %v2075 = vpop.f32.mrb[0].mxu0
        %v2076 = vadd.f32 0.0, %v2075
        %v2077 = vpop.f32.mrb[0].mxu0
        %2078 = vmatprep.mubr.f32.mxu0 %v1860
        %2079 = vmatmul.mubr.f32.gmra.mrb[0].mxu0 %v1859
        %v2080 = vpop.f32.mrb[0].mxu0
        %v2081 = vadd.f32 0.0, %v2080
        %v2082 = vpop.f32.mrb[0].mxu0
        %2083 = vmatprep.mubr.f32.mxu0 %v1862
        %2084 = vmatmul.mubr.f32.gmra.mrb[0].mxu0 %v1861
        %v2085 = vpop.f32.mrb[0].mxu0
        %v2086 = vadd.f32 0.0, %v2085
        %v2087 = vpop.f32.mrb[0].mxu0
        %2088 = vmatprep.mubr.f32.mxu0 %v1864
        %2089 = vmatmul.mubr.f32.gmra.mrb[0].mxu0 %v1863
        %v2090 = vpop.f32.mrb[0].mxu0
        %v2091 = vadd.f32 0.0, %v2090
        %v2092 = vpop.f32.mrb[0].mxu0
        %2093 = vmatprep.mubr.f32.mxu0 %v1866
        %2094 = vmatmul.mubr.f32.gmra.mrb[0].mxu0 %v1865
        %v2095 = vpop.f32.mrb[0].mxu0
        %v2096 = vadd.f32 0.0, %v2095
        %v2097 = vpop.f32.mrb[0].mxu0
        %2098 = vmatprep.mubr.f32.mxu0 %v1868
        %2099 = vmatmul.mubr.f32.gmra.mrb[0].mxu0 %v1867
        %v2100 = vpop.f32.mrb[0].mxu0
        %v2101 = vadd.f32 0.0, %v2100
        %v2102 = vpop.f32.mrb[0].mxu0
        %2103 = vmatprep.mubr.f32.mxu0 %v1870
        %2104 = vmatmul.mubr.f32.gmra.mrb[0].mxu0 %v1869
        %v2105 = vpop.f32.mrb[0].mxu0
        %v2106 = vadd.f32 0.0, %v2105
        %v2107 = vpop.f32.mrb[0].mxu0
        %2108 = vmatprep.mubr.f32.mxu0 %v1872
        %2109 = vmatmul.mubr.f32.gmra.mrb[0].mxu0 %v1871
        %v2110 = vpop.f32.mrb[0].mxu0
        %v2111 = vadd.f32 0.0, %v2110
        %v2112 = vpop.f32.mrb[0].mxu0
        %2113 = vmatprep.mubr.f32.mxu0 %v1874
        %2114 = vmatmul.mubr.f32.gmra.mrb[0].mxu0 %v1873
        %v2115 = vpop.f32.mrb[0].mxu0
        %v2116 = vadd.f32 0.0, %v2115
        %v2117 = vpop.f32.mrb[0].mxu0
        %2118 = vmatprep.mubr.f32.mxu0 %v1876
        %2119 = vmatmul.mubr.f32.gmra.mrb[0].mxu0 %v1875
        %v2120 = vpop.f32.mrb[0].mxu0
        %v2121 = vadd.f32 0.0, %v2120
        %v2122 = vpop.f32.mrb[0].mxu0
        %2123 = vmatprep.mubr.f32.mxu0 %v1878
        %2124 = vmatmul.mubr.f32.gmra.mrb[0].mxu0 %v1877
        %v2125 = vpop.f32.mrb[0].mxu0
        %v2126 = vadd.f32 0.0, %v2125
        %v2127 = vpop.f32.mrb[0].mxu0
        %2128 = vmatprep.mubr.f32.mxu0 %v1880
        %2129 = vmatmul.mubr.f32.gmra.mrb[0].mxu0 %v1879
        %v2130 = vpop.f32.mrb[0].mxu0
        %v2131 = vadd.f32 0.0, %v2130
        %v2132 = vpop.f32.mrb[0].mxu0
        %2133 = vmatprep.mubr.f32.mxu0 %v1882
        %2134 = vmatmul.mubr.f32.gmra.mrb[0].mxu0 %v1881
        %v2135 = vpop.f32.mrb[0].mxu0
        %v2136 = vadd.f32 0.0, %v2135
        %v2137 = vpop.f32.mrb[0].mxu0
        %2138 = vmatprep.mubr.f32.mxu0 %v1884
        %2139 = vmatmul.mubr.f32.gmra.mrb[0].mxu0 %v1883
        %v2140 = vpop.f32.mrb[0].mxu0
        %v2141 = vadd.f32 0.0, %v2140
        %v2142 = vpop.f32.mrb[0].mxu0
        %2143 = vmatprep.mubr.f32.mxu0 %v1886
        %2144 = vmatmul.mubr.f32.gmra.mrb[0].mxu0 %v1885
        %v2145 = vpop.f32.mrb[0].mxu0
        %v2146 = vadd.f32 0.0, %v2145
        %v2147 = vpop.f32.mrb[0].mxu0
        %2148 = vmatprep.mubr.f32.mxu0 %v1888
        %2149 = vmatmul.mubr.f32.gmra.mrb[0].mxu0 %v1887
        %v2150 = vpop.f32.mrb[0].mxu0
        %v2151 = vadd.f32 0.0, %v2150
        %v2152 = vpop.f32.mrb[0].mxu0
        %2153 = vmatprep.mubr.f32.mxu0 %v1890
        %2154 = vmatmul.mubr.f32.gmra.mrb[0].mxu0 %v1889
        %v2155 = vpop.f32.mrb[0].mxu0
        %v2156 = vadd.f32 0.0, %v2155
        %v2157 = vpop.f32.mrb[0].mxu0
        %2158 = vmatprep.mubr.f32.mxu0 %v1892
        %2159 = vmatmul.mubr.f32.gmra.mrb[0].mxu0 %v1891
        %v2160 = vpop.f32.mrb[0].mxu0
        %v2161 = vadd.f32 0.0, %v2160
        %v2162 = vpop.f32.mrb[0].mxu0
        %2163 = vmatprep.mubr.f32.mxu0 %v1894
        %2164 = vmatmul.mubr.f32.gmra.mrb[0].mxu0 %v1893
        %v2165 = vpop.f32.mrb[0].mxu0
        %v2166 = vadd.f32 0.0, %v2165
        %v2167 = vpop.f32.mrb[0].mxu0
        %2168 = vmatprep.mubr.f32.mxu0 %v1896
        %2169 = vmatmul.mubr.f32.gmra.mrb[0].mxu0 %v1895
        %v2170 = vpop.f32.mrb[0].mxu0
        %v2171 = vadd.f32 0.0, %v2170
        %v2172 = vpop.f32.mrb[0].mxu0
        %2173 = vmatprep.mubr.f32.mxu0 %v1898
        %2174 = vmatmul.mubr.f32.gmra.mrb[0].mxu0 %v1897
        %v2175 = vpop.f32.mrb[0].mxu0
        %v2176 = vadd.f32 0.0, %v2175
        %v2177 = vpop.f32.mrb[0].mxu0
        %2178 = vmatprep.mubr.f32.mxu0 %v1900
        %2179 = vmatmul.mubr.f32.gmra.mrb[0].mxu0 %v1899
        %v2180 = vpop.f32.mrb[0].mxu0
        %v2181 = vadd.f32 0.0, %v2180
        %v2182 = vpop.f32.mrb[0].mxu0
        %2183 = vmatprep.mubr.f32.mxu0 %v1902
        %2184 = vmatmul.mubr.f32.gmra.mrb[0].mxu0 %v1901
        %v2185 = vpop.f32.mrb[0].mxu0
        %v2186 = vadd.f32 0.0, %v2185
        %v2187 = vpop.f32.mrb[0].mxu0
        %2188 = vmatprep.mubr.f32.mxu0 %v1904
        %2189 = vmatmul.mubr.f32.gmra.mrb[0].mxu0 %v1903
        %v2190 = vpop.f32.mrb[0].mxu0
        %v2191 = vadd.f32 0.0, %v2190
        %v2192 = vpop.f32.mrb[0].mxu0
        %2193 = vdwg.mxu0
        %v2194 = vadd.f32 %v1905, %v2036
        %v2195 = vadd.f32 %v1906, %v2041
        %v2196 = vadd.f32 %v1907, %v2046
        %v2197 = vadd.f32 %v1908, %v2051
        %v2198 = vadd.f32 %v1909, %v2056
        %v2199 = vadd.f32 %v1910, %v2061
        %v2200 = vadd.f32 %v1911, %v2066
        %v2201 = vadd.f32 %v1912, %v2071
        %v2202 = vadd.f32 %v1913, %v2076
        %v2203 = vadd.f32 %v1914, %v2081
        %v2204 = vadd.f32 %v1915, %v2086
        %v2205 = vadd.f32 %v1916, %v2091
        %v2206 = vadd.f32 %v1917, %v2096
        %v2207 = vadd.f32 %v1918, %v2101
        %v2208 = vadd.f32 %v1919, %v2106
        %v2209 = vadd.f32 %v1920, %v2111
        %v2210 = vadd.f32 %v1921, %v2116
        %v2211 = vadd.f32 %v1922, %v2121
        %v2212 = vadd.f32 %v1923, %v2126
        %v2213 = vadd.f32 %v1924, %v2131
        %v2214 = vadd.f32 %v1925, %v2136
        %v2215 = vadd.f32 %v1926, %v2141
        %v2216 = vadd.f32 %v1927, %v2146
        %v2217 = vadd.f32 %v1928, %v2151
        %v2218 = vadd.f32 %v1929, %v2156
        %v2219 = vadd.f32 %v1930, %v2161
        %v2220 = vadd.f32 %v1931, %v2166
        %v2221 = vadd.f32 %v1932, %v2171
        %v2222 = vadd.f32 %v1933, %v2176
        %v2223 = vadd.f32 %v1934, %v2181
        %v2224 = vadd.f32 %v1935, %v2186
        %v2225 = vadd.f32 %v1936, %v2191
        %2226 = vst [vmem:[#allocation2] sm:$0xff] %v2194
        %2227 = vst [vmem:[#allocation2 + $0x8] sm:$0xff] %v2195
        %2228 = vst [vmem:[#allocation2 + $0x10] sm:$0xff] %v2196
        %2229 = vst [vmem:[#allocation2 + $0x18] sm:$0xff] %v2197
        %2230 = vst [vmem:[#allocation2 + $0x20] sm:$0xff] %v2198
        %2231 = vst [vmem:[#allocation2 + $0x28] sm:$0xff] %v2199
        %2232 = vst [vmem:[#allocation2 + $0x30] sm:$0xff] %v2200
        %2233 = vst [vmem:[#allocation2 + $0x38] sm:$0xff] %v2201
        %2234 = vst [vmem:[#allocation2 + $0x40] sm:$0xff] %v2202
        %2235 = vst [vmem:[#allocation2 + $0x48] sm:$0xff] %v2203
        %2236 = vst [vmem:[#allocation2 + $0x50] sm:$0xff] %v2204
        %2237 = vst [vmem:[#allocation2 + $0x58] sm:$0xff] %v2205
        %2238 = vst [vmem:[#allocation2 + $0x60] sm:$0xff] %v2206
        %2239 = vst [vmem:[#allocation2 + $0x68] sm:$0xff] %v2207
        %2240 = vst [vmem:[#allocation2 + $0x70] sm:$0xff] %v2208
        %2241 = vst [vmem:[#allocation2 + $0x78] sm:$0xff] %v2209
        %2242 = vst [vmem:[#allocation2 + $0x80] sm:$0xff] %v2210
        %2243 = vst [vmem:[#allocation2 + $0x88] sm:$0xff] %v2211
        %2244 = vst [vmem:[#allocation2 + $0x90] sm:$0xff] %v2212
        %2245 = vst [vmem:[#allocation2 + $0x98] sm:$0xff] %v2213
        %2246 = vst [vmem:[#allocation2 + $0xa0] sm:$0xff] %v2214
        %2247 = vst [vmem:[#allocation2 + $0xa8] sm:$0xff] %v2215
        %2248 = vst [vmem:[#allocation2 + $0xb0] sm:$0xff] %v2216
        %2249 = vst [vmem:[#allocation2 + $0xb8] sm:$0xff] %v2217
        %2250 = vst [vmem:[#allocation2 + $0xc0] sm:$0xff] %v2218
        %2251 = vst [vmem:[#allocation2 + $0xc8] sm:$0xff] %v2219
        %2252 = vst [vmem:[#allocation2 + $0xd0] sm:$0xff] %v2220
        %2253 = vst [vmem:[#allocation2 + $0xd8] sm:$0xff] %v2221
        %2254 = vst [vmem:[#allocation2 + $0xe0] sm:$0xff] %v2222
        %2255 = vst [vmem:[#allocation2 + $0xe8] sm:$0xff] %v2223
        %2256 = vst [vmem:[#allocation2 + $0xf0] sm:$0xff] %v2224
        %2257 = vst [vmem:[#allocation2 + $0xf8] sm:$0xff] %v2225
        %v2258 = vld [vmem:[#allocation2] sm:$0xff]
        %v2259 = vld [vmem:[#allocation2 + $0x8] sm:$0xff]
        %v2260 = vld [vmem:[#allocation2 + $0x10] sm:$0xff]
        %v2261 = vld [vmem:[#allocation2 + $0x18] sm:$0xff]
        %v2262 = vld [vmem:[#allocation2 + $0x20] sm:$0xff]
        %v2263 = vld [vmem:[#allocation2 + $0x28] sm:$0xff]
        %v2264 = vld [vmem:[#allocation2 + $0x30] sm:$0xff]
        %v2265 = vld [vmem:[#allocation2 + $0x38] sm:$0xff]
        %v2266 = vld [vmem:[#allocation2 + $0x40] sm:$0xff]
        %v2267 = vld [vmem:[#allocation2 + $0x48] sm:$0xff]
        %v2268 = vld [vmem:[#allocation2 + $0x50] sm:$0xff]
        %v2269 = vld [vmem:[#allocation2 + $0x58] sm:$0xff]
        %v2270 = vld [vmem:[#allocation2 + $0x60] sm:$0xff]
        %v2271 = vld [vmem:[#allocation2 + $0x68] sm:$0xff]
        %v2272 = vld [vmem:[#allocation2 + $0x70] sm:$0xff]
        %v2273 = vld [vmem:[#allocation2 + $0x78] sm:$0xff]
        %v2274 = vld [vmem:[#allocation2 + $0x80] sm:$0xff]
        %v2275 = vld [vmem:[#allocation2 + $0x88] sm:$0xff]
        %v2276 = vld [vmem:[#allocation2 + $0x90] sm:$0xff]
        %v2277 = vld [vmem:[#allocation2 + $0x98] sm:$0xff]
        %v2278 = vld [vmem:[#allocation2 + $0xa0] sm:$0xff]
        %v2279 = vld [vmem:[#allocation2 + $0xa8] sm:$0xff]
        %v2280 = vld [vmem:[#allocation2 + $0xb0] sm:$0xff]
        %v2281 = vld [vmem:[#allocation2 + $0xb8] sm:$0xff]
        %v2282 = vld [vmem:[#allocation2 + $0xc0] sm:$0xff]
        %v2283 = vld [vmem:[#allocation2 + $0xc8] sm:$0xff]
        %v2284 = vld [vmem:[#allocation2 + $0xd0] sm:$0xff]
        %v2285 = vld [vmem:[#allocation2 + $0xd8] sm:$0xff]
        %v2286 = vld [vmem:[#allocation2 + $0xe0] sm:$0xff]
        %v2287 = vld [vmem:[#allocation2 + $0xe8] sm:$0xff]
        %v2288 = vld [vmem:[#allocation2 + $0xf0] sm:$0xff]
        %v2289 = vld [vmem:[#allocation2 + $0xf8] sm:$0xff]
        %v2290 = vld [vmem:[%s4] sm:$0x1]
        %v2292 = vlaneseq
        %v2293 = vshrl.u32 %v2292, 7
        %v2294 = vsub.s32 0, %v2293
        %v2295 = vrot.slane %v2290, %v2294
        %v2297 = vadd.f32 %v2258, %v2295
        %v2298 = vadd.f32 %v2259, %v2295
        %v2299 = vadd.f32 %v2260, %v2295
        %v2300 = vadd.f32 %v2261, %v2295
        %v2301 = vadd.f32 %v2262, %v2295
        %v2302 = vadd.f32 %v2263, %v2295
        %v2303 = vadd.f32 %v2264, %v2295
        %v2304 = vadd.f32 %v2265, %v2295
        %v2305 = vadd.f32 %v2266, %v2295
        %v2306 = vadd.f32 %v2267, %v2295
        %v2307 = vadd.f32 %v2268, %v2295
        %v2308 = vadd.f32 %v2269, %v2295
        %v2309 = vadd.f32 %v2270, %v2295
        %v2310 = vadd.f32 %v2271, %v2295
        %v2311 = vadd.f32 %v2272, %v2295
        %v2312 = vadd.f32 %v2273, %v2295
        %v2313 = vadd.f32 %v2274, %v2295
        %v2314 = vadd.f32 %v2275, %v2295
        %v2315 = vadd.f32 %v2276, %v2295
        %v2316 = vadd.f32 %v2277, %v2295
        %v2317 = vadd.f32 %v2278, %v2295
        %v2318 = vadd.f32 %v2279, %v2295
        %v2319 = vadd.f32 %v2280, %v2295
        %v2320 = vadd.f32 %v2281, %v2295
        %v2321 = vadd.f32 %v2282, %v2295
        %v2322 = vadd.f32 %v2283, %v2295
        %v2323 = vadd.f32 %v2284, %v2295
        %v2324 = vadd.f32 %v2285, %v2295
        %v2325 = vadd.f32 %v2286, %v2295
        %v2326 = vadd.f32 %v2287, %v2295
        %v2327 = vadd.f32 %v2288, %v2295
        %v2328 = vadd.f32 %v2289, %v2295
        %2329 = vst [vmem:[%s226] sm:$0xff] %v2297
        %2330 = vst [vmem:[%s226 + $0x8] sm:$0xff] %v2298
        %2331 = vst [vmem:[%s226 + $0x10] sm:$0xff] %v2299
        %2332 = vst [vmem:[%s226 + $0x18] sm:$0xff] %v2300
        %2333 = vst [vmem:[%s226 + $0x20] sm:$0xff] %v2301
        %2334 = vst [vmem:[%s226 + $0x28] sm:$0xff] %v2302
        %2335 = vst [vmem:[%s226 + $0x30] sm:$0xff] %v2303
        %2336 = vst [vmem:[%s226 + $0x38] sm:$0xff] %v2304
        %2337 = vst [vmem:[%s226 + $0x40] sm:$0xff] %v2305
        %2338 = vst [vmem:[%s226 + $0x48] sm:$0xff] %v2306
        %2339 = vst [vmem:[%s226 + $0x50] sm:$0xff] %v2307
        %2340 = vst [vmem:[%s226 + $0x58] sm:$0xff] %v2308
        %2341 = vst [vmem:[%s226 + $0x60] sm:$0xff] %v2309
        %2342 = vst [vmem:[%s226 + $0x68] sm:$0xff] %v2310
        %2343 = vst [vmem:[%s226 + $0x70] sm:$0xff] %v2311
        %2344 = vst [vmem:[%s226 + $0x78] sm:$0xff] %v2312
        %2345 = vst [vmem:[%s226 + $0x80] sm:$0xff] %v2313
        %2346 = vst [vmem:[%s226 + $0x88] sm:$0xff] %v2314
        %2347 = vst [vmem:[%s226 + $0x90] sm:$0xff] %v2315
        %2348 = vst [vmem:[%s226 + $0x98] sm:$0xff] %v2316
        %2349 = vst [vmem:[%s226 + $0xa0] sm:$0xff] %v2317
        %2350 = vst [vmem:[%s226 + $0xa8] sm:$0xff] %v2318
        %2351 = vst [vmem:[%s226 + $0xb0] sm:$0xff] %v2319
        %2352 = vst [vmem:[%s226 + $0xb8] sm:$0xff] %v2320
        %2353 = vst [vmem:[%s226 + $0xc0] sm:$0xff] %v2321
        %2354 = vst [vmem:[%s226 + $0xc8] sm:$0xff] %v2322
        %2355 = vst [vmem:[%s226 + $0xd0] sm:$0xff] %v2323
        %2356 = vst [vmem:[%s226 + $0xd8] sm:$0xff] %v2324
        %2357 = vst [vmem:[%s226 + $0xe0] sm:$0xff] %v2325
        %2358 = vst [vmem:[%s226 + $0xe8] sm:$0xff] %v2326
        %2359 = vst [vmem:[%s226 + $0xf0] sm:$0xff] %v2327
        %2360 = vst [vmem:[%s226 + $0xf8] sm:$0xff] %v2328
        %s2361 = sand.u32 %s134, 1
        %s2362 = sand.u32 %s134, 1
        %s2363 = smul.addr %s2362, 256
        %s2364 = scalar_lea.vmem [#allocation3], %s2363
        // Predicated region
        $region41: #{_ffn_pallas_impl.1} parent=39 // pred_check
          %p2365 = pneg %p144
        $region42: #{_ffn_pallas_impl.1} parent=39 // pred_check_branch
          %2367 = sbr.rel (%p2365) target = $region44
        $region43: #{_ffn_pallas_impl.1} parent=39 // pred_region
          %s2368 = smul.u32 32, %s16
          %s2369 = ssub.s32 50, %s2368
          %p2370 = scmp.lt.s32.totalorder %s2369, 32
          %s2371 = scalar_select %p2370, %s2369, 32
          %s2372 = smul.u32 128, %s2371
          %p2373 = scmp.ne.s32.totalorder 0, %s2372
          %s2374 = smul.addr %s2368, 8
          %s2375 = scalar_lea.vmem %s5, %s2374
          // Predicated region
          $region45: #{_ffn_pallas_impl.1} parent=43 // pred_check
            %p2376 = pneg %p2373
          $region46: #{_ffn_pallas_impl.1} parent=43 // pred_check_branch
            %2378 = sbr.rel (%p2376) target = $region48
          $region47: #{_ffn_pallas_impl.1} parent=43 // pred_region
            // Predicated region
            $region49: #{_ffn_pallas_impl.1} parent=47 // pred_check
              _
            $region50: #{_ffn_pallas_impl.1} parent=47 // pred_check_branch
              %2380 = sbr.rel (0) target = $region52
            $region51: #{_ffn_pallas_impl.1} parent=47 // pred_region
              // Predicated region
              $region71: #{_ffn_pallas_impl.1} parent=51 // pred_check
                _
              $region72: #{_ffn_pallas_impl.1} parent=51 // pred_check_branch
                %2491 = sbr.rel (0) target = $region74
              $region73: #{_ffn_pallas_impl.1} parent=51 // pred_region
                %s2492 = sshrl.u32 %s2371, 5
                // While loop
                $region75: #{_ffn_pallas_impl.1} parent=73 // loop_pre_header
                  _
                $region76: #{_ffn_pallas_impl.1} parent=73 // loop_header
                  %s2494 = sphi 0, %s2496
                  %p2495 = scmp.ge.s32.totalorder %s2494, %s2492
                  %s2499 = sphi 0, %s2568
                  %s2500 = sphi %s2364, %s2571
                  %s2501 = sphi %s2375, %s2572
                $region77: #{_ffn_pallas_impl.1} parent=73 // loop_header_branch
                  %2498 = sbr.rel (%p2495) target = $region81
                $region78: #{_ffn_pallas_impl.1} parent=73 // loop_body
                  %v2502 = vld [vmem:[%s2500] sm:$0xff]
                  %2503 = vst [vmem:[%s2501] sm:$0xff] %v2502
                  %v2504 = vld [vmem:[%s2500 + $0x8] sm:$0xff]
                  %2505 = vst [vmem:[%s2501 + $0x8] sm:$0xff] %v2504
                  %v2506 = vld [vmem:[%s2500 + $0x10] sm:$0xff]
                  %2507 = vst [vmem:[%s2501 + $0x10] sm:$0xff] %v2506
                  %v2508 = vld [vmem:[%s2500 + $0x18] sm:$0xff]
                  %2509 = vst [vmem:[%s2501 + $0x18] sm:$0xff] %v2508
                  %v2510 = vld [vmem:[%s2500 + $0x20] sm:$0xff]
                  %2511 = vst [vmem:[%s2501 + $0x20] sm:$0xff] %v2510
                  %v2512 = vld [vmem:[%s2500 + $0x28] sm:$0xff]
                  %2513 = vst [vmem:[%s2501 + $0x28] sm:$0xff] %v2512
                  %v2514 = vld [vmem:[%s2500 + $0x30] sm:$0xff]
                  %2515 = vst [vmem:[%s2501 + $0x30] sm:$0xff] %v2514
                  %v2516 = vld [vmem:[%s2500 + $0x38] sm:$0xff]
                  %2517 = vst [vmem:[%s2501 + $0x38] sm:$0xff] %v2516
                  %v2518 = vld [vmem:[%s2500 + $0x40] sm:$0xff]
                  %2519 = vst [vmem:[%s2501 + $0x40] sm:$0xff] %v2518
                  %v2520 = vld [vmem:[%s2500 + $0x48] sm:$0xff]
                  %2521 = vst [vmem:[%s2501 + $0x48] sm:$0xff] %v2520
                  %v2522 = vld [vmem:[%s2500 + $0x50] sm:$0xff]
                  %2523 = vst [vmem:[%s2501 + $0x50] sm:$0xff] %v2522
                  %v2524 = vld [vmem:[%s2500 + $0x58] sm:$0xff]
                  %2525 = vst [vmem:[%s2501 + $0x58] sm:$0xff] %v2524
                  %v2526 = vld [vmem:[%s2500 + $0x60] sm:$0xff]
                  %2527 = vst [vmem:[%s2501 + $0x60] sm:$0xff] %v2526
                  %v2528 = vld [vmem:[%s2500 + $0x68] sm:$0xff]
                  %2529 = vst [vmem:[%s2501 + $0x68] sm:$0xff] %v2528
                  %v2530 = vld [vmem:[%s2500 + $0x70] sm:$0xff]
                  %2531 = vst [vmem:[%s2501 + $0x70] sm:$0xff] %v2530
                  %v2532 = vld [vmem:[%s2500 + $0x78] sm:$0xff]
                  %2533 = vst [vmem:[%s2501 + $0x78] sm:$0xff] %v2532
                  %v2534 = vld [vmem:[%s2500 + $0x80] sm:$0xff]
                  %2535 = vst [vmem:[%s2501 + $0x80] sm:$0xff] %v2534
                  %v2536 = vld [vmem:[%s2500 + $0x88] sm:$0xff]
                  %2537 = vst [vmem:[%s2501 + $0x88] sm:$0xff] %v2536
                  %v2538 = vld [vmem:[%s2500 + $0x90] sm:$0xff]
                  %2539 = vst [vmem:[%s2501 + $0x90] sm:$0xff] %v2538
                  %v2540 = vld [vmem:[%s2500 + $0x98] sm:$0xff]
                  %2541 = vst [vmem:[%s2501 + $0x98] sm:$0xff] %v2540
                  %v2542 = vld [vmem:[%s2500 + $0xa0] sm:$0xff]
                  %2543 = vst [vmem:[%s2501 + $0xa0] sm:$0xff] %v2542
                  %v2544 = vld [vmem:[%s2500 + $0xa8] sm:$0xff]
                  %2545 = vst [vmem:[%s2501 + $0xa8] sm:$0xff] %v2544
                  %v2546 = vld [vmem:[%s2500 + $0xb0] sm:$0xff]
                  %2547 = vst [vmem:[%s2501 + $0xb0] sm:$0xff] %v2546
                  %v2548 = vld [vmem:[%s2500 + $0xb8] sm:$0xff]
                  %2549 = vst [vmem:[%s2501 + $0xb8] sm:$0xff] %v2548
                  %v2550 = vld [vmem:[%s2500 + $0xc0] sm:$0xff]
                  %2551 = vst [vmem:[%s2501 + $0xc0] sm:$0xff] %v2550
                  %v2552 = vld [vmem:[%s2500 + $0xc8] sm:$0xff]
                  %2553 = vst [vmem:[%s2501 + $0xc8] sm:$0xff] %v2552
                  %v2554 = vld [vmem:[%s2500 + $0xd0] sm:$0xff]
                  %2555 = vst [vmem:[%s2501 + $0xd0] sm:$0xff] %v2554
                  %v2556 = vld [vmem:[%s2500 + $0xd8] sm:$0xff]
                  %2557 = vst [vmem:[%s2501 + $0xd8] sm:$0xff] %v2556
                  %v2558 = vld [vmem:[%s2500 + $0xe0] sm:$0xff]
                  %2559 = vst [vmem:[%s2501 + $0xe0] sm:$0xff] %v2558
                  %v2560 = vld [vmem:[%s2500 + $0xe8] sm:$0xff]
                  %2561 = vst [vmem:[%s2501 + $0xe8] sm:$0xff] %v2560
                  %v2562 = vld [vmem:[%s2500 + $0xf0] sm:$0xff]
                  %2563 = vst [vmem:[%s2501 + $0xf0] sm:$0xff] %v2562
                  %v2564 = vld [vmem:[%s2500 + $0xf8] sm:$0xff]
                  %2565 = vst [vmem:[%s2501 + $0xf8] sm:$0xff] %v2564
                  %s2566 = sadd.s32 1, %s2499
                  %p2567 = scmp.ge.s32.totalorder %s2566, %s2492
                  %s2568 = scalar_select %p2567, 0, %s2566
                  %s2569 = smul.u32 %s2568, 256
                  %s2570 = smul.u32 %s2568, 256
                  %s2571 = scalar_lea.vmem %s2364, %s2569 [#allocation3]
                  %s2572 = scalar_lea.vmem %s2375, %s2570
                $region79: #{_ffn_pallas_impl.1} parent=73 // loop_footer
                  %s2496 = sadd.s32 %s2494, 1
                $region80: #{_ffn_pallas_impl.1} parent=73 // loop_footer_branch
                  %2493 = sbr.rel target = $region76
                $region81: #{_ffn_pallas_impl.1} parent=73 // loop_exit
                  _
                %s2573 = sshrl.u32 %s2371, 5
                %s2574 = sand.u32 %s2371, 31
                %s2575 = smul.u32 %s2573, 32
                %s2576 = smul.u32 8, %s2575
                %s2577 = scalar_lea.vmem %s2364, %s2576 [#allocation3]
                %s2578 = smul.u32 8, %s2575
                %s2579 = scalar_lea.vmem %s2375, %s2578
                // While loop
                $region82: #{_ffn_pallas_impl.1} parent=73 // loop_pre_header
                  _
                $region83: #{_ffn_pallas_impl.1} parent=73 // loop_header
                  %s2581 = sphi 0, %s2583
                  %p2582 = scmp.ge.s32.totalorder %s2581, %s2574
                  %s2586 = sphi 0, %s2593
                  %s2587 = sphi %s2577, %s2596
                  %s2588 = sphi %s2579, %s2597
                $region84: #{_ffn_pallas_impl.1} parent=73 // loop_header_branch
                  %2585 = sbr.rel (%p2582) target = $region88
                $region85: #{_ffn_pallas_impl.1} parent=73 // loop_body
                  %v2589 = vld [vmem:[%s2587] sm:$0xff]
                  %2590 = vst [vmem:[%s2588] sm:$0xff] %v2589
                  %s2591 = sadd.s32 1, %s2586
                  %p2592 = scmp.ge.s32.totalorder %s2591, %s2574
                  %s2593 = scalar_select %p2592, 0, %s2591
                  %s2594 = smul.u32 %s2593, 8
                  %s2595 = smul.u32 %s2593, 8
                  %s2596 = scalar_lea.vmem %s2577, %s2594 [#allocation3]
                  %s2597 = scalar_lea.vmem %s2579, %s2595
                $region86: #{_ffn_pallas_impl.1} parent=73 // loop_footer
                  %s2583 = sadd.s32 %s2581, 1
                $region87: #{_ffn_pallas_impl.1} parent=73 // loop_footer_branch
                  %2580 = sbr.rel target = $region83
                $region88: #{_ffn_pallas_impl.1} parent=73 // loop_exit
                  _
              $region74: #{_ffn_pallas_impl.1} parent=51 // pred_fallthru
                _
              // Predicated region
              $region89: #{_ffn_pallas_impl.1} parent=51 // pred_check
                _
              $region90: #{_ffn_pallas_impl.1} parent=51 // pred_check_branch
                %2599 = sbr.rel target = $region92
              $region91: #{_ffn_pallas_impl.1} parent=51 // pred_region
                _
              $region92: #{_ffn_pallas_impl.1} parent=51 // pred_fallthru
                _
            $region52: #{_ffn_pallas_impl.1} parent=47 // pred_fallthru
              _
            // Predicated region
            $region53: #{_ffn_pallas_impl.1} parent=47 // pred_check
              _
            $region54: #{_ffn_pallas_impl.1} parent=47 // pred_check_branch
              %2382 = sbr.rel target = $region56
            $region55: #{_ffn_pallas_impl.1} parent=47 // pred_region
              %s2384 = sshrl.u32 %s2371, 5
              // While loop
              $region57: #{_ffn_pallas_impl.1} parent=55 // loop_pre_header
                _
              $region58: #{_ffn_pallas_impl.1} parent=55 // loop_header
                %s2386 = sphi 0, %s2388
                %p2387 = scmp.ge.s32.totalorder %s2386, %s2384
                %s2391 = sphi 0, %s2460
                %s2392 = sphi %s2364, %s2463
                %s2393 = sphi %s2375, %s2464
              $region59: #{_ffn_pallas_impl.1} parent=55 // loop_header_branch
                %2390 = sbr.rel (%p2387) target = $region63
              $region60: #{_ffn_pallas_impl.1} parent=55 // loop_body
                %v2394 = vld [vmem:[%s2392] sm:$0xff]
                %2395 = vst [vmem:[%s2393] sm:$0xff] %v2394
                %v2396 = vld [vmem:[%s2392 + $0x8] sm:$0xff]
                %2397 = vst [vmem:[%s2393 + $0x8] sm:$0xff] %v2396
                %v2398 = vld [vmem:[%s2392 + $0x10] sm:$0xff]
                %2399 = vst [vmem:[%s2393 + $0x10] sm:$0xff] %v2398
                %v2400 = vld [vmem:[%s2392 + $0x18] sm:$0xff]
                %2401 = vst [vmem:[%s2393 + $0x18] sm:$0xff] %v2400
                %v2402 = vld [vmem:[%s2392 + $0x20] sm:$0xff]
                %2403 = vst [vmem:[%s2393 + $0x20] sm:$0xff] %v2402
                %v2404 = vld [vmem:[%s2392 + $0x28] sm:$0xff]
                %2405 = vst [vmem:[%s2393 + $0x28] sm:$0xff] %v2404
                %v2406 = vld [vmem:[%s2392 + $0x30] sm:$0xff]
                %2407 = vst [vmem:[%s2393 + $0x30] sm:$0xff] %v2406
                %v2408 = vld [vmem:[%s2392 + $0x38] sm:$0xff]
                %2409 = vst [vmem:[%s2393 + $0x38] sm:$0xff] %v2408
                %v2410 = vld [vmem:[%s2392 + $0x40] sm:$0xff]
                %2411 = vst [vmem:[%s2393 + $0x40] sm:$0xff] %v2410
                %v2412 = vld [vmem:[%s2392 + $0x48] sm:$0xff]
                %2413 = vst [vmem:[%s2393 + $0x48] sm:$0xff] %v2412
                %v2414 = vld [vmem:[%s2392 + $0x50] sm:$0xff]
                %2415 = vst [vmem:[%s2393 + $0x50] sm:$0xff] %v2414
                %v2416 = vld [vmem:[%s2392 + $0x58] sm:$0xff]
                %2417 = vst [vmem:[%s2393 + $0x58] sm:$0xff] %v2416
                %v2418 = vld [vmem:[%s2392 + $0x60] sm:$0xff]
                %2419 = vst [vmem:[%s2393 + $0x60] sm:$0xff] %v2418
                %v2420 = vld [vmem:[%s2392 + $0x68] sm:$0xff]
                %2421 = vst [vmem:[%s2393 + $0x68] sm:$0xff] %v2420
                %v2422 = vld [vmem:[%s2392 + $0x70] sm:$0xff]
                %2423 = vst [vmem:[%s2393 + $0x70] sm:$0xff] %v2422
                %v2424 = vld [vmem:[%s2392 + $0x78] sm:$0xff]
                %2425 = vst [vmem:[%s2393 + $0x78] sm:$0xff] %v2424
                %v2426 = vld [vmem:[%s2392 + $0x80] sm:$0xff]
                %2427 = vst [vmem:[%s2393 + $0x80] sm:$0xff] %v2426
                %v2428 = vld [vmem:[%s2392 + $0x88] sm:$0xff]
                %2429 = vst [vmem:[%s2393 + $0x88] sm:$0xff] %v2428
                %v2430 = vld [vmem:[%s2392 + $0x90] sm:$0xff]
                %2431 = vst [vmem:[%s2393 + $0x90] sm:$0xff] %v2430
                %v2432 = vld [vmem:[%s2392 + $0x98] sm:$0xff]
                %2433 = vst [vmem:[%s2393 + $0x98] sm:$0xff] %v2432
                %v2434 = vld [vmem:[%s2392 + $0xa0] sm:$0xff]
                %2435 = vst [vmem:[%s2393 + $0xa0] sm:$0xff] %v2434
                %v2436 = vld [vmem:[%s2392 + $0xa8] sm:$0xff]
                %2437 = vst [vmem:[%s2393 + $0xa8] sm:$0xff] %v2436
                %v2438 = vld [vmem:[%s2392 + $0xb0] sm:$0xff]
                %2439 = vst [vmem:[%s2393 + $0xb0] sm:$0xff] %v2438
                %v2440 = vld [vmem:[%s2392 + $0xb8] sm:$0xff]
                %2441 = vst [vmem:[%s2393 + $0xb8] sm:$0xff] %v2440
                %v2442 = vld [vmem:[%s2392 + $0xc0] sm:$0xff]
                %2443 = vst [vmem:[%s2393 + $0xc0] sm:$0xff] %v2442
                %v2444 = vld [vmem:[%s2392 + $0xc8] sm:$0xff]
                %2445 = vst [vmem:[%s2393 + $0xc8] sm:$0xff] %v2444
                %v2446 = vld [vmem:[%s2392 + $0xd0] sm:$0xff]
                %2447 = vst [vmem:[%s2393 + $0xd0] sm:$0xff] %v2446
                %v2448 = vld [vmem:[%s2392 + $0xd8] sm:$0xff]
                %2449 = vst [vmem:[%s2393 + $0xd8] sm:$0xff] %v2448
                %v2450 = vld [vmem:[%s2392 + $0xe0] sm:$0xff]
                %2451 = vst [vmem:[%s2393 + $0xe0] sm:$0xff] %v2450
                %v2452 = vld [vmem:[%s2392 + $0xe8] sm:$0xff]
                %2453 = vst [vmem:[%s2393 + $0xe8] sm:$0xff] %v2452
                %v2454 = vld [vmem:[%s2392 + $0xf0] sm:$0xff]
                %2455 = vst [vmem:[%s2393 + $0xf0] sm:$0xff] %v2454
                %v2456 = vld [vmem:[%s2392 + $0xf8] sm:$0xff]
                %2457 = vst [vmem:[%s2393 + $0xf8] sm:$0xff] %v2456
                %s2458 = sadd.s32 1, %s2391
                %p2459 = scmp.ge.s32.totalorder %s2458, %s2384
                %s2460 = scalar_select %p2459, 0, %s2458
                %s2461 = smul.u32 %s2460, 256
                %s2462 = smul.u32 %s2460, 256
                %s2463 = scalar_lea.vmem %s2364, %s2461 [#allocation3]
                %s2464 = scalar_lea.vmem %s2375, %s2462
              $region61: #{_ffn_pallas_impl.1} parent=55 // loop_footer
                %s2388 = sadd.s32 %s2386, 1
              $region62: #{_ffn_pallas_impl.1} parent=55 // loop_footer_branch
                %2385 = sbr.rel target = $region58
              $region63: #{_ffn_pallas_impl.1} parent=55 // loop_exit
                _
              %s2465 = sshrl.u32 %s2371, 5
              %s2466 = sand.u32 %s2371, 31
              %s2467 = smul.u32 %s2465, 32
              %s2468 = smul.u32 8, %s2467
              %s2469 = scalar_lea.vmem %s2364, %s2468 [#allocation3]
              %s2470 = smul.u32 8, %s2467
              %s2471 = scalar_lea.vmem %s2375, %s2470
              // While loop
              $region64: #{_ffn_pallas_impl.1} parent=55 // loop_pre_header
                _
              $region65: #{_ffn_pallas_impl.1} parent=55 // loop_header
                %s2473 = sphi 0, %s2475
                %p2474 = scmp.ge.s32.totalorder %s2473, %s2466
                %s2478 = sphi 0, %s2485
                %s2479 = sphi %s2469, %s2488
                %s2480 = sphi %s2471, %s2489
              $region66: #{_ffn_pallas_impl.1} parent=55 // loop_header_branch
                %2477 = sbr.rel (%p2474) target = $region70
              $region67: #{_ffn_pallas_impl.1} parent=55 // loop_body
                %v2481 = vld [vmem:[%s2479] sm:$0xff]
                %2482 = vst [vmem:[%s2480] sm:$0xff] %v2481
                %s2483 = sadd.s32 1, %s2478
                %p2484 = scmp.ge.s32.totalorder %s2483, %s2466
                %s2485 = scalar_select %p2484, 0, %s2483
                %s2486 = smul.u32 %s2485, 8
                %s2487 = smul.u32 %s2485, 8
                %s2488 = scalar_lea.vmem %s2469, %s2486 [#allocation3]
                %s2489 = scalar_lea.vmem %s2471, %s2487
              $region68: #{_ffn_pallas_impl.1} parent=55 // loop_footer
                %s2475 = sadd.s32 %s2473, 1
              $region69: #{_ffn_pallas_impl.1} parent=55 // loop_footer_branch
                %2472 = sbr.rel target = $region65
              $region70: #{_ffn_pallas_impl.1} parent=55 // loop_exit
                _
            $region56: #{_ffn_pallas_impl.1} parent=47 // pred_fallthru
              _
          $region48: #{_ffn_pallas_impl.1} parent=43 // pred_fallthru
            _
          %2600 = vnop
        $region44: #{_ffn_pallas_impl.1} parent=39 // pred_fallthru
          _
      $region40: #{_ffn_pallas_impl.1} parent=5 // pred_fallthru
        _
      %p2601 = scmp.le.s32.totalorder 2, %s11
      // Predicated region
      $region93: #{_ffn_pallas_impl.1} parent=5 // pred_check
        %p2602 = pneg %p2601
      $region94: #{_ffn_pallas_impl.1} parent=5 // pred_check_branch
        %2604 = sbr.rel (%p2602) target = $region96
      $region95: #{_ffn_pallas_impl.1} parent=5 // pred_region
        %s2605 = ssub.s32 %s11, 2
        // Predicated region
        $region97: #{_ffn_pallas_impl.1} parent=95 // pred_check
          %p2606 = pneg %p150
        $region98: #{_ffn_pallas_impl.1} parent=95 // pred_check_branch
          %2608 = sbr.rel (%p2606) target = $region100
        $region99: #{_ffn_pallas_impl.1} parent=95 // pred_region
          %s2609 = sand.u32 %s135, 1
          %s2610 = sand.u32 %s135, 1
          %s2611 = smul.addr %s2610, 256
          %s2612 = scalar_lea.vmem [#allocation3], %s2611
        $region100: #{_ffn_pallas_impl.1} parent=95 // pred_fallthru
          _
      $region96: #{_ffn_pallas_impl.1} parent=5 // pred_fallthru
        _
    $region6: #{_ffn_pallas_impl.1} parent=1 // loop_footer
      %s15 = sadd.s32 1, %s11
    $region7: #{_ffn_pallas_impl.1} parent=1 // loop_footer_branch
      %10 = sbr.rel target = $region3
    $region8: #{_ffn_pallas_impl.1} parent=1 // loop_exit
      _

// kernel: _ffn_pallas_impl.1
$region0: #{_ffn_pallas_impl.1}
  #allocation0 [shape = 'u32[]', space=smem, size = 0x4, offset = 0x4, fixed_abs, tag = 'smem constant byte address 0x4 - core index']
  #allocation1 [shape = 'u32[144,128]{1,0:T(1,128)}', space=vmem, size = 0x12000, scoped, tag = 'internal scratch']
  #allocation2 [shape = 'f32[256,128]{1,0:T(8,128)}', space=vmem, size = 0x20000, scoped, tag = 'scratch operand']
  %s0 = inlined_call_operand.vmem [shape: f32[394,128], index: 0, kind: input, shape index: {}]
  %s1 = inlined_call_operand.vmem [shape: f32[128,512], index: 1, kind: input, shape index: {}]
  %s2 = inlined_call_operand.vmem [shape: f32[1,512], index: 2, kind: input, shape index: {}]
  %s3 = inlined_call_operand.vmem [shape: f32[512,128], index: 3, kind: input, shape index: {}]
  %s4 = inlined_call_operand.vmem [shape: f32[1,128], index: 4, kind: input, shape index: {}]
  %s5 = inlined_call_operand.vmem [shape: f32[394,128], index: 5, kind: output, shape index: {}]
  %s6 = sld [smem:[#allocation0]]
  $region101: #{_ffn_pallas_impl.1} parent=0
    _
  %s8 = ssub.s32 1, %s6
  %s9 = scalar_select 0, %s8, %s6
  $region1: #{_ffn_pallas_impl.1} parent=0
    #allocation3 [shape = 'u8[262144]{0}', space=vmem, size = 0x40000, scoped, tag = 'output window, operand 0']
    loop: start=0, step=1, limit=4
    $region2: #{_ffn_pallas_impl.1} parent=1 // loop_pre_header
      _
    $region3: #{_ffn_pallas_impl.1} parent=1 // loop_header
      %s11 = sphi 0, %s15
      %p12 = scmp.ge.s32.totalorder %s11, 4
      %s21 = sphi 0, %s23
      %s24 = sphi 0, %s21
      %s25 = sphi 0, %s24
      %s41 = sphi 0, %s25
      %s45 = sphi 0, %s45
      %s47 = sphi 0, %s45
      %s48 = sphi 0, %s47
      %s62 = sphi 0, %s48
      %s66 = sphi 0, %s66
      %s68 = sphi 0, %s66
      %s69 = sphi 0, %s68
      %s83 = sphi 0, %s69
      %s87 = sphi 0, %s87
      %s89 = sphi 0, %s87
      %s90 = sphi 0, %s89
      %s104 = sphi 0, %s90
      %s108 = sphi 0, %s108
      %s110 = sphi 0, %s108
      %s111 = sphi 0, %s110
      %s125 = sphi 0, %s111
      %s131 = sphi 0, %s133
      %s134 = sphi 0, %s131
      %s135 = sphi 0, %s134
      %s151 = sphi 0, %s135
    $region4: #{_ffn_pallas_impl.1} parent=1 // loop_header_branch
      %14 = sbr.rel (%p12) target = $region8
    $region5: #{_ffn_pallas_impl.1} parent=1 // loop_body
      %s16 = ssub.s32 %s11, 1
      %s17 = ssub.s32 %s11, 2
      %s18 = sadd.s32 %s11, 1
      %s19 = ssub.s32 %s11, %s18
      %p20 = scmp.eq.s32.totalorder %s19, 0
      %s22 = sadd.s32 %s21, 1
      %s23 = scalar_select %p20, %s21, %s22
      %p26 = pneg %p20
      %p27 = scmp.eq.s32.totalorder %s11, 1
      %p28 = por %p26, %p27
      %p29 = scmp.ne.s32.totalorder %s21, %s24
      %p30 = scmp.eq.s32.totalorder %s11, 0
      %p31 = por %p29, %p30
      %p32 = scmp.ne.s32.totalorder %s21, %s24
      %p33 = scmp.eq.s32.totalorder %s16, 1
      %p34 = por %p32, %p33
      %p35 = scmp.ne.s32.totalorder %s24, %s25
      %p36 = scmp.eq.s32.totalorder %s16, 0
      %p37 = por %p35, %p36
      %p38 = scmp.ne.s32.totalorder %s24, %s25
      %p39 = scmp.eq.s32.totalorder %s17, 1
      %p40 = por %p38, %p39
      %p42 = scmp.ne.s32.totalorder %s25, %s41
      %p43 = scmp.eq.s32.totalorder %s17, 0
      %p44 = por %p42, %p43
      %s46 = sadd.s32 %s45, 1
      %p49 = scmp.eq.s32.totalorder %s11, 1
      %p50 = scmp.ne.s32.totalorder %s45, %s47
      %p51 = scmp.eq.s32.totalorder %s11, 0
      %p52 = por %p50, %p51
      %p53 = scmp.ne.s32.totalorder %s45, %s47
      %p54 = scmp.eq.s32.totalorder %s16, 1
      %p55 = por %p53, %p54
      %p56 = scmp.ne.s32.totalorder %s47, %s48
      %p57 = scmp.eq.s32.totalorder %s16, 0
      %p58 = por %p56, %p57
      %p59 = scmp.ne.s32.totalorder %s47, %s48
      %p60 = scmp.eq.s32.totalorder %s17, 1
      %p61 = por %p59, %p60
      %p63 = scmp.ne.s32.totalorder %s48, %s62
      %p64 = scmp.eq.s32.totalorder %s17, 0
      %p65 = por %p63, %p64
      %s67 = sadd.s32 %s66, 1
      %p70 = scmp.eq.s32.totalorder %s11, 1
      %p71 = scmp.ne.s32.totalorder %s66, %s68
      %p72 = scmp.eq.s32.totalorder %s11, 0
      %p73 = por %p71, %p72
      %p74 = scmp.ne.s32.totalorder %s66, %s68
      %p75 = scmp.eq.s32.totalorder %s16, 1
      %p76 = por %p74, %p75
      %p77 = scmp.ne.s32.totalorder %s68, %s69
      %p78 = scmp.eq.s32.totalorder %s16, 0
      %p79 = por %p77, %p78
      %p80 = scmp.ne.s32.totalorder %s68, %s69
      %p81 = scmp.eq.s32.totalorder %s17, 1
      %p82 = por %p80, %p81
      %p84 = scmp.ne.s32.totalorder %s69, %s83
      %p85 = scmp.eq.s32.totalorder %s17, 0
      %p86 = por %p84, %p85
      %s88 = sadd.s32 %s87, 1
      %p91 = scmp.eq.s32.totalorder %s11, 1
      %p92 = scmp.ne.s32.totalorder %s87, %s89
      %p93 = scmp.eq.s32.totalorder %s11, 0
      %p94 = por %p92, %p93
      %p95 = scmp.ne.s32.totalorder %s87, %s89
      %p96 = scmp.eq.s32.totalorder %s16, 1
      %p97 = por %p95, %p96
      %p98 = scmp.ne.s32.totalorder %s89, %s90
      %p99 = scmp.eq.s32.totalorder %s16, 0
      %p100 = por %p98, %p99
      %p101 = scmp.ne.s32.totalorder %s89, %s90
      %p102 = scmp.eq.s32.totalorder %s17, 1
      %p103 = por %p101, %p102
      %p105 = scmp.ne.s32.totalorder %s90, %s104
      %p106 = scmp.eq.s32.totalorder %s17, 0
      %p107 = por %p105, %p106
      %s109 = sadd.s32 %s108, 1
      %p112 = scmp.eq.s32.totalorder %s11, 1
      %p113 = scmp.ne.s32.totalorder %s108, %s110
      %p114 = scmp.eq.s32.totalorder %s11, 0
      %p115 = por %p113, %p114
      %p116 = scmp.ne.s32.totalorder %s108, %s110
      %p117 = scmp.eq.s32.totalorder %s16, 1
      %p118 = por %p116, %p117
      %p119 = scmp.ne.s32.totalorder %s110, %s111
      %p120 = scmp.eq.s32.totalorder %s16, 0
      %p121 = por %p119, %p120
      %p122 = scmp.ne.s32.totalorder %s110, %s111
      %p123 = scmp.eq.s32.totalorder %s17, 1
      %p124 = por %p122, %p123
      %p126 = scmp.ne.s32.totalorder %s111, %s125
      %p127 = scmp.eq.s32.totalorder %s17, 0
      %p128 = por %p126, %p127
      %s129 = ssub.s32 %s11, %s18
      %p130 = scmp.eq.s32.totalorder %s129, 0
      %s132 = sadd.s32 %s131, 1
      %s133 = scalar_select %p130, %s131, %s132
      %p136 = pneg %p130
      %p137 = scmp.eq.s32.totalorder %s11, 1
      %p138 = por %p136, %p137
      %p139 = scmp.ne.s32.totalorder %s131, %s134
      %p140 = scmp.eq.s32.totalorder %s11, 0
      %p141 = por %p139, %p140
      %p142 = scmp.ne.s32.totalorder %s131, %s134
      %p143 = scmp.eq.s32.totalorder %s16, 1
      %p144 = por %p142, %p143
      %p145 = scmp.ne.s32.totalorder %s134, %s135
      %p146 = scmp.eq.s32.totalorder %s16, 0
      %p147 = por %p145, %p146
      %p148 = scmp.ne.s32.totalorder %s134, %s135
      %p149 = scmp.eq.s32.totalorder %s17, 1
      %p150 = por %p148, %p149
      %p152 = scmp.ne.s32.totalorder %s135, %s151
      %p153 = scmp.eq.s32.totalorder %s17, 0
      %p154 = por %p152, %p153
      %p155 = scmp.le.s32.totalorder 1, %s11
      %p156 = scmp.lt.s32.totalorder %s11, 3
      %p157 = pnand %p155, %p156
      %p158 = pneg %p157
      // Predicated region
      $region9: #{_ffn_pallas_impl.1} parent=5 // pred_check
        _
      $region10: #{_ffn_pallas_impl.1} parent=5 // pred_check_branch
        %160 = sbr.rel (%p157) target = $region12
      $region11: #{_ffn_pallas_impl.1} parent=5 // pred_region
        %s161 = ssub.s32 %s11, 1
        // Predicated region
        $region13: #{_ffn_pallas_impl.1} parent=11 // pred_check
          %p162 = pneg %p58
        $region14: #{_ffn_pallas_impl.1} parent=11 // pred_check_branch
          %164 = sbr.rel (%p162) target = $region16
        $region15: #{_ffn_pallas_impl.1} parent=11 // pred_region
          _
        $region16: #{_ffn_pallas_impl.1} parent=11 // pred_fallthru
          _
        // Predicated region
        $region17: #{_ffn_pallas_impl.1} parent=11 // pred_check
          %p165 = pneg %p79
        $region18: #{_ffn_pallas_impl.1} parent=11 // pred_check_branch
          %167 = sbr.rel (%p165) target = $region20
        $region19: #{_ffn_pallas_impl.1} parent=11 // pred_region
          _
        $region20: #{_ffn_pallas_impl.1} parent=11 // pred_fallthru
          _
        // Predicated region
        $region21: #{_ffn_pallas_impl.1} parent=11 // pred_check
          %p168 = pneg %p100
        $region22: #{_ffn_pallas_impl.1} parent=11 // pred_check_branch
          %170 = sbr.rel (%p168) target = $region24
        $region23: #{_ffn_pallas_impl.1} parent=11 // pred_region
          _
        $region24: #{_ffn_pallas_impl.1} parent=11 // pred_fallthru
          _
        // Predicated region
        $region25: #{_ffn_pallas_impl.1} parent=11 // pred_check
          %p171 = pneg %p121
        $region26: #{_ffn_pallas_impl.1} parent=11 // pred_check_branch
          %173 = sbr.rel (%p171) target = $region28
        $region27: #{_ffn_pallas_impl.1} parent=11 // pred_region
          _
        $region28: #{_ffn_pallas_impl.1} parent=11 // pred_fallthru
          _
      $region12: #{_ffn_pallas_impl.1} parent=5 // pred_fallthru
        _
      %p174 = scmp.lt.s32.totalorder %s11, 2
      // Predicated region
      $region29: #{_ffn_pallas_impl.1} parent=5 // pred_check
        %p175 = pneg %p174
      $region30: #{_ffn_pallas_impl.1} parent=5 // pred_check_branch
        %177 = sbr.rel (%p175) target = $region32
      $region31: #{_ffn_pallas_impl.1} parent=5 // pred_region
        // Predicated region
        $region33: #{_ffn_pallas_impl.1} parent=31 // pred_check
          %p178 = pneg %p31
        $region34: #{_ffn_pallas_impl.1} parent=31 // pred_check_branch
          %180 = sbr.rel (%p178) target = $region36
        $region35: #{_ffn_pallas_impl.1} parent=31 // pred_region
          %s181 = smul.u32 32, %s11
          %s182 = ssub.s32 50, %s181
          %p183 = scmp.lt.s32.totalorder %s182, 32
          %s184 = scalar_select %p183, %s182, 32
          %s185 = smul.u32 128, %s184
          %p186 = scmp.lt.s32.totalorder %s181, 49
          %s187 = scalar_select %p186, %s181, 49
          %s188 = smul.addr %s187, 8
          %s189 = scalar_lea.vmem %s0, %s188
          %s190 = smul.u32 32, %s11
          %s191 = ssub.s32 50, %s190
          %p192 = scmp.lt.s32.totalorder %s191, 32
          %s193 = scalar_select %p192, %s191, 32
          %s194 = smul.u32 128, %s193
        $region36: #{_ffn_pallas_impl.1} parent=31 // pred_fallthru
          _
      $region32: #{_ffn_pallas_impl.1} parent=5 // pred_fallthru
        _
      %p195 = scmp.le.s32.totalorder 1, %s11
      %p196 = scmp.lt.s32.totalorder %s11, 3
      %p197 = pnand %p195, %p196
      %p198 = pneg %p197
      // Predicated region
      $region37: #{_ffn_pallas_impl.1} parent=5 // pred_check
        _
      $region38: #{_ffn_pallas_impl.1} parent=5 // pred_check_branch
        %200 = sbr.rel (%p197) target = $region40
      $region39: #{_ffn_pallas_impl.1} parent=5 // pred_region
        %s201 = ssub.s32 %s11, 1
        %s202 = smul.u32 32, %s16
        %s203 = ssub.s32 50, %s202
        %p204 = scmp.lt.s32.totalorder %s203, 32
        %s205 = scalar_select %p204, %s203, 32
        %s206 = smul.u32 128, %s205
        %p207 = scmp.lt.s32.totalorder %s202, 49
        %s208 = scalar_select %p207, %s202, 49
        %s209 = smul.addr %s208, 8
        %s210 = scalar_lea.vmem %s0, %s209
        %p211 = pneg %p37
        %p212 = pneg %p34
        %p213 = pneg %p58
        %p214 = pneg %p55
        %p215 = pneg %p79
        %p216 = pneg %p76
        %p217 = pneg %p100
        %p218 = pneg %p97
        %p219 = pneg %p121
        %p220 = pneg %p118
        %p221 = pneg %p147
        %p222 = pneg %p144
        %s223 = sand.u32 %s134, 1
        %s224 = sand.u32 %s134, 1
        %s225 = smul.addr %s224, 256
        %s226 = scalar_lea.vmem [#allocation3], %s225
        %s227 = smul.u32 32, %s16
        %s228 = ssub.s32 50, %s227
        %p229 = scmp.lt.s32.totalorder %s228, 32
        %s230 = scalar_select %p229, %s228, 32
        %s231 = smul.u32 128, %s230
        %p232 = scmp.lt.s32.totalorder %s227, 49
        %s233 = scalar_select %p232, %s227, 49
        %s234 = smul.addr %s233, 8
        %s235 = scalar_lea.vmem %s0, %s234
        %s236 = smul.u32 32, %s16
        %s237 = ssub.s32 50, %s236
        %p238 = scmp.lt.s32.totalorder %s237, 32
        %s239 = scalar_select %p238, %s237, 32
        %s240 = smul.u32 128, %s239
        %s241 = smul.u32 32, %s16
        %s242 = ssub.s32 50, %s241
        %p243 = scmp.lt.s32.totalorder %s242, 32
        %s244 = scalar_select %p243, %s242, 32
        %s245 = smul.u32 128, %s244
        %v246 = vld [vmem:[%s235] sm:$0xff]
        %v247 = vld [vmem:[%s235 + $0x8] sm:$0xff]
        %v248 = vld [vmem:[%s235 + $0x10] sm:$0xff]
        %v249 = vld [vmem:[%s235 + $0x18] sm:$0xff]
        %v250 = vld [vmem:[%s235 + $0x20] sm:$0xff]
        %v251 = vld [vmem:[%s235 + $0x28] sm:$0xff]
        %v252 = vld [vmem:[%s235 + $0x30] sm:$0xff]
        %v253 = vld [vmem:[%s235 + $0x38] sm:$0xff]
        %v254 = vld [vmem:[%s235 + $0x40] sm:$0xff]
        %v255 = vld [vmem:[%s235 + $0x48] sm:$0xff]
        %v256 = vld [vmem:[%s235 + $0x50] sm:$0xff]
        %v257 = vld [vmem:[%s235 + $0x58] sm:$0xff]
        %v258 = vld [vmem:[%s235 + $0x60] sm:$0xff]
        %v259 = vld [vmem:[%s235 + $0x68] sm:$0xff]
        %v260 = vld [vmem:[%s235 + $0x70] sm:$0xff]
        %v261 = vld [vmem:[%s235 + $0x78] sm:$0xff]
        %v262 = vld [vmem:[%s235 + $0x80] sm:$0xff]
        %v263 = vld [vmem:[%s235 + $0x88] sm:$0xff]
        %v264 = vld [vmem:[%s235 + $0x90] sm:$0xff]
        %v265 = vld [vmem:[%s235 + $0x98] sm:$0xff]
        %v266 = vld [vmem:[%s235 + $0xa0] sm:$0xff]
        %v267 = vld [vmem:[%s235 + $0xa8] sm:$0xff]
        %v268 = vld [vmem:[%s235 + $0xb0] sm:$0xff]
        %v269 = vld [vmem:[%s235 + $0xb8] sm:$0xff]
        %v270 = vld [vmem:[%s235 + $0xc0] sm:$0xff]
        %v271 = vld [vmem:[%s235 + $0xc8] sm:$0xff]
        %v272 = vld [vmem:[%s235 + $0xd0] sm:$0xff]
        %v273 = vld [vmem:[%s235 + $0xd8] sm:$0xff]
        %v274 = vld [vmem:[%s235 + $0xe0] sm:$0xff]
        %v275 = vld [vmem:[%s235 + $0xe8] sm:$0xff]
        %v276 = vld [vmem:[%s235 + $0xf0] sm:$0xff]
        %v277 = vld [vmem:[%s235 + $0xf8] sm:$0xff]
        %278 = vst [vmem:[#allocation2] sm:$0xff] 0.0
        %279 = vst [vmem:[#allocation2 + $0x8] sm:$0xff] 0.0
        %280 = vst [vmem:[#allocation2 + $0x10] sm:$0xff] 0.0
        %281 = vst [vmem:[#allocation2 + $0x18] sm:$0xff] 0.0
        %282 = vst [vmem:[#allocation2 + $0x20] sm:$0xff] 0.0
        %283 = vst [vmem:[#allocation2 + $0x28] sm:$0xff] 0.0
        %284 = vst [vmem:[#allocation2 + $0x30] sm:$0xff] 0.0
        %285 = vst [vmem:[#allocation2 + $0x38] sm:$0xff] 0.0
        %286 = vst [vmem:[#allocation2 + $0x40] sm:$0xff] 0.0
        %287 = vst [vmem:[#allocation2 + $0x48] sm:$0xff] 0.0
        %288 = vst [vmem:[#allocation2 + $0x50] sm:$0xff] 0.0
        %289 = vst [vmem:[#allocation2 + $0x58] sm:$0xff] 0.0
        %290 = vst [vmem:[#allocation2 + $0x60] sm:$0xff] 0.0
        %291 = vst [vmem:[#allocation2 + $0x68] sm:$0xff] 0.0
        %292 = vst [vmem:[#allocation2 + $0x70] sm:$0xff] 0.0
        %293 = vst [vmem:[#allocation2 + $0x78] sm:$0xff] 0.0
        %294 = vst [vmem:[#allocation2 + $0x80] sm:$0xff] 0.0
        %295 = vst [vmem:[#allocation2 + $0x88] sm:$0xff] 0.0
        %296 = vst [vmem:[#allocation2 + $0x90] sm:$0xff] 0.0
        %297 = vst [vmem:[#allocation2 + $0x98] sm:$0xff] 0.0
        %298 = vst [vmem:[#allocation2 + $0xa0] sm:$0xff] 0.0
        %299 = vst [vmem:[#allocation2 + $0xa8] sm:$0xff] 0.0
        %300 = vst [vmem:[#allocation2 + $0xb0] sm:$0xff] 0.0
        %301 = vst [vmem:[#allocation2 + $0xb8] sm:$0xff] 0.0
        %302 = vst [vmem:[#allocation2 + $0xc0] sm:$0xff] 0.0
        %303 = vst [vmem:[#allocation2 + $0xc8] sm:$0xff] 0.0
        %304 = vst [vmem:[#allocation2 + $0xd0] sm:$0xff] 0.0
        %305 = vst [vmem:[#allocation2 + $0xd8] sm:$0xff] 0.0
        %306 = vst [vmem:[#allocation2 + $0xe0] sm:$0xff] 0.0
        %307 = vst [vmem:[#allocation2 + $0xe8] sm:$0xff] 0.0
        %308 = vst [vmem:[#allocation2 + $0xf0] sm:$0xff] 0.0
        %309 = vst [vmem:[#allocation2 + $0xf8] sm:$0xff] 0.0
        %v310 = vld [vmem:[%s1] sm:$0xff]
        %v311 = vld [vmem:[%s1 + $0x8] sm:$0xff]
        %v312 = vld [vmem:[%s1 + $0x20] sm:$0xff]
        %v313 = vld [vmem:[%s1 + $0x28] sm:$0xff]
        %v314 = vld [vmem:[%s1 + $0x40] sm:$0xff]
        %v315 = vld [vmem:[%s1 + $0x48] sm:$0xff]
        %v316 = vld [vmem:[%s1 + $0x60] sm:$0xff]
        %v317 = vld [vmem:[%s1 + $0x68] sm:$0xff]
        %v318 = vld [vmem:[%s1 + $0x80] sm:$0xff]
        %v319 = vld [vmem:[%s1 + $0x88] sm:$0xff]
        %v320 = vld [vmem:[%s1 + $0xa0] sm:$0xff]
        %v321 = vld [vmem:[%s1 + $0xa8] sm:$0xff]
        %v322 = vld [vmem:[%s1 + $0xc0] sm:$0xff]
        %v323 = vld [vmem:[%s1 + $0xc8] sm:$0xff]
        %v324 = vld [vmem:[%s1 + $0xe0] sm:$0xff]
        %v325 = vld [vmem:[%s1 + $0xe8] sm:$0xff]
        %v326 = vld [vmem:[%s1 + $0x100] sm:$0xff]
        %v327 = vld [vmem:[%s1 + $0x108] sm:$0xff]
        %v328 = vld [vmem:[%s1 + $0x120] sm:$0xff]
        %v329 = vld [vmem:[%s1 + $0x128] sm:$0xff]
        %v330 = vld [vmem:[%s1 + $0x140] sm:$0xff]
        %v331 = vld [vmem:[%s1 + $0x148] sm:$0xff]
        %v332 = vld [vmem:[%s1 + $0x160] sm:$0xff]
        %v333 = vld [vmem:[%s1 + $0x168] sm:$0xff]
        %v334 = vld [vmem:[%s1 + $0x180] sm:$0xff]
        %v335 = vld [vmem:[%s1 + $0x188] sm:$0xff]
        %v336 = vld [vmem:[%s1 + $0x1a0] sm:$0xff]
        %v337 = vld [vmem:[%s1 + $0x1a8] sm:$0xff]
        %v338 = vld [vmem:[%s1 + $0x1c0] sm:$0xff]
        %v339 = vld [vmem:[%s1 + $0x1c8] sm:$0xff]
        %v340 = vld [vmem:[%s1 + $0x1e0] sm:$0xff]
        %v341 = vld [vmem:[%s1 + $0x1e8] sm:$0xff]
        %v342 = vld [vmem:[%s2] sm:$0x3]
        %v344 = vlaneseq
        %v345 = vshrl.u32 %v344, 7
        %v346 = vsub.s32 0, %v345
        %v347 = vrot.slane %v342, %v346
        %v348 = vlaneseq
        %v349 = vshrl.u32 %v348, 7
        %v350 = vsub.s32 1, %v349
        %v351 = vrot.slane %v342, %v350
        %354 = vmatprep.subr.mxu0 %v311
        %355 = vmatpush1.msra.mxu0 %v310
        %356 = vmatprep.subr.mxu0 %v313
        %357 = vmatpush1.msra.mxu0 %v312
        %358 = vmatprep.subr.mxu0 %v315
        %359 = vmatpush1.msra.mxu0 %v314
        %360 = vmatprep.subr.mxu0 %v317
        %361 = vmatpush1.msra.mxu0 %v316
        %362 = vmatprep.subr.mxu0 %v319
        %363 = vmatpush1.msra.mxu0 %v318
        %364 = vmatprep.subr.mxu0 %v321
        %365 = vmatpush1.msra.mxu0 %v320
        %366 = vmatprep.subr.mxu0 %v323
        %367 = vmatpush1.msra.mxu0 %v322
        %368 = vmatprep.subr.mxu0 %v325
        %369 = vmatpush1.msra.mxu0 %v324
        %370 = vmatprep.subr.mxu0 %v327
        %371 = vmatpush1.msra.mxu0 %v326
        %372 = vmatprep.subr.mxu0 %v329
        %373 = vmatpush1.msra.mxu0 %v328
        %374 = vmatprep.subr.mxu0 %v331
        %375 = vmatpush1.msra.mxu0 %v330
        %376 = vmatprep.subr.mxu0 %v333
        %377 = vmatpush1.msra.mxu0 %v332
        %378 = vmatprep.subr.mxu0 %v335
        %379 = vmatpush1.msra.mxu0 %v334
        %380 = vmatprep.subr.mxu0 %v337
        %381 = vmatpush1.msra.mxu0 %v336
        %382 = vmatprep.subr.mxu0 %v339
        %383 = vmatpush1.msra.mxu0 %v338
        %384 = vmatprep.subr.mxu0 %v341
        %385 = vmatpush1.msra.mxu0 %v340
        %386 = vmatprep.subr.mxu0 0.0
        %387 = vmatpush1.msra.mxu0 0.0
        %388 = vmatprep.subr.mxu0 0.0
        %389 = vmatpush1.msra.mxu0 0.0
        %390 = vmatprep.subr.mxu0 0.0
        %391 = vmatpush1.msra.mxu0 0.0
        %392 = vmatprep.subr.mxu0 0.0
        %393 = vmatpush1.msra.mxu0 0.0
        %394 = vmatprep.subr.mxu0 0.0
        %395 = vmatpush1.msra.mxu0 0.0
        %396 = vmatprep.subr.mxu0 0.0
        %397 = vmatpush1.msra.mxu0 0.0
        %398 = vmatprep.subr.mxu0 0.0
        %399 = vmatpush1.msra.mxu0 0.0
        %400 = vmatprep.subr.mxu0 0.0
        %401 = vmatpush1.msra.mxu0 0.0
        %402 = vmatprep.subr.mxu0 0.0
        %403 = vmatpush1.msra.mxu0 0.0
        %404 = vmatprep.subr.mxu0 0.0
        %405 = vmatpush1.msra.mxu0 0.0
        %406 = vmatprep.subr.mxu0 0.0
        %407 = vmatpush1.msra.mxu0 0.0
        %408 = vmatprep.subr.mxu0 0.0
        %409 = vmatpush1.msra.mxu0 0.0
        %410 = vmatprep.subr.mxu0 0.0
        %411 = vmatpush1.msra.mxu0 0.0
        %412 = vmatprep.subr.mxu0 0.0
        %413 = vmatpush1.msra.mxu0 0.0
        %414 = vmatprep.subr.mxu0 0.0
        %415 = vmatpush1.msra.mxu0 0.0
        %416 = vmatprep.subr.mxu0 0.0
        %417 = vmatpush1.msra.mxu0 0.0
        %418 = vmatprep.mubr.f32.mxu0 0.0
        %419 = vmatmul.mubr.f32.gmra.mrb[0].mxu0 %v246
        %v420 = vpop.f32.mrb[0].mxu0
        %v421 = vadd.f32 %v347, %v420
        %v422 = vpop.f32.mrb[0].mxu0
        %v423 = vadd.f32 %v351, %v422
        %424 = vmatprep.mubr.f32.mxu0 0.0
        %425 = vmatmul.mubr.f32.gmra.mrb[0].mxu0 %v247
        %v426 = vpop.f32.mrb[0].mxu0
        %v427 = vadd.f32 %v347, %v426
        %v428 = vpop.f32.mrb[0].mxu0
        %v429 = vadd.f32 %v351, %v428
        %430 = vmatprep.mubr.f32.mxu0 0.0
        %431 = vmatmul.mubr.f32.gmra.mrb[0].mxu0 %v248
        %v432 = vpop.f32.mrb[0].mxu0
        %v433 = vadd.f32 %v347, %v432
        %v434 = vpop.f32.mrb[0].mxu0
        %v435 = vadd.f32 %v351, %v434
        %436 = vmatprep.mubr.f32.mxu0 0.0
        %437 = vmatmul.mubr.f32.gmra.mrb[0].mxu0 %v249
        %v438 = vpop.f32.mrb[0].mxu0
        %v439 = vadd.f32 %v347, %v438
        %v440 = vpop.f32.mrb[0].mxu0
        %v441 = vadd.f32 %v351, %v440
        %442 = vmatprep.mubr.f32.mxu0 0.0
        %443 = vmatmul.mubr.f32.gmra.mrb[0].mxu0 %v250
        %v444 = vpop.f32.mrb[0].mxu0
        %v445 = vadd.f32 %v347, %v444
        %v446 = vpop.f32.mrb[0].mxu0
        %v447 = vadd.f32 %v351, %v446
        %448 = vmatprep.mubr.f32.mxu0 0.0
        %449 = vmatmul.mubr.f32.gmra.mrb[0].mxu0 %v251
        %v450 = vpop.f32.mrb[0].mxu0
        %v451 = vadd.f32 %v347, %v450
        %v452 = vpop.f32.mrb[0].mxu0
        %v453 = vadd.f32 %v351, %v452
        %454 = vmatprep.mubr.f32.mxu0 0.0
        %455 = vmatmul.mubr.f32.gmra.mrb[0].mxu0 %v252
        %v456 = vpop.f32.mrb[0].mxu0
        %v457 = vadd.f32 %v347, %v456
        %v458 = vpop.f32.mrb[0].mxu0
        %v459 = vadd.f32 %v351, %v458
        %460 = vmatprep.mubr.f32.mxu0 0.0
        %461 = vmatmul.mubr.f32.gmra.mrb[0].mxu0 %v253
        %v462 = vpop.f32.mrb[0].mxu0
        %v463 = vadd.f32 %v347, %v462
        %v464 = vpop.f32.mrb[0].mxu0
        %v465 = vadd.f32 %v351, %v464
        %466 = vmatprep.mubr.f32.mxu0 0.0
        %467 = vmatmul.mubr.f32.gmra.mrb[0].mxu0 %v254
        %v468 = vpop.f32.mrb[0].mxu0
        %v469 = vadd.f32 %v347, %v468
        %v470 = vpop.f32.mrb[0].mxu0
        %v471 = vadd.f32 %v351, %v470
        %472 = vmatprep.mubr.f32.mxu0 0.0
        %473 = vmatmul.mubr.f32.gmra.mrb[0].mxu0 %v255
        %v474 = vpop.f32.mrb[0].mxu0
        %v475 = vadd.f32 %v347, %v474
        %v476 = vpop.f32.mrb[0].mxu0
        %v477 = vadd.f32 %v351, %v476
        %478 = vmatprep.mubr.f32.mxu0 0.0
        %479 = vmatmul.mubr.f32.gmra.mrb[0].mxu0 %v256
        %v480 = vpop.f32.mrb[0].mxu0
        %v481 = vadd.f32 %v347, %v480
        %v482 = vpop.f32.mrb[0].mxu0
        %v483 = vadd.f32 %v351, %v482
        %484 = vmatprep.mubr.f32.mxu0 0.0
        %485 = vmatmul.mubr.f32.gmra.mrb[0].mxu0 %v257
        %v486 = vpop.f32.mrb[0].mxu0
        %v487 = vadd.f32 %v347, %v486
        %v488 = vpop.f32.mrb[0].mxu0
        %v489 = vadd.f32 %v351, %v488
        %490 = vmatprep.mubr.f32.mxu0 0.0
        %491 = vmatmul.mubr.f32.gmra.mrb[0].mxu0 %v258
        %v492 = vpop.f32.mrb[0].mxu0
        %v493 = vadd.f32 %v347, %v492
        %v494 = vpop.f32.mrb[0].mxu0
        %v495 = vadd.f32 %v351, %v494
        %496 = vmatprep.mubr.f32.mxu0 0.0
        %497 = vmatmul.mubr.f32.gmra.mrb[0].mxu0 %v259
        %v498 = vpop.f32.mrb[0].mxu0
        %v499 = vadd.f32 %v347, %v498
        %v500 = vpop.f32.mrb[0].mxu0
        %v501 = vadd.f32 %v351, %v500
        %502 = vmatprep.mubr.f32.mxu0 0.0
        %503 = vmatmul.mubr.f32.gmra.mrb[0].mxu0 %v260
        %v504 = vpop.f32.mrb[0].mxu0
        %v505 = vadd.f32 %v347, %v504
        %v506 = vpop.f32.mrb[0].mxu0
        %v507 = vadd.f32 %v351, %v506
        %508 = vmatprep.mubr.f32.mxu0 0.0
        %509 = vmatmul.mubr.f32.gmra.mrb[0].mxu0 %v261
        %v510 = vpop.f32.mrb[0].mxu0
        %v511 = vadd.f32 %v347, %v510
        %v512 = vpop.f32.mrb[0].mxu0
        %v513 = vadd.f32 %v351, %v512
        %514 = vmatprep.mubr.f32.mxu0 0.0
        %515 = vmatmul.mubr.f32.gmra.mrb[0].mxu0 %v262
        %v516 = vpop.f32.mrb[0].mxu0
        %v517 = vadd.f32 %v347, %v516
        %v518 = vpop.f32.mrb[0].mxu0
        %v519 = vadd.f32 %v351, %v518
        %520 = vmatprep.mubr.f32.mxu0 0.0
        %521 = vmatmul.mubr.f32.gmra.mrb[0].mxu0 %v263
        %v522 = vpop.f32.mrb[0].mxu0
        %v523 = vadd.f32 %v347, %v522
        %v524 = vpop.f32.mrb[0].mxu0
        %v525 = vadd.f32 %v351, %v524
        %526 = vmatprep.mubr.f32.mxu0 0.0
        %527 = vmatmul.mubr.f32.gmra.mrb[0].mxu0 %v264
        %v528 = vpop.f32.mrb[0].mxu0
        %v529 = vadd.f32 %v347, %v528
        %v530 = vpop.f32.mrb[0].mxu0
        %v531 = vadd.f32 %v351, %v530
        %532 = vmatprep.mubr.f32.mxu0 0.0
        %533 = vmatmul.mubr.f32.gmra.mrb[0].mxu0 %v265
        %v534 = vpop.f32.mrb[0].mxu0
        %v535 = vadd.f32 %v347, %v534
        %v536 = vpop.f32.mrb[0].mxu0
        %v537 = vadd.f32 %v351, %v536
        %538 = vmatprep.mubr.f32.mxu0 0.0
        %539 = vmatmul.mubr.f32.gmra.mrb[0].mxu0 %v266
        %v540 = vpop.f32.mrb[0].mxu0
        %v541 = vadd.f32 %v347, %v540
        %v542 = vpop.f32.mrb[0].mxu0
        %v543 = vadd.f32 %v351, %v542
        %544 = vmatprep.mubr.f32.mxu0 0.0
        %545 = vmatmul.mubr.f32.gmra.mrb[0].mxu0 %v267
        %v546 = vpop.f32.mrb[0].mxu0
        %v547 = vadd.f32 %v347, %v546
        %v548 = vpop.f32.mrb[0].mxu0
        %v549 = vadd.f32 %v351, %v548
        %550 = vmatprep.mubr.f32.mxu0 0.0
        %551 = vmatmul.mubr.f32.gmra.mrb[0].mxu0 %v268
        %v552 = vpop.f32.mrb[0].mxu0
        %v553 = vadd.f32 %v347, %v552
        %v554 = vpop.f32.mrb[0].mxu0
        %v555 = vadd.f32 %v351, %v554
        %556 = vmatprep.mubr.f32.mxu0 0.0
        %557 = vmatmul.mubr.f32.gmra.mrb[0].mxu0 %v269
        %v558 = vpop.f32.mrb[0].mxu0
        %v559 = vadd.f32 %v347, %v558
        %v560 = vpop.f32.mrb[0].mxu0
        %v561 = vadd.f32 %v351, %v560
        %562 = vmatprep.mubr.f32.mxu0 0.0
        %563 = vmatmul.mubr.f32.gmra.mrb[0].mxu0 %v270
        %v564 = vpop.f32.mrb[0].mxu0
        %v565 = vadd.f32 %v347, %v564
        %v566 = vpop.f32.mrb[0].mxu0
        %v567 = vadd.f32 %v351, %v566
        %568 = vmatprep.mubr.f32.mxu0 0.0
        %569 = vmatmul.mubr.f32.gmra.mrb[0].mxu0 %v271
        %v570 = vpop.f32.mrb[0].mxu0
        %v571 = vadd.f32 %v347, %v570
        %v572 = vpop.f32.mrb[0].mxu0
        %v573 = vadd.f32 %v351, %v572
        %574 = vmatprep.mubr.f32.mxu0 0.0
        %575 = vmatmul.mubr.f32.gmra.mrb[0].mxu0 %v272
        %v576 = vpop.f32.mrb[0].mxu0
        %v577 = vadd.f32 %v347, %v576
        %v578 = vpop.f32.mrb[0].mxu0
        %v579 = vadd.f32 %v351, %v578
        %580 = vmatprep.mubr.f32.mxu0 0.0
        %581 = vmatmul.mubr.f32.gmra.mrb[0].mxu0 %v273
        %v582 = vpop.f32.mrb[0].mxu0
        %v583 = vadd.f32 %v347, %v582
        %v584 = vpop.f32.mrb[0].mxu0
        %v585 = vadd.f32 %v351, %v584
        %586 = vmatprep.mubr.f32.mxu0 0.0
        %587 = vmatmul.mubr.f32.gmra.mrb[0].mxu0 %v274
        %v588 = vpop.f32.mrb[0].mxu0
        %v589 = vadd.f32 %v347, %v588
        %v590 = vpop.f32.mrb[0].mxu0
        %v591 = vadd.f32 %v351, %v590
        %592 = vmatprep.mubr.f32.mxu0 0.0
        %593 = vmatmul.mubr.f32.gmra.mrb[0].mxu0 %v275
        %v594 = vpop.f32.mrb[0].mxu0
        %v595 = vadd.f32 %v347, %v594
        %v596 = vpop.f32.mrb[0].mxu0
        %v597 = vadd.f32 %v351, %v596
        %598 = vmatprep.mubr.f32.mxu0 0.0
        %599 = vmatmul.mubr.f32.gmra.mrb[0].mxu0 %v276
        %v600 = vpop.f32.mrb[0].mxu0
        %v601 = vadd.f32 %v347, %v600
        %v602 = vpop.f32.mrb[0].mxu0
        %v603 = vadd.f32 %v351, %v602
        %604 = vmatprep.mubr.f32.mxu0 0.0
        %605 = vmatmul.mubr.f32.gmra.mrb[0].mxu0 %v277
        %v606 = vpop.f32.mrb[0].mxu0
        %v607 = vadd.f32 %v347, %v606
        %v608 = vpop.f32.mrb[0].mxu0
        %v609 = vadd.f32 %v351, %v608
        %610 = vdwg.mxu0
        %v611 = vmul.f32 %v421, 0.5
        %v612 = vmul.f32 %v423, 0.5
        %v613 = vmul.f32 %v427, 0.5
        %v614 = vmul.f32 %v429, 0.5
        %v615 = vmul.f32 %v433, 0.5
        %v616 = vmul.f32 %v435, 0.5
        %v617 = vmul.f32 %v439, 0.5
        %v618 = vmul.f32 %v441, 0.5
        %v619 = vmul.f32 %v445, 0.5
        %v620 = vmul.f32 %v447, 0.5
        %v621 = vmul.f32 %v451, 0.5
        %v622 = vmul.f32 %v453, 0.5
        %v623 = vmul.f32 %v457, 0.5
        %v624 = vmul.f32 %v459, 0.5
        %v625 = vmul.f32 %v463, 0.5
        %v626 = vmul.f32 %v465, 0.5
        %v627 = vmul.f32 %v469, 0.5
        %v628 = vmul.f32 %v471, 0.5
        %v629 = vmul.f32 %v475, 0.5
        %v630 = vmul.f32 %v477, 0.5
        %v631 = vmul.f32 %v481, 0.5
        %v632 = vmul.f32 %v483, 0.5
        %v633 = vmul.f32 %v487, 0.5
        %v634 = vmul.f32 %v489, 0.5
        %v635 = vmul.f32 %v493, 0.5
        %v636 = vmul.f32 %v495, 0.5
        %v637 = vmul.f32 %v499, 0.5
        %v638 = vmul.f32 %v501, 0.5
        %v639 = vmul.f32 %v505, 0.5
        %v640 = vmul.f32 %v507, 0.5
        %v641 = vmul.f32 %v511, 0.5
        %v642 = vmul.f32 %v513, 0.5
        %v643 = vmul.f32 %v517, 0.5
        %v644 = vmul.f32 %v519, 0.5
        %v645 = vmul.f32 %v523, 0.5
        %v646 = vmul.f32 %v525, 0.5
        %v647 = vmul.f32 %v529, 0.5
        %v648 = vmul.f32 %v531, 0.5
        %v649 = vmul.f32 %v535, 0.5
        %v650 = vmul.f32 %v537, 0.5
        %v651 = vmul.f32 %v541, 0.5
        %v652 = vmul.f32 %v543, 0.5
        %v653 = vmul.f32 %v547, 0.5
        %v654 = vmul.f32 %v549, 0.5
        %v655 = vmul.f32 %v553, 0.5
        %v656 = vmul.f32 %v555, 0.5
        %v657 = vmul.f32 %v559, 0.5
        %v658 = vmul.f32 %v561, 0.5
        %v659 = vmul.f32 %v565, 0.5
        %v660 = vmul.f32 %v567, 0.5
        %v661 = vmul.f32 %v571, 0.5
        %v662 = vmul.f32 %v573, 0.5
        %v663 = vmul.f32 %v577, 0.5
        %v664 = vmul.f32 %v579, 0.5
        %v665 = vmul.f32 %v583, 0.5
        %v666 = vmul.f32 %v585, 0.5
        %v667 = vmul.f32 %v589, 0.5
        %v668 = vmul.f32 %v591, 0.5
        %v669 = vmul.f32 %v595, 0.5
        %v670 = vmul.f32 %v597, 0.5
        %v671 = vmul.f32 %v601, 0.5
        %v672 = vmul.f32 %v603, 0.5
        %v673 = vmul.f32 %v607, 0.5
        %v674 = vmul.f32 %v609, 0.5
        %v675 = vmul.f32 %v421, 0.70710677
        %v676 = vmul.f32 %v423, 0.70710677
        %v677 = vmul.f32 %v427, 0.70710677
        %v678 = vmul.f32 %v429, 0.70710677
        %v679 = vmul.f32 %v433, 0.70710677
        %v680 = vmul.f32 %v435, 0.70710677
        %v681 = vmul.f32 %v439, 0.70710677
        %v682 = vmul.f32 %v441, 0.70710677
        %v683 = vmul.f32 %v445, 0.70710677
        %v684 = vmul.f32 %v447, 0.70710677
        %v685 = vmul.f32 %v451, 0.70710677
        %v686 = vmul.f32 %v453, 0.70710677
        %v687 = vmul.f32 %v457, 0.70710677
        %v688 = vmul.f32 %v459, 0.70710677
        %v689 = vmul.f32 %v463, 0.70710677
        %v690 = vmul.f32 %v465, 0.70710677
        %v691 = vmul.f32 %v469, 0.70710677
        %v692 = vmul.f32 %v471, 0.70710677
        %v693 = vmul.f32 %v475, 0.70710677
        %v694 = vmul.f32 %v477, 0.70710677
        %v695 = vmul.f32 %v481, 0.70710677
        %v696 = vmul.f32 %v483, 0.70710677
        %v697 = vmul.f32 %v487, 0.70710677
        %v698 = vmul.f32 %v489, 0.70710677
        %v699 = vmul.f32 %v493, 0.70710677
        %v700 = vmul.f32 %v495, 0.70710677
        %v701 = vmul.f32 %v499, 0.70710677
        %v702 = vmul.f32 %v501, 0.70710677
        %v703 = vmul.f32 %v505, 0.70710677
        %v704 = vmul.f32 %v507, 0.70710677
        %v705 = vmul.f32 %v511, 0.70710677
        %v706 = vmul.f32 %v513, 0.70710677
        %v707 = vmul.f32 %v517, 0.70710677
        %v708 = vmul.f32 %v519, 0.70710677
        %v709 = vmul.f32 %v523, 0.70710677
        %v710 = vmul.f32 %v525, 0.70710677
        %v711 = vmul.f32 %v529, 0.70710677
        %v712 = vmul.f32 %v531, 0.70710677
        %v713 = vmul.f32 %v535, 0.70710677
        %v714 = vmul.f32 %v537, 0.70710677
        %v715 = vmul.f32 %v541, 0.70710677
        %v716 = vmul.f32 %v543, 0.70710677
        %v717 = vmul.f32 %v547, 0.70710677
        %v718 = vmul.f32 %v549, 0.70710677
        %v719 = vmul.f32 %v553, 0.70710677
        %v720 = vmul.f32 %v555, 0.70710677
        %v721 = vmul.f32 %v559, 0.70710677
        %v722 = vmul.f32 %v561, 0.70710677
        %v723 = vmul.f32 %v565, 0.70710677
        %v724 = vmul.f32 %v567, 0.70710677
        %v725 = vmul.f32 %v571, 0.70710677
        %v726 = vmul.f32 %v573, 0.70710677
        %v727 = vmul.f32 %v577, 0.70710677
        %v728 = vmul.f32 %v579, 0.70710677
        %v729 = vmul.f32 %v583, 0.70710677
        %v730 = vmul.f32 %v585, 0.70710677
        %v731 = vmul.f32 %v589, 0.70710677
        %v732 = vmul.f32 %v591, 0.70710677
        %v733 = vmul.f32 %v595, 0.70710677
        %v734 = vmul.f32 %v597, 0.70710677
        %v735 = vmul.f32 %v601, 0.70710677
        %v736 = vmul.f32 %v603, 0.70710677
        %v737 = vmul.f32 %v607, 0.70710677
        %v738 = vmul.f32 %v609, 0.70710677
        %v739 = verf.f32.pop %v675
        %v740 = verf.f32.pop %v676
        %v741 = verf.f32.pop %v677
        %v742 = verf.f32.pop %v678
        %v743 = verf.f32.pop %v679
        %v744 = verf.f32.pop %v680
        %v745 = verf.f32.pop %v681
        %v746 = verf.f32.pop %v682
        %v747 = verf.f32.pop %v683
        %v748 = verf.f32.pop %v684
        %v749 = verf.f32.pop %v685
        %v750 = verf.f32.pop %v686
        %v751 = verf.f32.pop %v687
        %v752 = verf.f32.pop %v688
        %v753 = verf.f32.pop %v689
        %v754 = verf.f32.pop %v690
        %v755 = verf.f32.pop %v691
        %v756 = verf.f32.pop %v692
        %v757 = verf.f32.pop %v693
        %v758 = verf.f32.pop %v694
        %v759 = verf.f32.pop %v695
        %v760 = verf.f32.pop %v696
        %v761 = verf.f32.pop %v697
        %v762 = verf.f32.pop %v698
        %v763 = verf.f32.pop %v699
        %v764 = verf.f32.pop %v700
        %v765 = verf.f32.pop %v701
        %v766 = verf.f32.pop %v702
        %v767 = verf.f32.pop %v703
        %v768 = verf.f32.pop %v704
        %v769 = verf.f32.pop %v705
        %v770 = verf.f32.pop %v706
        %v771 = verf.f32.pop %v707
        %v772 = verf.f32.pop %v708
        %v773 = verf.f32.pop %v709
        %v774 = verf.f32.pop %v710
        %v775 = verf.f32.pop %v711
        %v776 = verf.f32.pop %v712
        %v777 = verf.f32.pop %v713
        %v778 = verf.f32.pop %v714
        %v779 = verf.f32.pop %v715
        %v780 = verf.f32.pop %v716
        %v781 = verf.f32.pop %v717
        %v782 = verf.f32.pop %v718
        %v783 = verf.f32.pop %v719
        %v784 = verf.f32.pop %v720
        %v785 = verf.f32.pop %v721
        %v786 = verf.f32.pop %v722
        %v787 = verf.f32.pop %v723
        %v788 = verf.f32.pop %v724
        %v789 = verf.f32.pop %v725
        %v790 = verf.f32.pop %v726
        %v791 = verf.f32.pop %v727
        %v792 = verf.f32.pop %v728
        %v793 = verf.f32.pop %v729
        %v794 = verf.f32.pop %v730
        %v795 = verf.f32.pop %v731
        %v796 = verf.f32.pop %v732
        %v797 = verf.f32.pop %v733
        %v798 = verf.f32.pop %v734
        %v799 = verf.f32.pop %v735
        %v800 = verf.f32.pop %v736
        %v801 = verf.f32.pop %v737
        %v802 = verf.f32.pop %v738
        %v803 = vadd.f32 %v739, 1.0
        %v804 = vadd.f32 %v740, 1.0
        %v805 = vadd.f32 %v741, 1.0
        %v806 = vadd.f32 %v742, 1.0
        %v807 = vadd.f32 %v743, 1.0
        %v808 = vadd.f32 %v744, 1.0
        %v809 = vadd.f32 %v745, 1.0
        %v810 = vadd.f32 %v746, 1.0
        %v811 = vadd.f32 %v747, 1.0
        %v812 = vadd.f32 %v748, 1.0
        %v813 = vadd.f32 %v749, 1.0
        %v814 = vadd.f32 %v750, 1.0
        %v815 = vadd.f32 %v751, 1.0
        %v816 = vadd.f32 %v752, 1.0
        %v817 = vadd.f32 %v753, 1.0
        %v818 = vadd.f32 %v754, 1.0
        %v819 = vadd.f32 %v755, 1.0
        %v820 = vadd.f32 %v756, 1.0
        %v821 = vadd.f32 %v757, 1.0
        %v822 = vadd.f32 %v758, 1.0
        %v823 = vadd.f32 %v759, 1.0
        %v824 = vadd.f32 %v760, 1.0
        %v825 = vadd.f32 %v761, 1.0
        %v826 = vadd.f32 %v762, 1.0
        %v827 = vadd.f32 %v763, 1.0
        %v828 = vadd.f32 %v764, 1.0
        %v829 = vadd.f32 %v765, 1.0
        %v830 = vadd.f32 %v766, 1.0
        %v831 = vadd.f32 %v767, 1.0
        %v832 = vadd.f32 %v768, 1.0
        %v833 = vadd.f32 %v769, 1.0
        %v834 = vadd.f32 %v770, 1.0
        %v835 = vadd.f32 %v771, 1.0
        %v836 = vadd.f32 %v772, 1.0
        %v837 = vadd.f32 %v773, 1.0
        %v838 = vadd.f32 %v774, 1.0
        %v839 = vadd.f32 %v775, 1.0
        %v840 = vadd.f32 %v776, 1.0
        %v841 = vadd.f32 %v777, 1.0
        %v842 = vadd.f32 %v778, 1.0
        %v843 = vadd.f32 %v779, 1.0
        %v844 = vadd.f32 %v780, 1.0
        %v845 = vadd.f32 %v781, 1.0
        %v846 = vadd.f32 %v782, 1.0
        %v847 = vadd.f32 %v783, 1.0
        %v848 = vadd.f32 %v784, 1.0
        %v849 = vadd.f32 %v785, 1.0
        %v850 = vadd.f32 %v786, 1.0
        %v851 = vadd.f32 %v787, 1.0
        %v852 = vadd.f32 %v788, 1.0
        %v853 = vadd.f32 %v789, 1.0
        %v854 = vadd.f32 %v790, 1.0
        %v855 = vadd.f32 %v791, 1.0
        %v856 = vadd.f32 %v792, 1.0
        %v857 = vadd.f32 %v793, 1.0
        %v858 = vadd.f32 %v794, 1.0
        %v859 = vadd.f32 %v795, 1.0
        %v860 = vadd.f32 %v796, 1.0
        %v861 = vadd.f32 %v797, 1.0
        %v862 = vadd.f32 %v798, 1.0
        %v863 = vadd.f32 %v799, 1.0
        %v864 = vadd.f32 %v800, 1.0
        %v865 = vadd.f32 %v801, 1.0
        %v866 = vadd.f32 %v802, 1.0
        %v867 = vmul.f32 %v611, %v803
        %v868 = vmul.f32 %v612, %v804
        %v869 = vmul.f32 %v613, %v805
        %v870 = vmul.f32 %v614, %v806
        %v871 = vmul.f32 %v615, %v807
        %v872 = vmul.f32 %v616, %v808
        %v873 = vmul.f32 %v617, %v809
        %v874 = vmul.f32 %v618, %v810
        %v875 = vmul.f32 %v619, %v811
        %v876 = vmul.f32 %v620, %v812
        %v877 = vmul.f32 %v621, %v813
        %v878 = vmul.f32 %v622, %v814
        %v879 = vmul.f32 %v623, %v815
        %v880 = vmul.f32 %v624, %v816
        %v881 = vmul.f32 %v625, %v817
        %v882 = vmul.f32 %v626, %v818
        %v883 = vmul.f32 %v627, %v819
        %v884 = vmul.f32 %v628, %v820
        %v885 = vmul.f32 %v629, %v821
        %v886 = vmul.f32 %v630, %v822
        %v887 = vmul.f32 %v631, %v823
        %v888 = vmul.f32 %v632, %v824
        %v889 = vmul.f32 %v633, %v825
        %v890 = vmul.f32 %v634, %v826
        %v891 = vmul.f32 %v635, %v827
        %v892 = vmul.f32 %v636, %v828
        %v893 = vmul.f32 %v637, %v829
        %v894 = vmul.f32 %v638, %v830
        %v895 = vmul.f32 %v639, %v831
        %v896 = vmul.f32 %v640, %v832
        %v897 = vmul.f32 %v641, %v833
        %v898 = vmul.f32 %v642, %v834
        %v899 = vmul.f32 %v643, %v835
        %v900 = vmul.f32 %v644, %v836
        %v901 = vmul.f32 %v645, %v837
        %v902 = vmul.f32 %v646, %v838
        %v903 = vmul.f32 %v647, %v839
        %v904 = vmul.f32 %v648, %v840
        %v905 = vmul.f32 %v649, %v841
        %v906 = vmul.f32 %v650, %v842
        %v907 = vmul.f32 %v651, %v843
        %v908 = vmul.f32 %v652, %v844
        %v909 = vmul.f32 %v653, %v845
        %v910 = vmul.f32 %v654, %v846
        %v911 = vmul.f32 %v655, %v847
        %v912 = vmul.f32 %v656, %v848
        %v913 = vmul.f32 %v657, %v849
        %v914 = vmul.f32 %v658, %v850
        %v915 = vmul.f32 %v659, %v851
        %v916 = vmul.f32 %v660, %v852
        %v917 = vmul.f32 %v661, %v853
        %v918 = vmul.f32 %v662, %v854
        %v919 = vmul.f32 %v663, %v855
        %v920 = vmul.f32 %v664, %v856
        %v921 = vmul.f32 %v665, %v857
        %v922 = vmul.f32 %v666, %v858
        %v923 = vmul.f32 %v667, %v859
        %v924 = vmul.f32 %v668, %v860
        %v925 = vmul.f32 %v669, %v861
        %v926 = vmul.f32 %v670, %v862
        %v927 = vmul.f32 %v671, %v863
        %v928 = vmul.f32 %v672, %v864
        %v929 = vmul.f32 %v673, %v865
        %v930 = vmul.f32 %v674, %v866
        %v931 = vld [vmem:[#allocation2] sm:$0xff]
        %v932 = vld [vmem:[#allocation2 + $0x8] sm:$0xff]
        %v933 = vld [vmem:[#allocation2 + $0x10] sm:$0xff]
        %v934 = vld [vmem:[#allocation2 + $0x18] sm:$0xff]
        %v935 = vld [vmem:[#allocation2 + $0x20] sm:$0xff]
        %v936 = vld [vmem:[#allocation2 + $0x28] sm:$0xff]
        %v937 = vld [vmem:[#allocation2 + $0x30] sm:$0xff]
        %v938 = vld [vmem:[#allocation2 + $0x38] sm:$0xff]
        %v939 = vld [vmem:[#allocation2 + $0x40] sm:$0xff]
        %v940 = vld [vmem:[#allocation2 + $0x48] sm:$0xff]
        %v941 = vld [vmem:[#allocation2 + $0x50] sm:$0xff]
        %v942 = vld [vmem:[#allocation2 + $0x58] sm:$0xff]
        %v943 = vld [vmem:[#allocation2 + $0x60] sm:$0xff]
        %v944 = vld [vmem:[#allocation2 + $0x68] sm:$0xff]
        %v945 = vld [vmem:[#allocation2 + $0x70] sm:$0xff]
        %v946 = vld [vmem:[#allocation2 + $0x78] sm:$0xff]
        %v947 = vld [vmem:[#allocation2 + $0x80] sm:$0xff]
        %v948 = vld [vmem:[#allocation2 + $0x88] sm:$0xff]
        %v949 = vld [vmem:[#allocation2 + $0x90] sm:$0xff]
        %v950 = vld [vmem:[#allocation2 + $0x98] sm:$0xff]
        %v951 = vld [vmem:[#allocation2 + $0xa0] sm:$0xff]
        %v952 = vld [vmem:[#allocation2 + $0xa8] sm:$0xff]
        %v953 = vld [vmem:[#allocation2 + $0xb0] sm:$0xff]
        %v954 = vld [vmem:[#allocation2 + $0xb8] sm:$0xff]
        %v955 = vld [vmem:[#allocation2 + $0xc0] sm:$0xff]
        %v956 = vld [vmem:[#allocation2 + $0xc8] sm:$0xff]
        %v957 = vld [vmem:[#allocation2 + $0xd0] sm:$0xff]
        %v958 = vld [vmem:[#allocation2 + $0xd8] sm:$0xff]
        %v959 = vld [vmem:[#allocation2 + $0xe0] sm:$0xff]
        %v960 = vld [vmem:[#allocation2 + $0xe8] sm:$0xff]
        %v961 = vld [vmem:[#allocation2 + $0xf0] sm:$0xff]
        %v962 = vld [vmem:[#allocation2 + $0xf8] sm:$0xff]
        %v963 = vld [vmem:[%s3] sm:$0xff]
        %v964 = vld [vmem:[%s3 + $0x8] sm:$0xff]
        %v965 = vld [vmem:[%s3 + $0x10] sm:$0xff]
        %v966 = vld [vmem:[%s3 + $0x18] sm:$0xff]
        %v967 = vld [vmem:[%s3 + $0x20] sm:$0xff]
        %v968 = vld [vmem:[%s3 + $0x28] sm:$0xff]
        %v969 = vld [vmem:[%s3 + $0x30] sm:$0xff]
        %v970 = vld [vmem:[%s3 + $0x38] sm:$0xff]
        %v971 = vld [vmem:[%s3 + $0x40] sm:$0xff]
        %v972 = vld [vmem:[%s3 + $0x48] sm:$0xff]
        %v973 = vld [vmem:[%s3 + $0x50] sm:$0xff]
        %v974 = vld [vmem:[%s3 + $0x58] sm:$0xff]
        %v975 = vld [vmem:[%s3 + $0x60] sm:$0xff]
        %v976 = vld [vmem:[%s3 + $0x68] sm:$0xff]
        %v977 = vld [vmem:[%s3 + $0x70] sm:$0xff]
        %v978 = vld [vmem:[%s3 + $0x78] sm:$0xff]
        %v979 = vld [vmem:[%s3 + $0x80] sm:$0xff]
        %v980 = vld [vmem:[%s3 + $0x88] sm:$0xff]
        %v981 = vld [vmem:[%s3 + $0x90] sm:$0xff]
        %v982 = vld [vmem:[%s3 + $0x98] sm:$0xff]
        %v983 = vld [vmem:[%s3 + $0xa0] sm:$0xff]
        %v984 = vld [vmem:[%s3 + $0xa8] sm:$0xff]
        %v985 = vld [vmem:[%s3 + $0xb0] sm:$0xff]
        %v986 = vld [vmem:[%s3 + $0xb8] sm:$0xff]
        %v987 = vld [vmem:[%s3 + $0xc0] sm:$0xff]
        %v988 = vld [vmem:[%s3 + $0xc8] sm:$0xff]
        %v989 = vld [vmem:[%s3 + $0xd0] sm:$0xff]
        %v990 = vld [vmem:[%s3 + $0xd8] sm:$0xff]
        %v991 = vld [vmem:[%s3 + $0xe0] sm:$0xff]
        %v992 = vld [vmem:[%s3 + $0xe8] sm:$0xff]
        %v993 = vld [vmem:[%s3 + $0xf0] sm:$0xff]
        %v994 = vld [vmem:[%s3 + $0xf8] sm:$0xff]
        %995 = vmatprep.subr.mxu0 0.0
        %996 = vmatpush1.msra.mxu0 %v963
        %997 = vmatprep.subr.mxu0 0.0
        %998 = vmatpush1.msra.mxu0 %v964
        %999 = vmatprep.subr.mxu0 0.0
        %1000 = vmatpush1.msra.mxu0 %v965
        %1001 = vmatprep.subr.mxu0 0.0
        %1002 = vmatpush1.msra.mxu0 %v966
        %1003 = vmatprep.subr.mxu0 0.0
        %1004 = vmatpush1.msra.mxu0 %v967
        %1005 = vmatprep.subr.mxu0 0.0
        %1006 = vmatpush1.msra.mxu0 %v968
        %1007 = vmatprep.subr.mxu0 0.0
        %1008 = vmatpush1.msra.mxu0 %v969
        %1009 = vmatprep.subr.mxu0 0.0
        %1010 = vmatpush1.msra.mxu0 %v970
        %1011 = vmatprep.subr.mxu0 0.0
        %1012 = vmatpush1.msra.mxu0 %v971
        %1013 = vmatprep.subr.mxu0 0.0
        %1014 = vmatpush1.msra.mxu0 %v972
        %1015 = vmatprep.subr.mxu0 0.0
        %1016 = vmatpush1.msra.mxu0 %v973
        %1017 = vmatprep.subr.mxu0 0.0
        %1018 = vmatpush1.msra.mxu0 %v974
        %1019 = vmatprep.subr.mxu0 0.0
        %1020 = vmatpush1.msra.mxu0 %v975
        %1021 = vmatprep.subr.mxu0 0.0
        %1022 = vmatpush1.msra.mxu0 %v976
        %1023 = vmatprep.subr.mxu0 0.0
        %1024 = vmatpush1.msra.mxu0 %v977
        %1025 = vmatprep.subr.mxu0 0.0
        %1026 = vmatpush1.msra.mxu0 %v978
        %1027 = vmatprep.subr.mxu0 0.0
        %1028 = vmatpush1.msra.mxu0 %v979
        %1029 = vmatprep.subr.mxu0 0.0
        %1030 = vmatpush1.msra.mxu0 %v980
        %1031 = vmatprep.subr.mxu0 0.0
        %1032 = vmatpush1.msra.mxu0 %v981
        %1033 = vmatprep.subr.mxu0 0.0
        %1034 = vmatpush1.msra.mxu0 %v982
        %1035 = vmatprep.subr.mxu0 0.0
        %1036 = vmatpush1.msra.mxu0 %v983
        %1037 = vmatprep.subr.mxu0 0.0
        %1038 = vmatpush1.msra.mxu0 %v984
        %1039 = vmatprep.subr.mxu0 0.0
        %1040 = vmatpush1.msra.mxu0 %v985
        %1041 = vmatprep.subr.mxu0 0.0
        %1042 = vmatpush1.msra.mxu0 %v986
        %1043 = vmatprep.subr.mxu0 0.0
        %1044 = vmatpush1.msra.mxu0 %v987
        %1045 = vmatprep.subr.mxu0 0.0
        %1046 = vmatpush1.msra.mxu0 %v988
        %1047 = vmatprep.subr.mxu0 0.0
        %1048 = vmatpush1.msra.mxu0 %v989
        %1049 = vmatprep.subr.mxu0 0.0
        %1050 = vmatpush1.msra.mxu0 %v990
        %1051 = vmatprep.subr.mxu0 0.0
        %1052 = vmatpush1.msra.mxu0 %v991
        %1053 = vmatprep.subr.mxu0 0.0
        %1054 = vmatpush1.msra.mxu0 %v992
        %1055 = vmatprep.subr.mxu0 0.0
        %1056 = vmatpush1.msra.mxu0 %v993
        %1057 = vmatprep.subr.mxu0 0.0
        %1058 = vmatpush1.msra.mxu0 %v994
        %1059 = vmatprep.mubr.f32.mxu0 %v868
        %1060 = vmatmul.mubr.f32.gmra.mrb[0].mxu0 %v867
        %v1061 = vpop.f32.mrb[0].mxu0
        %v1062 = vadd.f32 0.0, %v1061
        %v1063 = vpop.f32.mrb[0].mxu0
        %1064 = vmatprep.mubr.f32.mxu0 %v870
        %1065 = vmatmul.mubr.f32.gmra.mrb[0].mxu0 %v869
        %v1066 = vpop.f32.mrb[0].mxu0
        %v1067 = vadd.f32 0.0, %v1066
        %v1068 = vpop.f32.mrb[0].mxu0
        %1069 = vmatprep.mubr.f32.mxu0 %v872
        %1070 = vmatmul.mubr.f32.gmra.mrb[0].mxu0 %v871
        %v1071 = vpop.f32.mrb[0].mxu0
        %v1072 = vadd.f32 0.0, %v1071
        %v1073 = vpop.f32.mrb[0].mxu0
        %1074 = vmatprep.mubr.f32.mxu0 %v874
        %1075 = vmatmul.mubr.f32.gmra.mrb[0].mxu0 %v873
        %v1076 = vpop.f32.mrb[0].mxu0
        %v1077 = vadd.f32 0.0, %v1076
        %v1078 = vpop.f32.mrb[0].mxu0
        %1079 = vmatprep.mubr.f32.mxu0 %v876
        %1080 = vmatmul.mubr.f32.gmra.mrb[0].mxu0 %v875
        %v1081 = vpop.f32.mrb[0].mxu0
        %v1082 = vadd.f32 0.0, %v1081
        %v1083 = vpop.f32.mrb[0].mxu0
        %1084 = vmatprep.mubr.f32.mxu0 %v878
        %1085 = vmatmul.mubr.f32.gmra.mrb[0].mxu0 %v877
        %v1086 = vpop.f32.mrb[0].mxu0
        %v1087 = vadd.f32 0.0, %v1086
        %v1088 = vpop.f32.mrb[0].mxu0
        %1089 = vmatprep.mubr.f32.mxu0 %v880
        %1090 = vmatmul.mubr.f32.gmra.mrb[0].mxu0 %v879
        %v1091 = vpop.f32.mrb[0].mxu0
        %v1092 = vadd.f32 0.0, %v1091
        %v1093 = vpop.f32.mrb[0].mxu0
        %1094 = vmatprep.mubr.f32.mxu0 %v882
        %1095 = vmatmul.mubr.f32.gmra.mrb[0].mxu0 %v881
        %v1096 = vpop.f32.mrb[0].mxu0
        %v1097 = vadd.f32 0.0, %v1096
        %v1098 = vpop.f32.mrb[0].mxu0
        %1099 = vmatprep.mubr.f32.mxu0 %v884
        %1100 = vmatmul.mubr.f32.gmra.mrb[0].mxu0 %v883
        %v1101 = vpop.f32.mrb[0].mxu0
        %v1102 = vadd.f32 0.0, %v1101
        %v1103 = vpop.f32.mrb[0].mxu0
        %1104 = vmatprep.mubr.f32.mxu0 %v886
        %1105 = vmatmul.mubr.f32.gmra.mrb[0].mxu0 %v885
        %v1106 = vpop.f32.mrb[0].mxu0
        %v1107 = vadd.f32 0.0, %v1106
        %v1108 = vpop.f32.mrb[0].mxu0
        %1109 = vmatprep.mubr.f32.mxu0 %v888
        %1110 = vmatmul.mubr.f32.gmra.mrb[0].mxu0 %v887
        %v1111 = vpop.f32.mrb[0].mxu0
        %v1112 = vadd.f32 0.0, %v1111
        %v1113 = vpop.f32.mrb[0].mxu0
        %1114 = vmatprep.mubr.f32.mxu0 %v890
        %1115 = vmatmul.mubr.f32.gmra.mrb[0].mxu0 %v889
        %v1116 = vpop.f32.mrb[0].mxu0
        %v1117 = vadd.f32 0.0, %v1116
        %v1118 = vpop.f32.mrb[0].mxu0
        %1119 = vmatprep.mubr.f32.mxu0 %v892
        %1120 = vmatmul.mubr.f32.gmra.mrb[0].mxu0 %v891
        %v1121 = vpop.f32.mrb[0].mxu0
        %v1122 = vadd.f32 0.0, %v1121
        %v1123 = vpop.f32.mrb[0].mxu0
        %1124 = vmatprep.mubr.f32.mxu0 %v894
        %1125 = vmatmul.mubr.f32.gmra.mrb[0].mxu0 %v893
        %v1126 = vpop.f32.mrb[0].mxu0
        %v1127 = vadd.f32 0.0, %v1126
        %v1128 = vpop.f32.mrb[0].mxu0
        %1129 = vmatprep.mubr.f32.mxu0 %v896
        %1130 = vmatmul.mubr.f32.gmra.mrb[0].mxu0 %v895
        %v1131 = vpop.f32.mrb[0].mxu0
        %v1132 = vadd.f32 0.0, %v1131
        %v1133 = vpop.f32.mrb[0].mxu0
        %1134 = vmatprep.mubr.f32.mxu0 %v898
        %1135 = vmatmul.mubr.f32.gmra.mrb[0].mxu0 %v897
        %v1136 = vpop.f32.mrb[0].mxu0
        %v1137 = vadd.f32 0.0, %v1136
        %v1138 = vpop.f32.mrb[0].mxu0
        %1139 = vmatprep.mubr.f32.mxu0 %v900
        %1140 = vmatmul.mubr.f32.gmra.mrb[0].mxu0 %v899
        %v1141 = vpop.f32.mrb[0].mxu0
        %v1142 = vadd.f32 0.0, %v1141
        %v1143 = vpop.f32.mrb[0].mxu0
        %1144 = vmatprep.mubr.f32.mxu0 %v902
        %1145 = vmatmul.mubr.f32.gmra.mrb[0].mxu0 %v901
        %v1146 = vpop.f32.mrb[0].mxu0
        %v1147 = vadd.f32 0.0, %v1146
        %v1148 = vpop.f32.mrb[0].mxu0
        %1149 = vmatprep.mubr.f32.mxu0 %v904
        %1150 = vmatmul.mubr.f32.gmra.mrb[0].mxu0 %v903
        %v1151 = vpop.f32.mrb[0].mxu0
        %v1152 = vadd.f32 0.0, %v1151
        %v1153 = vpop.f32.mrb[0].mxu0
        %1154 = vmatprep.mubr.f32.mxu0 %v906
        %1155 = vmatmul.mubr.f32.gmra.mrb[0].mxu0 %v905
        %v1156 = vpop.f32.mrb[0].mxu0
        %v1157 = vadd.f32 0.0, %v1156
        %v1158 = vpop.f32.mrb[0].mxu0
        %1159 = vmatprep.mubr.f32.mxu0 %v908
        %1160 = vmatmul.mubr.f32.gmra.mrb[0].mxu0 %v907
        %v1161 = vpop.f32.mrb[0].mxu0
        %v1162 = vadd.f32 0.0, %v1161
        %v1163 = vpop.f32.mrb[0].mxu0
        %1164 = vmatprep.mubr.f32.mxu0 %v910
        %1165 = vmatmul.mubr.f32.gmra.mrb[0].mxu0 %v909
        %v1166 = vpop.f32.mrb[0].mxu0
        %v1167 = vadd.f32 0.0, %v1166
        %v1168 = vpop.f32.mrb[0].mxu0
        %1169 = vmatprep.mubr.f32.mxu0 %v912
        %1170 = vmatmul.mubr.f32.gmra.mrb[0].mxu0 %v911
        %v1171 = vpop.f32.mrb[0].mxu0
        %v1172 = vadd.f32 0.0, %v1171
        %v1173 = vpop.f32.mrb[0].mxu0
        %1174 = vmatprep.mubr.f32.mxu0 %v914
        %1175 = vmatmul.mubr.f32.gmra.mrb[0].mxu0 %v913
        %v1176 = vpop.f32.mrb[0].mxu0
        %v1177 = vadd.f32 0.0, %v1176
        %v1178 = vpop.f32.mrb[0].mxu0
        %1179 = vmatprep.mubr.f32.mxu0 %v916
        %1180 = vmatmul.mubr.f32.gmra.mrb[0].mxu0 %v915
        %v1181 = vpop.f32.mrb[0].mxu0
        %v1182 = vadd.f32 0.0, %v1181
        %v1183 = vpop.f32.mrb[0].mxu0
        %1184 = vmatprep.mubr.f32.mxu0 %v918
        %1185 = vmatmul.mubr.f32.gmra.mrb[0].mxu0 %v917
        %v1186 = vpop.f32.mrb[0].mxu0
        %v1187 = vadd.f32 0.0, %v1186
        %v1188 = vpop.f32.mrb[0].mxu0
        %1189 = vmatprep.mubr.f32.mxu0 %v920
        %1190 = vmatmul.mubr.f32.gmra.mrb[0].mxu0 %v919
        %v1191 = vpop.f32.mrb[0].mxu0
        %v1192 = vadd.f32 0.0, %v1191
        %v1193 = vpop.f32.mrb[0].mxu0
        %1194 = vmatprep.mubr.f32.mxu0 %v922
        %1195 = vmatmul.mubr.f32.gmra.mrb[0].mxu0 %v921
        %v1196 = vpop.f32.mrb[0].mxu0
        %v1197 = vadd.f32 0.0, %v1196
        %v1198 = vpop.f32.mrb[0].mxu0
        %1199 = vmatprep.mubr.f32.mxu0 %v924
        %1200 = vmatmul.mubr.f32.gmra.mrb[0].mxu0 %v923
        %v1201 = vpop.f32.mrb[0].mxu0
        %v1202 = vadd.f32 0.0, %v1201
        %v1203 = vpop.f32.mrb[0].mxu0
        %1204 = vmatprep.mubr.f32.mxu0 %v926
        %1205 = vmatmul.mubr.f32.gmra.mrb[0].mxu0 %v925
        %v1206 = vpop.f32.mrb[0].mxu0
        %v1207 = vadd.f32 0.0, %v1206
        %v1208 = vpop.f32.mrb[0].mxu0
        %1209 = vmatprep.mubr.f32.mxu0 %v928
        %1210 = vmatmul.mubr.f32.gmra.mrb[0].mxu0 %v927
        %v1211 = vpop.f32.mrb[0].mxu0
        %v1212 = vadd.f32 0.0, %v1211
        %v1213 = vpop.f32.mrb[0].mxu0
        %1214 = vmatprep.mubr.f32.mxu0 %v930
        %1215 = vmatmul.mubr.f32.gmra.mrb[0].mxu0 %v929
        %v1216 = vpop.f32.mrb[0].mxu0
        %v1217 = vadd.f32 0.0, %v1216
        %v1218 = vpop.f32.mrb[0].mxu0
        %1219 = vdwg.mxu0
        %v1220 = vadd.f32 %v931, %v1062
        %v1221 = vadd.f32 %v932, %v1067
        %v1222 = vadd.f32 %v933, %v1072
        %v1223 = vadd.f32 %v934, %v1077
        %v1224 = vadd.f32 %v935, %v1082
        %v1225 = vadd.f32 %v936, %v1087
        %v1226 = vadd.f32 %v937, %v1092
        %v1227 = vadd.f32 %v938, %v1097
        %v1228 = vadd.f32 %v939, %v1102
        %v1229 = vadd.f32 %v940, %v1107
        %v1230 = vadd.f32 %v941, %v1112
        %v1231 = vadd.f32 %v942, %v1117
        %v1232 = vadd.f32 %v943, %v1122
        %v1233 = vadd.f32 %v944, %v1127
        %v1234 = vadd.f32 %v945, %v1132
        %v1235 = vadd.f32 %v946, %v1137
        %v1236 = vadd.f32 %v947, %v1142
        %v1237 = vadd.f32 %v948, %v1147
        %v1238 = vadd.f32 %v949, %v1152
        %v1239 = vadd.f32 %v950, %v1157
        %v1240 = vadd.f32 %v951, %v1162
        %v1241 = vadd.f32 %v952, %v1167
        %v1242 = vadd.f32 %v953, %v1172
        %v1243 = vadd.f32 %v954, %v1177
        %v1244 = vadd.f32 %v955, %v1182
        %v1245 = vadd.f32 %v956, %v1187
        %v1246 = vadd.f32 %v957, %v1192
        %v1247 = vadd.f32 %v958, %v1197
        %v1248 = vadd.f32 %v959, %v1202
        %v1249 = vadd.f32 %v960, %v1207
        %v1250 = vadd.f32 %v961, %v1212
        %v1251 = vadd.f32 %v962, %v1217
        %1252 = vst [vmem:[#allocation2] sm:$0xff] %v1220
        %1253 = vst [vmem:[#allocation2 + $0x8] sm:$0xff] %v1221
        %1254 = vst [vmem:[#allocation2 + $0x10] sm:$0xff] %v1222
        %1255 = vst [vmem:[#allocation2 + $0x18] sm:$0xff] %v1223
        %1256 = vst [vmem:[#allocation2 + $0x20] sm:$0xff] %v1224
        %1257 = vst [vmem:[#allocation2 + $0x28] sm:$0xff] %v1225
        %1258 = vst [vmem:[#allocation2 + $0x30] sm:$0xff] %v1226
        %1259 = vst [vmem:[#allocation2 + $0x38] sm:$0xff] %v1227
        %1260 = vst [vmem:[#allocation2 + $0x40] sm:$0xff] %v1228
        %1261 = vst [vmem:[#allocation2 + $0x48] sm:$0xff] %v1229
        %1262 = vst [vmem:[#allocation2 + $0x50] sm:$0xff] %v1230
        %1263 = vst [vmem:[#allocation2 + $0x58] sm:$0xff] %v1231
        %1264 = vst [vmem:[#allocation2 + $0x60] sm:$0xff] %v1232
        %1265 = vst [vmem:[#allocation2 + $0x68] sm:$0xff] %v1233
        %1266 = vst [vmem:[#allocation2 + $0x70] sm:$0xff] %v1234
        %1267 = vst [vmem:[#allocation2 + $0x78] sm:$0xff] %v1235
        %1268 = vst [vmem:[#allocation2 + $0x80] sm:$0xff] %v1236
        %1269 = vst [vmem:[#allocation2 + $0x88] sm:$0xff] %v1237
        %1270 = vst [vmem:[#allocation2 + $0x90] sm:$0xff] %v1238
        %1271 = vst [vmem:[#allocation2 + $0x98] sm:$0xff] %v1239
        %1272 = vst [vmem:[#allocation2 + $0xa0] sm:$0xff] %v1240
        %1273 = vst [vmem:[#allocation2 + $0xa8] sm:$0xff] %v1241
        %1274 = vst [vmem:[#allocation2 + $0xb0] sm:$0xff] %v1242
        %1275 = vst [vmem:[#allocation2 + $0xb8] sm:$0xff] %v1243
        %1276 = vst [vmem:[#allocation2 + $0xc0] sm:$0xff] %v1244
        %1277 = vst [vmem:[#allocation2 + $0xc8] sm:$0xff] %v1245
        %1278 = vst [vmem:[#allocation2 + $0xd0] sm:$0xff] %v1246
        %1279 = vst [vmem:[#allocation2 + $0xd8] sm:$0xff] %v1247
        %1280 = vst [vmem:[#allocation2 + $0xe0] sm:$0xff] %v1248
        %1281 = vst [vmem:[#allocation2 + $0xe8] sm:$0xff] %v1249
        %1282 = vst [vmem:[#allocation2 + $0xf0] sm:$0xff] %v1250
        %1283 = vst [vmem:[#allocation2 + $0xf8] sm:$0xff] %v1251
        %v1284 = vld [vmem:[%s1 + $0x10] sm:$0xff]
        %v1285 = vld [vmem:[%s1 + $0x18] sm:$0xff]
        %v1286 = vld [vmem:[%s1 + $0x30] sm:$0xff]
        %v1287 = vld [vmem:[%s1 + $0x38] sm:$0xff]
        %v1288 = vld [vmem:[%s1 + $0x50] sm:$0xff]
        %v1289 = vld [vmem:[%s1 + $0x58] sm:$0xff]
        %v1290 = vld [vmem:[%s1 + $0x70] sm:$0xff]
        %v1291 = vld [vmem:[%s1 + $0x78] sm:$0xff]
        %v1292 = vld [vmem:[%s1 + $0x90] sm:$0xff]
        %v1293 = vld [vmem:[%s1 + $0x98] sm:$0xff]
        %v1294 = vld [vmem:[%s1 + $0xb0] sm:$0xff]
        %v1295 = vld [vmem:[%s1 + $0xb8] sm:$0xff]
        %v1296 = vld [vmem:[%s1 + $0xd0] sm:$0xff]
        %v1297 = vld [vmem:[%s1 + $0xd8] sm:$0xff]
        %v1298 = vld [vmem:[%s1 + $0xf0] sm:$0xff]
        %v1299 = vld [vmem:[%s1 + $0xf8] sm:$0xff]
        %v1300 = vld [vmem:[%s1 + $0x110] sm:$0xff]
        %v1301 = vld [vmem:[%s1 + $0x118] sm:$0xff]
        %v1302 = vld [vmem:[%s1 + $0x130] sm:$0xff]
        %v1303 = vld [vmem:[%s1 + $0x138] sm:$0xff]
        %v1304 = vld [vmem:[%s1 + $0x150] sm:$0xff]
        %v1305 = vld [vmem:[%s1 + $0x158] sm:$0xff]
        %v1306 = vld [vmem:[%s1 + $0x170] sm:$0xff]
        %v1307 = vld [vmem:[%s1 + $0x178] sm:$0xff]
        %v1308 = vld [vmem:[%s1 + $0x190] sm:$0xff]
        %v1309 = vld [vmem:[%s1 + $0x198] sm:$0xff]
        %v1310 = vld [vmem:[%s1 + $0x1b0] sm:$0xff]
        %v1311 = vld [vmem:[%s1 + $0x1b8] sm:$0xff]
        %v1312 = vld [vmem:[%s1 + $0x1d0] sm:$0xff]
        %v1313 = vld [vmem:[%s1 + $0x1d8] sm:$0xff]
        %v1314 = vld [vmem:[%s1 + $0x1f0] sm:$0xff]
        %v1315 = vld [vmem:[%s1 + $0x1f8] sm:$0xff]
        %v1316 = vld [vmem:[%s2 + $0x2] sm:$0x3]
        %v1318 = vlaneseq
        %v1319 = vshrl.u32 %v1318, 7
        %v1320 = vsub.s32 0, %v1319
        %v1321 = vrot.slane %v1316, %v1320
        %v1322 = vlaneseq
        %v1323 = vshrl.u32 %v1322, 7
        %v1324 = vsub.s32 1, %v1323
        %v1325 = vrot.slane %v1316, %v1324
        %1328 = vmatprep.subr.mxu0 %v1285
        %1329 = vmatpush1.msra.mxu0 %v1284
        %1330 = vmatprep.subr.mxu0 %v1287
        %1331 = vmatpush1.msra.mxu0 %v1286
        %1332 = vmatprep.subr.mxu0 %v1289
        %1333 = vmatpush1.msra.mxu0 %v1288
        %1334 = vmatprep.subr.mxu0 %v1291
        %1335 = vmatpush1.msra.mxu0 %v1290
        %1336 = vmatprep.subr.mxu0 %v1293
        %1337 = vmatpush1.msra.mxu0 %v1292
        %1338 = vmatprep.subr.mxu0 %v1295
        %1339 = vmatpush1.msra.mxu0 %v1294
        %1340 = vmatprep.subr.mxu0 %v1297
        %1341 = vmatpush1.msra.mxu0 %v1296
        %1342 = vmatprep.subr.mxu0 %v1299
        %1343 = vmatpush1.msra.mxu0 %v1298
        %1344 = vmatprep.subr.mxu0 %v1301
        %1345 = vmatpush1.msra.mxu0 %v1300
        %1346 = vmatprep.subr.mxu0 %v1303
        %1347 = vmatpush1.msra.mxu0 %v1302
        %1348 = vmatprep.subr.mxu0 %v1305
        %1349 = vmatpush1.msra.mxu0 %v1304
        %1350 = vmatprep.subr.mxu0 %v1307
        %1351 = vmatpush1.msra.mxu0 %v1306
        %1352 = vmatprep.subr.mxu0 %v1309
        %1353 = vmatpush1.msra.mxu0 %v1308
        %1354 = vmatprep.subr.mxu0 %v1311
        %1355 = vmatpush1.msra.mxu0 %v1310
        %1356 = vmatprep.subr.mxu0 %v1313
        %1357 = vmatpush1.msra.mxu0 %v1312
        %1358 = vmatprep.subr.mxu0 %v1315
        %1359 = vmatpush1.msra.mxu0 %v1314
        %1360 = vmatprep.subr.mxu0 0.0
        %1361 = vmatpush1.msra.mxu0 0.0
        %1362 = vmatprep.subr.mxu0 0.0
        %1363 = vmatpush1.msra.mxu0 0.0
        %1364 = vmatprep.subr.mxu0 0.0
        %1365 = vmatpush1.msra.mxu0 0.0
        %1366 = vmatprep.subr.mxu0 0.0
        %1367 = vmatpush1.msra.mxu0 0.0
        %1368 = vmatprep.subr.mxu0 0.0
        %1369 = vmatpush1.msra.mxu0 0.0
        %1370 = vmatprep.subr.mxu0 0.0
        %1371 = vmatpush1.msra.mxu0 0.0
        %1372 = vmatprep.subr.mxu0 0.0
        %1373 = vmatpush1.msra.mxu0 0.0
        %1374 = vmatprep.subr.mxu0 0.0
        %1375 = vmatpush1.msra.mxu0 0.0
        %1376 = vmatprep.subr.mxu0 0.0
        %1377 = vmatpush1.msra.mxu0 0.0
        %1378 = vmatprep.subr.mxu0 0.0
        %1379 = vmatpush1.msra.mxu0 0.0
        %1380 = vmatprep.subr.mxu0 0.0
        %1381 = vmatpush1.msra.mxu0 0.0
        %1382 = vmatprep.subr.mxu0 0.0
        %1383 = vmatpush1.msra.mxu0 0.0
        %1384 = vmatprep.subr.mxu0 0.0
        %1385 = vmatpush1.msra.mxu0 0.0
        %1386 = vmatprep.subr.mxu0 0.0
        %1387 = vmatpush1.msra.mxu0 0.0
        %1388 = vmatprep.subr.mxu0 0.0
        %1389 = vmatpush1.msra.mxu0 0.0
        %1390 = vmatprep.subr.mxu0 0.0
        %1391 = vmatpush1.msra.mxu0 0.0
        %1392 = vmatprep.mubr.f32.mxu0 0.0
        %1393 = vmatmul.mubr.f32.gmra.mrb[0].mxu0 %v246
        %v1394 = vpop.f32.mrb[0].mxu0
        %v1395 = vadd.f32 %v1321, %v1394
        %v1396 = vpop.f32.mrb[0].mxu0
        %v1397 = vadd.f32 %v1325, %v1396
        %1398 = vmatprep.mubr.f32.mxu0 0.0
        %1399 = vmatmul.mubr.f32.gmra.mrb[0].mxu0 %v247
        %v1400 = vpop.f32.mrb[0].mxu0
        %v1401 = vadd.f32 %v1321, %v1400
        %v1402 = vpop.f32.mrb[0].mxu0
        %v1403 = vadd.f32 %v1325, %v1402
        %1404 = vmatprep.mubr.f32.mxu0 0.0
        %1405 = vmatmul.mubr.f32.gmra.mrb[0].mxu0 %v248
        %v1406 = vpop.f32.mrb[0].mxu0
        %v1407 = vadd.f32 %v1321, %v1406
        %v1408 = vpop.f32.mrb[0].mxu0
        %v1409 = vadd.f32 %v1325, %v1408
        %1410 = vmatprep.mubr.f32.mxu0 0.0
        %1411 = vmatmul.mubr.f32.gmra.mrb[0].mxu0 %v249
        %v1412 = vpop.f32.mrb[0].mxu0
        %v1413 = vadd.f32 %v1321, %v1412
        %v1414 = vpop.f32.mrb[0].mxu0
        %v1415 = vadd.f32 %v1325, %v1414
        %1416 = vmatprep.mubr.f32.mxu0 0.0
        %1417 = vmatmul.mubr.f32.gmra.mrb[0].mxu0 %v250
        %v1418 = vpop.f32.mrb[0].mxu0
        %v1419 = vadd.f32 %v1321, %v1418
        %v1420 = vpop.f32.mrb[0].mxu0
        %v1421 = vadd.f32 %v1325, %v1420
        %1422 = vmatprep.mubr.f32.mxu0 0.0
        %1423 = vmatmul.mubr.f32.gmra.mrb[0].mxu0 %v251
        %v1424 = vpop.f32.mrb[0].mxu0
        %v1425 = vadd.f32 %v1321, %v1424
        %v1426 = vpop.f32.mrb[0].mxu0
        %v1427 = vadd.f32 %v1325, %v1426
        %1428 = vmatprep.mubr.f32.mxu0 0.0
        %1429 = vmatmul.mubr.f32.gmra.mrb[0].mxu0 %v252
        %v1430 = vpop.f32.mrb[0].mxu0
        %v1431 = vadd.f32 %v1321, %v1430
        %v1432 = vpop.f32.mrb[0].mxu0
        %v1433 = vadd.f32 %v1325, %v1432
        %1434 = vmatprep.mubr.f32.mxu0 0.0
        %1435 = vmatmul.mubr.f32.gmra.mrb[0].mxu0 %v253
        %v1436 = vpop.f32.mrb[0].mxu0
        %v1437 = vadd.f32 %v1321, %v1436
        %v1438 = vpop.f32.mrb[0].mxu0
        %v1439 = vadd.f32 %v1325, %v1438
        %1440 = vmatprep.mubr.f32.mxu0 0.0
        %1441 = vmatmul.mubr.f32.gmra.mrb[0].mxu0 %v254
        %v1442 = vpop.f32.mrb[0].mxu0
        %v1443 = vadd.f32 %v1321, %v1442
        %v1444 = vpop.f32.mrb[0].mxu0
        %v1445 = vadd.f32 %v1325, %v1444
        %1446 = vmatprep.mubr.f32.mxu0 0.0
        %1447 = vmatmul.mubr.f32.gmra.mrb[0].mxu0 %v255
        %v1448 = vpop.f32.mrb[0].mxu0
        %v1449 = vadd.f32 %v1321, %v1448
        %v1450 = vpop.f32.mrb[0].mxu0
        %v1451 = vadd.f32 %v1325, %v1450
        %1452 = vmatprep.mubr.f32.mxu0 0.0
        %1453 = vmatmul.mubr.f32.gmra.mrb[0].mxu0 %v256
        %v1454 = vpop.f32.mrb[0].mxu0
        %v1455 = vadd.f32 %v1321, %v1454
        %v1456 = vpop.f32.mrb[0].mxu0
        %v1457 = vadd.f32 %v1325, %v1456
        %1458 = vmatprep.mubr.f32.mxu0 0.0
        %1459 = vmatmul.mubr.f32.gmra.mrb[0].mxu0 %v257
        %v1460 = vpop.f32.mrb[0].mxu0
        %v1461 = vadd.f32 %v1321, %v1460
        %v1462 = vpop.f32.mrb[0].mxu0
        %v1463 = vadd.f32 %v1325, %v1462
        %1464 = vmatprep.mubr.f32.mxu0 0.0
        %1465 = vmatmul.mubr.f32.gmra.mrb[0].mxu0 %v258
        %v1466 = vpop.f32.mrb[0].mxu0
        %v1467 = vadd.f32 %v1321, %v1466
        %v1468 = vpop.f32.mrb[0].mxu0
        %v1469 = vadd.f32 %v1325, %v1468
        %1470 = vmatprep.mubr.f32.mxu0 0.0
        %1471 = vmatmul.mubr.f32.gmra.mrb[0].mxu0 %v259
        %v1472 = vpop.f32.mrb[0].mxu0
        %v1473 = vadd.f32 %v1321, %v1472
        %v1474 = vpop.f32.mrb[0].mxu0
        %v1475 = vadd.f32 %v1325, %v1474
        %1476 = vmatprep.mubr.f32.mxu0 0.0
        %1477 = vmatmul.mubr.f32.gmra.mrb[0].mxu0 %v260
        %v1478 = vpop.f32.mrb[0].mxu0
        %v1479 = vadd.f32 %v1321, %v1478
        %v1480 = vpop.f32.mrb[0].mxu0
        %v1481 = vadd.f32 %v1325, %v1480
        %1482 = vmatprep.mubr.f32.mxu0 0.0
        %1483 = vmatmul.mubr.f32.gmra.mrb[0].mxu0 %v261
        %v1484 = vpop.f32.mrb[0].mxu0
        %v1485 = vadd.f32 %v1321, %v1484
        %v1486 = vpop.f32.mrb[0].mxu0
        %v1487 = vadd.f32 %v1325, %v1486
        %1488 = vmatprep.mubr.f32.mxu0 0.0
        %1489 = vmatmul.mubr.f32.gmra.mrb[0].mxu0 %v262
        %v1490 = vpop.f32.mrb[0].mxu0
        %v1491 = vadd.f32 %v1321, %v1490
        %v1492 = vpop.f32.mrb[0].mxu0
        %v1493 = vadd.f32 %v1325, %v1492
        %1494 = vmatprep.mubr.f32.mxu0 0.0
        %1495 = vmatmul.mubr.f32.gmra.mrb[0].mxu0 %v263
        %v1496 = vpop.f32.mrb[0].mxu0
        %v1497 = vadd.f32 %v1321, %v1496
        %v1498 = vpop.f32.mrb[0].mxu0
        %v1499 = vadd.f32 %v1325, %v1498
        %1500 = vmatprep.mubr.f32.mxu0 0.0
        %1501 = vmatmul.mubr.f32.gmra.mrb[0].mxu0 %v264
        %v1502 = vpop.f32.mrb[0].mxu0
        %v1503 = vadd.f32 %v1321, %v1502
        %v1504 = vpop.f32.mrb[0].mxu0
        %v1505 = vadd.f32 %v1325, %v1504
        %1506 = vmatprep.mubr.f32.mxu0 0.0
        %1507 = vmatmul.mubr.f32.gmra.mrb[0].mxu0 %v265
        %v1508 = vpop.f32.mrb[0].mxu0
        %v1509 = vadd.f32 %v1321, %v1508
        %v1510 = vpop.f32.mrb[0].mxu0
        %v1511 = vadd.f32 %v1325, %v1510
        %1512 = vmatprep.mubr.f32.mxu0 0.0
        %1513 = vmatmul.mubr.f32.gmra.mrb[0].mxu0 %v266
        %v1514 = vpop.f32.mrb[0].mxu0
        %v1515 = vadd.f32 %v1321, %v1514
        %v1516 = vpop.f32.mrb[0].mxu0
        %v1517 = vadd.f32 %v1325, %v1516
        %1518 = vmatprep.mubr.f32.mxu0 0.0
        %1519 = vmatmul.mubr.f32.gmra.mrb[0].mxu0 %v267
        %v1520 = vpop.f32.mrb[0].mxu0
        %v1521 = vadd.f32 %v1321, %v1520
        %v1522 = vpop.f32.mrb[0].mxu0
        %v1523 = vadd.f32 %v1325, %v1522
        %1524 = vmatprep.mubr.f32.mxu0 0.0
        %1525 = vmatmul.mubr.f32.gmra.mrb[0].mxu0 %v268
        %v1526 = vpop.f32.mrb[0].mxu0
        %v1527 = vadd.f32 %v1321, %v1526
        %v1528 = vpop.f32.mrb[0].mxu0
        %v1529 = vadd.f32 %v1325, %v1528
        %1530 = vmatprep.mubr.f32.mxu0 0.0
        %1531 = vmatmul.mubr.f32.gmra.mrb[0].mxu0 %v269
        %v1532 = vpop.f32.mrb[0].mxu0
        %v1533 = vadd.f32 %v1321, %v1532
        %v1534 = vpop.f32.mrb[0].mxu0
        %v1535 = vadd.f32 %v1325, %v1534
        %1536 = vmatprep.mubr.f32.mxu0 0.0
        %1537 = vmatmul.mubr.f32.gmra.mrb[0].mxu0 %v270
        %v1538 = vpop.f32.mrb[0].mxu0
        %v1539 = vadd.f32 %v1321, %v1538
        %v1540 = vpop.f32.mrb[0].mxu0
        %v1541 = vadd.f32 %v1325, %v1540
        %1542 = vmatprep.mubr.f32.mxu0 0.0
        %1543 = vmatmul.mubr.f32.gmra.mrb[0].mxu0 %v271
        %v1544 = vpop.f32.mrb[0].mxu0
        %v1545 = vadd.f32 %v1321, %v1544
        %v1546 = vpop.f32.mrb[0].mxu0
        %v1547 = vadd.f32 %v1325, %v1546
        %1548 = vmatprep.mubr.f32.mxu0 0.0
        %1549 = vmatmul.mubr.f32.gmra.mrb[0].mxu0 %v272
        %v1550 = vpop.f32.mrb[0].mxu0
        %v1551 = vadd.f32 %v1321, %v1550
        %v1552 = vpop.f32.mrb[0].mxu0
        %v1553 = vadd.f32 %v1325, %v1552
        %1554 = vmatprep.mubr.f32.mxu0 0.0
        %1555 = vmatmul.mubr.f32.gmra.mrb[0].mxu0 %v273
        %v1556 = vpop.f32.mrb[0].mxu0
        %v1557 = vadd.f32 %v1321, %v1556
        %v1558 = vpop.f32.mrb[0].mxu0
        %v1559 = vadd.f32 %v1325, %v1558
        %1560 = vmatprep.mubr.f32.mxu0 0.0
        %1561 = vmatmul.mubr.f32.gmra.mrb[0].mxu0 %v274
        %v1562 = vpop.f32.mrb[0].mxu0
        %v1563 = vadd.f32 %v1321, %v1562
        %v1564 = vpop.f32.mrb[0].mxu0
        %v1565 = vadd.f32 %v1325, %v1564
        %1566 = vmatprep.mubr.f32.mxu0 0.0
        %1567 = vmatmul.mubr.f32.gmra.mrb[0].mxu0 %v275
        %v1568 = vpop.f32.mrb[0].mxu0
        %v1569 = vadd.f32 %v1321, %v1568
        %v1570 = vpop.f32.mrb[0].mxu0
        %v1571 = vadd.f32 %v1325, %v1570
        %1572 = vmatprep.mubr.f32.mxu0 0.0
        %1573 = vmatmul.mubr.f32.gmra.mrb[0].mxu0 %v276
        %v1574 = vpop.f32.mrb[0].mxu0
        %v1575 = vadd.f32 %v1321, %v1574
        %v1576 = vpop.f32.mrb[0].mxu0
        %v1577 = vadd.f32 %v1325, %v1576
        %1578 = vmatprep.mubr.f32.mxu0 0.0
        %1579 = vmatmul.mubr.f32.gmra.mrb[0].mxu0 %v277
        %v1580 = vpop.f32.mrb[0].mxu0
        %v1581 = vadd.f32 %v1321, %v1580
        %v1582 = vpop.f32.mrb[0].mxu0
        %v1583 = vadd.f32 %v1325, %v1582
        %1584 = vdwg.mxu0
        %v1585 = vmul.f32 %v1395, 0.5
        %v1586 = vmul.f32 %v1397, 0.5
        %v1587 = vmul.f32 %v1401, 0.5
        %v1588 = vmul.f32 %v1403, 0.5
        %v1589 = vmul.f32 %v1407, 0.5
        %v1590 = vmul.f32 %v1409, 0.5
        %v1591 = vmul.f32 %v1413, 0.5
        %v1592 = vmul.f32 %v1415, 0.5
        %v1593 = vmul.f32 %v1419, 0.5
        %v1594 = vmul.f32 %v1421, 0.5
        %v1595 = vmul.f32 %v1425, 0.5
        %v1596 = vmul.f32 %v1427, 0.5
        %v1597 = vmul.f32 %v1431, 0.5
        %v1598 = vmul.f32 %v1433, 0.5
        %v1599 = vmul.f32 %v1437, 0.5
        %v1600 = vmul.f32 %v1439, 0.5
        %v1601 = vmul.f32 %v1443, 0.5
        %v1602 = vmul.f32 %v1445, 0.5
        %v1603 = vmul.f32 %v1449, 0.5
        %v1604 = vmul.f32 %v1451, 0.5
        %v1605 = vmul.f32 %v1455, 0.5
        %v1606 = vmul.f32 %v1457, 0.5
        %v1607 = vmul.f32 %v1461, 0.5
        %v1608 = vmul.f32 %v1463, 0.5
        %v1609 = vmul.f32 %v1467, 0.5
        %v1610 = vmul.f32 %v1469, 0.5
        %v1611 = vmul.f32 %v1473, 0.5
        %v1612 = vmul.f32 %v1475, 0.5
        %v1613 = vmul.f32 %v1479, 0.5
        %v1614 = vmul.f32 %v1481, 0.5
        %v1615 = vmul.f32 %v1485, 0.5
        %v1616 = vmul.f32 %v1487, 0.5
        %v1617 = vmul.f32 %v1491, 0.5
        %v1618 = vmul.f32 %v1493, 0.5
        %v1619 = vmul.f32 %v1497, 0.5
        %v1620 = vmul.f32 %v1499, 0.5
        %v1621 = vmul.f32 %v1503, 0.5
        %v1622 = vmul.f32 %v1505, 0.5
        %v1623 = vmul.f32 %v1509, 0.5
        %v1624 = vmul.f32 %v1511, 0.5
        %v1625 = vmul.f32 %v1515, 0.5
        %v1626 = vmul.f32 %v1517, 0.5
        %v1627 = vmul.f32 %v1521, 0.5
        %v1628 = vmul.f32 %v1523, 0.5
        %v1629 = vmul.f32 %v1527, 0.5
        %v1630 = vmul.f32 %v1529, 0.5
        %v1631 = vmul.f32 %v1533, 0.5
        %v1632 = vmul.f32 %v1535, 0.5
        %v1633 = vmul.f32 %v1539, 0.5
        %v1634 = vmul.f32 %v1541, 0.5
        %v1635 = vmul.f32 %v1545, 0.5
        %v1636 = vmul.f32 %v1547, 0.5
        %v1637 = vmul.f32 %v1551, 0.5
        %v1638 = vmul.f32 %v1553, 0.5
        %v1639 = vmul.f32 %v1557, 0.5
        %v1640 = vmul.f32 %v1559, 0.5
        %v1641 = vmul.f32 %v1563, 0.5
        %v1642 = vmul.f32 %v1565, 0.5
        %v1643 = vmul.f32 %v1569, 0.5
        %v1644 = vmul.f32 %v1571, 0.5
        %v1645 = vmul.f32 %v1575, 0.5
        %v1646 = vmul.f32 %v1577, 0.5
        %v1647 = vmul.f32 %v1581, 0.5
        %v1648 = vmul.f32 %v1583, 0.5
        %v1649 = vmul.f32 %v1395, 0.70710677
        %v1650 = vmul.f32 %v1397, 0.70710677
        %v1651 = vmul.f32 %v1401, 0.70710677
        %v1652 = vmul.f32 %v1403, 0.70710677
        %v1653 = vmul.f32 %v1407, 0.70710677
        %v1654 = vmul.f32 %v1409, 0.70710677
        %v1655 = vmul.f32 %v1413, 0.70710677
        %v1656 = vmul.f32 %v1415, 0.70710677
        %v1657 = vmul.f32 %v1419, 0.70710677
        %v1658 = vmul.f32 %v1421, 0.70710677
        %v1659 = vmul.f32 %v1425, 0.70710677
        %v1660 = vmul.f32 %v1427, 0.70710677
        %v1661 = vmul.f32 %v1431, 0.70710677
        %v1662 = vmul.f32 %v1433, 0.70710677
        %v1663 = vmul.f32 %v1437, 0.70710677
        %v1664 = vmul.f32 %v1439, 0.70710677
        %v1665 = vmul.f32 %v1443, 0.70710677
        %v1666 = vmul.f32 %v1445, 0.70710677
        %v1667 = vmul.f32 %v1449, 0.70710677
        %v1668 = vmul.f32 %v1451, 0.70710677
        %v1669 = vmul.f32 %v1455, 0.70710677
        %v1670 = vmul.f32 %v1457, 0.70710677
        %v1671 = vmul.f32 %v1461, 0.70710677
        %v1672 = vmul.f32 %v1463, 0.70710677
        %v1673 = vmul.f32 %v1467, 0.70710677
        %v1674 = vmul.f32 %v1469, 0.70710677
        %v1675 = vmul.f32 %v1473, 0.70710677
        %v1676 = vmul.f32 %v1475, 0.70710677
        %v1677 = vmul.f32 %v1479, 0.70710677
        %v1678 = vmul.f32 %v1481, 0.70710677
        %v1679 = vmul.f32 %v1485, 0.70710677
        %v1680 = vmul.f32 %v1487, 0.70710677
        %v1681 = vmul.f32 %v1491, 0.70710677
        %v1682 = vmul.f32 %v1493, 0.70710677
        %v1683 = vmul.f32 %v1497, 0.70710677
        %v1684 = vmul.f32 %v1499, 0.70710677
        %v1685 = vmul.f32 %v1503, 0.70710677
        %v1686 = vmul.f32 %v1505, 0.70710677
        %v1687 = vmul.f32 %v1509, 0.70710677
        %v1688 = vmul.f32 %v1511, 0.70710677
        %v1689 = vmul.f32 %v1515, 0.70710677
        %v1690 = vmul.f32 %v1517, 0.70710677
        %v1691 = vmul.f32 %v1521, 0.70710677
        %v1692 = vmul.f32 %v1523, 0.70710677
        %v1693 = vmul.f32 %v1527, 0.70710677
        %v1694 = vmul.f32 %v1529, 0.70710677
        %v1695 = vmul.f32 %v1533, 0.70710677
        %v1696 = vmul.f32 %v1535, 0.70710677
        %v1697 = vmul.f32 %v1539, 0.70710677
        %v1698 = vmul.f32 %v1541, 0.70710677
        %v1699 = vmul.f32 %v1545, 0.70710677
        %v1700 = vmul.f32 %v1547, 0.70710677
        %v1701 = vmul.f32 %v1551, 0.70710677
        %v1702 = vmul.f32 %v1553, 0.70710677
        %v1703 = vmul.f32 %v1557, 0.70710677
        %v1704 = vmul.f32 %v1559, 0.70710677
        %v1705 = vmul.f32 %v1563, 0.70710677
        %v1706 = vmul.f32 %v1565, 0.70710677
        %v1707 = vmul.f32 %v1569, 0.70710677
        %v1708 = vmul.f32 %v1571, 0.70710677
        %v1709 = vmul.f32 %v1575, 0.70710677
        %v1710 = vmul.f32 %v1577, 0.70710677
        %v1711 = vmul.f32 %v1581, 0.70710677
        %v1712 = vmul.f32 %v1583, 0.70710677
        %v1713 = verf.f32.pop %v1649
        %v1714 = verf.f32.pop %v1650
        %v1715 = verf.f32.pop %v1651
        %v1716 = verf.f32.pop %v1652
        %v1717 = verf.f32.pop %v1653
        %v1718 = verf.f32.pop %v1654
        %v1719 = verf.f32.pop %v1655
        %v1720 = verf.f32.pop %v1656
        %v1721 = verf.f32.pop %v1657
        %v1722 = verf.f32.pop %v1658
        %v1723 = verf.f32.pop %v1659
        %v1724 = verf.f32.pop %v1660
        %v1725 = verf.f32.pop %v1661
        %v1726 = verf.f32.pop %v1662
        %v1727 = verf.f32.pop %v1663
        %v1728 = verf.f32.pop %v1664
        %v1729 = verf.f32.pop %v1665
        %v1730 = verf.f32.pop %v1666
        %v1731 = verf.f32.pop %v1667
        %v1732 = verf.f32.pop %v1668
        %v1733 = verf.f32.pop %v1669
        %v1734 = verf.f32.pop %v1670
        %v1735 = verf.f32.pop %v1671
        %v1736 = verf.f32.pop %v1672
        %v1737 = verf.f32.pop %v1673
        %v1738 = verf.f32.pop %v1674
        %v1739 = verf.f32.pop %v1675
        %v1740 = verf.f32.pop %v1676
        %v1741 = verf.f32.pop %v1677
        %v1742 = verf.f32.pop %v1678
        %v1743 = verf.f32.pop %v1679
        %v1744 = verf.f32.pop %v1680
        %v1745 = verf.f32.pop %v1681
        %v1746 = verf.f32.pop %v1682
        %v1747 = verf.f32.pop %v1683
        %v1748 = verf.f32.pop %v1684
        %v1749 = verf.f32.pop %v1685
        %v1750 = verf.f32.pop %v1686
        %v1751 = verf.f32.pop %v1687
        %v1752 = verf.f32.pop %v1688
        %v1753 = verf.f32.pop %v1689
        %v1754 = verf.f32.pop %v1690
        %v1755 = verf.f32.pop %v1691
        %v1756 = verf.f32.pop %v1692
        %v1757 = verf.f32.pop %v1693
        %v1758 = verf.f32.pop %v1694
        %v1759 = verf.f32.pop %v1695
        %v1760 = verf.f32.pop %v1696
        %v1761 = verf.f32.pop %v1697
        %v1762 = verf.f32.pop %v1698
        %v1763 = verf.f32.pop %v1699
        %v1764 = verf.f32.pop %v1700
        %v1765 = verf.f32.pop %v1701
        %v1766 = verf.f32.pop %v1702
        %v1767 = verf.f32.pop %v1703
        %v1768 = verf.f32.pop %v1704
        %v1769 = verf.f32.pop %v1705
        %v1770 = verf.f32.pop %v1706
        %v1771 = verf.f32.pop %v1707
        %v1772 = verf.f32.pop %v1708
        %v1773 = verf.f32.pop %v1709
        %v1774 = verf.f32.pop %v1710
        %v1775 = verf.f32.pop %v1711
        %v1776 = verf.f32.pop %v1712
        %v1777 = vadd.f32 %v1713, 1.0
        %v1778 = vadd.f32 %v1714, 1.0
        %v1779 = vadd.f32 %v1715, 1.0
        %v1780 = vadd.f32 %v1716, 1.0
        %v1781 = vadd.f32 %v1717, 1.0
        %v1782 = vadd.f32 %v1718, 1.0
        %v1783 = vadd.f32 %v1719, 1.0
        %v1784 = vadd.f32 %v1720, 1.0
        %v1785 = vadd.f32 %v1721, 1.0
        %v1786 = vadd.f32 %v1722, 1.0
        %v1787 = vadd.f32 %v1723, 1.0
        %v1788 = vadd.f32 %v1724, 1.0
        %v1789 = vadd.f32 %v1725, 1.0
        %v1790 = vadd.f32 %v1726, 1.0
        %v1791 = vadd.f32 %v1727, 1.0
        %v1792 = vadd.f32 %v1728, 1.0
        %v1793 = vadd.f32 %v1729, 1.0
        %v1794 = vadd.f32 %v1730, 1.0
        %v1795 = vadd.f32 %v1731, 1.0
        %v1796 = vadd.f32 %v1732, 1.0
        %v1797 = vadd.f32 %v1733, 1.0
        %v1798 = vadd.f32 %v1734, 1.0
        %v1799 = vadd.f32 %v1735, 1.0
        %v1800 = vadd.f32 %v1736, 1.0
        %v1801 = vadd.f32 %v1737, 1.0
        %v1802 = vadd.f32 %v1738, 1.0
        %v1803 = vadd.f32 %v1739, 1.0
        %v1804 = vadd.f32 %v1740, 1.0
        %v1805 = vadd.f32 %v1741, 1.0
        %v1806 = vadd.f32 %v1742, 1.0
        %v1807 = vadd.f32 %v1743, 1.0
        %v1808 = vadd.f32 %v1744, 1.0
        %v1809 = vadd.f32 %v1745, 1.0
        %v1810 = vadd.f32 %v1746, 1.0
        %v1811 = vadd.f32 %v1747, 1.0
        %v1812 = vadd.f32 %v1748, 1.0
        %v1813 = vadd.f32 %v1749, 1.0
        %v1814 = vadd.f32 %v1750, 1.0
        %v1815 = vadd.f32 %v1751, 1.0
        %v1816 = vadd.f32 %v1752, 1.0
        %v1817 = vadd.f32 %v1753, 1.0
        %v1818 = vadd.f32 %v1754, 1.0
        %v1819 = vadd.f32 %v1755, 1.0
        %v1820 = vadd.f32 %v1756, 1.0
        %v1821 = vadd.f32 %v1757, 1.0
        %v1822 = vadd.f32 %v1758, 1.0
        %v1823 = vadd.f32 %v1759, 1.0
        %v1824 = vadd.f32 %v1760, 1.0
        %v1825 = vadd.f32 %v1761, 1.0
        %v1826 = vadd.f32 %v1762, 1.0
        %v1827 = vadd.f32 %v1763, 1.0
        %v1828 = vadd.f32 %v1764, 1.0
        %v1829 = vadd.f32 %v1765, 1.0
        %v1830 = vadd.f32 %v1766, 1.0
        %v1831 = vadd.f32 %v1767, 1.0
        %v1832 = vadd.f32 %v1768, 1.0
        %v1833 = vadd.f32 %v1769, 1.0
        %v1834 = vadd.f32 %v1770, 1.0
        %v1835 = vadd.f32 %v1771, 1.0
        %v1836 = vadd.f32 %v1772, 1.0
        %v1837 = vadd.f32 %v1773, 1.0
        %v1838 = vadd.f32 %v1774, 1.0
        %v1839 = vadd.f32 %v1775, 1.0
        %v1840 = vadd.f32 %v1776, 1.0
        %v1841 = vmul.f32 %v1585, %v1777
        %v1842 = vmul.f32 %v1586, %v1778
        %v1843 = vmul.f32 %v1587, %v1779
        %v1844 = vmul.f32 %v1588, %v1780
        %v1845 = vmul.f32 %v1589, %v1781
        %v1846 = vmul.f32 %v1590, %v1782
        %v1847 = vmul.f32 %v1591, %v1783
        %v1848 = vmul.f32 %v1592, %v1784
        %v1849 = vmul.f32 %v1593, %v1785
        %v1850 = vmul.f32 %v1594, %v1786
        %v1851 = vmul.f32 %v1595, %v1787
        %v1852 = vmul.f32 %v1596, %v1788
        %v1853 = vmul.f32 %v1597, %v1789
        %v1854 = vmul.f32 %v1598, %v1790
        %v1855 = vmul.f32 %v1599, %v1791
        %v1856 = vmul.f32 %v1600, %v1792
        %v1857 = vmul.f32 %v1601, %v1793
        %v1858 = vmul.f32 %v1602, %v1794
        %v1859 = vmul.f32 %v1603, %v1795
        %v1860 = vmul.f32 %v1604, %v1796
        %v1861 = vmul.f32 %v1605, %v1797
        %v1862 = vmul.f32 %v1606, %v1798
        %v1863 = vmul.f32 %v1607, %v1799
        %v1864 = vmul.f32 %v1608, %v1800
        %v1865 = vmul.f32 %v1609, %v1801
        %v1866 = vmul.f32 %v1610, %v1802
        %v1867 = vmul.f32 %v1611, %v1803
        %v1868 = vmul.f32 %v1612, %v1804
        %v1869 = vmul.f32 %v1613, %v1805
        %v1870 = vmul.f32 %v1614, %v1806
        %v1871 = vmul.f32 %v1615, %v1807
        %v1872 = vmul.f32 %v1616, %v1808
        %v1873 = vmul.f32 %v1617, %v1809
        %v1874 = vmul.f32 %v1618, %v1810
        %v1875 = vmul.f32 %v1619, %v1811
        %v1876 = vmul.f32 %v1620, %v1812
        %v1877 = vmul.f32 %v1621, %v1813
        %v1878 = vmul.f32 %v1622, %v1814
        %v1879 = vmul.f32 %v1623, %v1815
        %v1880 = vmul.f32 %v1624, %v1816
        %v1881 = vmul.f32 %v1625, %v1817
        %v1882 = vmul.f32 %v1626, %v1818
        %v1883 = vmul.f32 %v1627, %v1819
        %v1884 = vmul.f32 %v1628, %v1820
        %v1885 = vmul.f32 %v1629, %v1821
        %v1886 = vmul.f32 %v1630, %v1822
        %v1887 = vmul.f32 %v1631, %v1823
        %v1888 = vmul.f32 %v1632, %v1824
        %v1889 = vmul.f32 %v1633, %v1825
        %v1890 = vmul.f32 %v1634, %v1826
        %v1891 = vmul.f32 %v1635, %v1827
        %v1892 = vmul.f32 %v1636, %v1828
        %v1893 = vmul.f32 %v1637, %v1829
        %v1894 = vmul.f32 %v1638, %v1830
        %v1895 = vmul.f32 %v1639, %v1831
        %v1896 = vmul.f32 %v1640, %v1832
        %v1897 = vmul.f32 %v1641, %v1833
        %v1898 = vmul.f32 %v1642, %v1834
        %v1899 = vmul.f32 %v1643, %v1835
        %v1900 = vmul.f32 %v1644, %v1836
        %v1901 = vmul.f32 %v1645, %v1837
        %v1902 = vmul.f32 %v1646, %v1838
        %v1903 = vmul.f32 %v1647, %v1839
        %v1904 = vmul.f32 %v1648, %v1840
        %v1905 = vld [vmem:[#allocation2] sm:$0xff]
        %v1906 = vld [vmem:[#allocation2 + $0x8] sm:$0xff]
        %v1907 = vld [vmem:[#allocation2 + $0x10] sm:$0xff]
        %v1908 = vld [vmem:[#allocation2 + $0x18] sm:$0xff]
        %v1909 = vld [vmem:[#allocation2 + $0x20] sm:$0xff]
        %v1910 = vld [vmem:[#allocation2 + $0x28] sm:$0xff]
        %v1911 = vld [vmem:[#allocation2 + $0x30] sm:$0xff]
        %v1912 = vld [vmem:[#allocation2 + $0x38] sm:$0xff]
        %v1913 = vld [vmem:[#allocation2 + $0x40] sm:$0xff]
        %v1914 = vld [vmem:[#allocation2 + $0x48] sm:$0xff]
        %v1915 = vld [vmem:[#allocation2 + $0x50] sm:$0xff]
        %v1916 = vld [vmem:[#allocation2 + $0x58] sm:$0xff]
        %v1917 = vld [vmem:[#allocation2 + $0x60] sm:$0xff]
        %v1918 = vld [vmem:[#allocation2 + $0x68] sm:$0xff]
        %v1919 = vld [vmem:[#allocation2 + $0x70] sm:$0xff]
        %v1920 = vld [vmem:[#allocation2 + $0x78] sm:$0xff]
        %v1921 = vld [vmem:[#allocation2 + $0x80] sm:$0xff]
        %v1922 = vld [vmem:[#allocation2 + $0x88] sm:$0xff]
        %v1923 = vld [vmem:[#allocation2 + $0x90] sm:$0xff]
        %v1924 = vld [vmem:[#allocation2 + $0x98] sm:$0xff]
        %v1925 = vld [vmem:[#allocation2 + $0xa0] sm:$0xff]
        %v1926 = vld [vmem:[#allocation2 + $0xa8] sm:$0xff]
        %v1927 = vld [vmem:[#allocation2 + $0xb0] sm:$0xff]
        %v1928 = vld [vmem:[#allocation2 + $0xb8] sm:$0xff]
        %v1929 = vld [vmem:[#allocation2 + $0xc0] sm:$0xff]
        %v1930 = vld [vmem:[#allocation2 + $0xc8] sm:$0xff]
        %v1931 = vld [vmem:[#allocation2 + $0xd0] sm:$0xff]
        %v1932 = vld [vmem:[#allocation2 + $0xd8] sm:$0xff]
        %v1933 = vld [vmem:[#allocation2 + $0xe0] sm:$0xff]
        %v1934 = vld [vmem:[#allocation2 + $0xe8] sm:$0xff]
        %v1935 = vld [vmem:[#allocation2 + $0xf0] sm:$0xff]
        %v1936 = vld [vmem:[#allocation2 + $0xf8] sm:$0xff]
        %v1937 = vld [vmem:[%s3 + $0x100] sm:$0xff]
        %v1938 = vld [vmem:[%s3 + $0x108] sm:$0xff]
        %v1939 = vld [vmem:[%s3 + $0x110] sm:$0xff]
        %v1940 = vld [vmem:[%s3 + $0x118] sm:$0xff]
        %v1941 = vld [vmem:[%s3 + $0x120] sm:$0xff]
        %v1942 = vld [vmem:[%s3 + $0x128] sm:$0xff]
        %v1943 = vld [vmem:[%s3 + $0x130] sm:$0xff]
        %v1944 = vld [vmem:[%s3 + $0x138] sm:$0xff]
        %v1945 = vld [vmem:[%s3 + $0x140] sm:$0xff]
        %v1946 = vld [vmem:[%s3 + $0x148] sm:$0xff]
        %v1947 = vld [vmem:[%s3 + $0x150] sm:$0xff]
        %v1948 = vld [vmem:[%s3 + $0x158] sm:$0xff]
        %v1949 = vld [vmem:[%s3 + $0x160] sm:$0xff]
        %v1950 = vld [vmem:[%s3 + $0x168] sm:$0xff]
        %v1951 = vld [vmem:[%s3 + $0x170] sm:$0xff]
        %v1952 = vld [vmem:[%s3 + $0x178] sm:$0xff]
        %v1953 = vld [vmem:[%s3 + $0x180] sm:$0xff]
        %v1954 = vld [vmem:[%s3 + $0x188] sm:$0xff]
        %v1955 = vld [vmem:[%s3 + $0x190] sm:$0xff]
        %v1956 = vld [vmem:[%s3 + $0x198] sm:$0xff]
        %v1957 = vld [vmem:[%s3 + $0x1a0] sm:$0xff]
        %v1958 = vld [vmem:[%s3 + $0x1a8] sm:$0xff]
        %v1959 = vld [vmem:[%s3 + $0x1b0] sm:$0xff]
        %v1960 = vld [vmem:[%s3 + $0x1b8] sm:$0xff]
        %v1961 = vld [vmem:[%s3 + $0x1c0] sm:$0xff]
        %v1962 = vld [vmem:[%s3 + $0x1c8] sm:$0xff]
        %v1963 = vld [vmem:[%s3 + $0x1d0] sm:$0xff]
        %v1964 = vld [vmem:[%s3 + $0x1d8] sm:$0xff]
        %v1965 = vld [vmem:[%s3 + $0x1e0] sm:$0xff]
        %v1966 = vld [vmem:[%s3 + $0x1e8] sm:$0xff]
        %v1967 = vld [vmem:[%s3 + $0x1f0] sm:$0xff]
        %v1968 = vld [vmem:[%s3 + $0x1f8] sm:$0xff]
        %1969 = vmatprep.subr.mxu0 0.0
        %1970 = vmatpush1.msra.mxu0 %v1937
        %1971 = vmatprep.subr.mxu0 0.0
        %1972 = vmatpush1.msra.mxu0 %v1938
        %1973 = vmatprep.subr.mxu0 0.0
        %1974 = vmatpush1.msra.mxu0 %v1939
        %1975 = vmatprep.subr.mxu0 0.0
        %1976 = vmatpush1.msra.mxu0 %v1940
        %1977 = vmatprep.subr.mxu0 0.0
        %1978 = vmatpush1.msra.mxu0 %v1941
        %1979 = vmatprep.subr.mxu0 0.0
        %1980 = vmatpush1.msra.mxu0 %v1942
        %1981 = vmatprep.subr.mxu0 0.0
        %1982 = vmatpush1.msra.mxu0 %v1943
        %1983 = vmatprep.subr.mxu0 0.0
        %1984 = vmatpush1.msra.mxu0 %v1944
        %1985 = vmatprep.subr.mxu0 0.0
        %1986 = vmatpush1.msra.mxu0 %v1945
        %1987 = vmatprep.subr.mxu0 0.0
        %1988 = vmatpush1.msra.mxu0 %v1946
        %1989 = vmatprep.subr.mxu0 0.0
        %1990 = vmatpush1.msra.mxu0 %v1947
        %1991 = vmatprep.subr.mxu0 0.0
        %1992 = vmatpush1.msra.mxu0 %v1948
        %1993 = vmatprep.subr.mxu0 0.0
        %1994 = vmatpush1.msra.mxu0 %v1949
        %1995 = vmatprep.subr.mxu0 0.0
        %1996 = vmatpush1.msra.mxu0 %v1950
        %1997 = vmatprep.subr.mxu0 0.0
        %1998 = vmatpush1.msra.mxu0 %v1951
        %1999 = vmatprep.subr.mxu0 0.0
        %2000 = vmatpush1.msra.mxu0 %v1952
        %2001 = vmatprep.subr.mxu0 0.0
        %2002 = vmatpush1.msra.mxu0 %v1953
        %2003 = vmatprep.subr.mxu0 0.0
        %2004 = vmatpush1.msra.mxu0 %v1954
        %2005 = vmatprep.subr.mxu0 0.0
        %2006 = vmatpush1.msra.mxu0 %v1955
        %2007 = vmatprep.subr.mxu0 0.0
        %2008 = vmatpush1.msra.mxu0 %v1956
        %2009 = vmatprep.subr.mxu0 0.0
        %2010 = vmatpush1.msra.mxu0 %v1957
        %2011 = vmatprep.subr.mxu0 0.0
        %2012 = vmatpush1.msra.mxu0 %v1958
        %2013 = vmatprep.subr.mxu0 0.0
        %2014 = vmatpush1.msra.mxu0 %v1959
        %2015 = vmatprep.subr.mxu0 0.0
        %2016 = vmatpush1.msra.mxu0 %v1960
        %2017 = vmatprep.subr.mxu0 0.0
        %2018 = vmatpush1.msra.mxu0 %v1961
        %2019 = vmatprep.subr.mxu0 0.0
        %2020 = vmatpush1.msra.mxu0 %v1962
        %2021 = vmatprep.subr.mxu0 0.0
        %2022 = vmatpush1.msra.mxu0 %v1963
        %2023 = vmatprep.subr.mxu0 0.0
        %2024 = vmatpush1.msra.mxu0 %v1964
        %2025 = vmatprep.subr.mxu0 0.0
        %2026 = vmatpush1.msra.mxu0 %v1965
        %2027 = vmatprep.subr.mxu0 0.0
        %2028 = vmatpush1.msra.mxu0 %v1966
        %2029 = vmatprep.subr.mxu0 0.0
        %2030 = vmatpush1.msra.mxu0 %v1967
        %2031 = vmatprep.subr.mxu0 0.0
        %2032 = vmatpush1.msra.mxu0 %v1968
        %2033 = vmatprep.mubr.f32.mxu0 %v1842
        %2034 = vmatmul.mubr.f32.gmra.mrb[0].mxu0 %v1841
        %v2035 = vpop.f32.mrb[0].mxu0
        %v2036 = vadd.f32 0.0, %v2035
        %v2037 = vpop.f32.mrb[0].mxu0
        %2038 = vmatprep.mubr.f32.mxu0 %v1844
        %2039 = vmatmul.mubr.f32.gmra.mrb[0].mxu0 %v1843
        %v2040 = vpop.f32.mrb[0].mxu0
        %v2041 = vadd.f32 0.0, %v2040
        %v2042 = vpop.f32.mrb[0].mxu0
        %2043 = vmatprep.mubr.f32.mxu0 %v1846
        %2044 = vmatmul.mubr.f32.gmra.mrb[0].mxu0 %v1845
        %v2045 = vpop.f32.mrb[0].mxu0
        %v2046 = vadd.f32 0.0, %v2045
        %v2047 = vpop.f32.mrb[0].mxu0
        %2048 = vmatprep.mubr.f32.mxu0 %v1848
        %2049 = vmatmul.mubr.f32.gmra.mrb[0].mxu0 %v1847
        %v2050 = vpop.f32.mrb[0].mxu0
        %v2051 = vadd.f32 0.0, %v2050
        %v2052 = vpop.f32.mrb[0].mxu0
        %2053 = vmatprep.mubr.f32.mxu0 %v1850
        %2054 = vmatmul.mubr.f32.gmra.mrb[0].mxu0 %v1849
        %v2055 = vpop.f32.mrb[0].mxu0
        %v2056 = vadd.f32 0.0, %v2055
        %v2057 = vpop.f32.mrb[0].mxu0
        %2058 = vmatprep.mubr.f32.mxu0 %v1852
        %2059 = vmatmul.mubr.f32.gmra.mrb[0].mxu0 %v1851
        %v2060 = vpop.f32.mrb[0].mxu0
        %v2061 = vadd.f32 0.0, %v2060
        %v2062 = vpop.f32.mrb[0].mxu0
        %2063 = vmatprep.mubr.f32.mxu0 %v1854
        %2064 = vmatmul.mubr.f32.gmra.mrb[0].mxu0 %v1853
        %v2065 = vpop.f32.mrb[0].mxu0
        %v2066 = vadd.f32 0.0, %v2065
        %v2067 = vpop.f32.mrb[0].mxu0
        %2068 = vmatprep.mubr.f32.mxu0 %v1856
        %2069 = vmatmul.mubr.f32.gmra.mrb[0].mxu0 %v1855
        %v2070 = vpop.f32.mrb[0].mxu0
        %v2071 = vadd.f32 0.0, %v2070
        %v2072 = vpop.f32.mrb[0].mxu0
        %2073 = vmatprep.mubr.f32.mxu0 %v1858
        %2074 = vmatmul.mubr.f32.gmra.mrb[0].mxu0 %v1857
        %v2075 = vpop.f32.mrb[0].mxu0
        %v2076 = vadd.f32 0.0, %v2075
        %v2077 = vpop.f32.mrb[0].mxu0
        %2078 = vmatprep.mubr.f32.mxu0 %v1860
        %2079 = vmatmul.mubr.f32.gmra.mrb[0].mxu0 %v1859
        %v2080 = vpop.f32.mrb[0].mxu0
        %v2081 = vadd.f32 0.0, %v2080
        %v2082 = vpop.f32.mrb[0].mxu0
        %2083 = vmatprep.mubr.f32.mxu0 %v1862
        %2084 = vmatmul.mubr.f32.gmra.mrb[0].mxu0 %v1861
        %v2085 = vpop.f32.mrb[0].mxu0
        %v2086 = vadd.f32 0.0, %v2085
        %v2087 = vpop.f32.mrb[0].mxu0
        %2088 = vmatprep.mubr.f32.mxu0 %v1864
        %2089 = vmatmul.mubr.f32.gmra.mrb[0].mxu0 %v1863
        %v2090 = vpop.f32.mrb[0].mxu0
        %v2091 = vadd.f32 0.0, %v2090
        %v2092 = vpop.f32.mrb[0].mxu0
        %2093 = vmatprep.mubr.f32.mxu0 %v1866
        %2094 = vmatmul.mubr.f32.gmra.mrb[0].mxu0 %v1865
        %v2095 = vpop.f32.mrb[0].mxu0
        %v2096 = vadd.f32 0.0, %v2095
        %v2097 = vpop.f32.mrb[0].mxu0
        %2098 = vmatprep.mubr.f32.mxu0 %v1868
        %2099 = vmatmul.mubr.f32.gmra.mrb[0].mxu0 %v1867
        %v2100 = vpop.f32.mrb[0].mxu0
        %v2101 = vadd.f32 0.0, %v2100
        %v2102 = vpop.f32.mrb[0].mxu0
        %2103 = vmatprep.mubr.f32.mxu0 %v1870
        %2104 = vmatmul.mubr.f32.gmra.mrb[0].mxu0 %v1869
        %v2105 = vpop.f32.mrb[0].mxu0
        %v2106 = vadd.f32 0.0, %v2105
        %v2107 = vpop.f32.mrb[0].mxu0
        %2108 = vmatprep.mubr.f32.mxu0 %v1872
        %2109 = vmatmul.mubr.f32.gmra.mrb[0].mxu0 %v1871
        %v2110 = vpop.f32.mrb[0].mxu0
        %v2111 = vadd.f32 0.0, %v2110
        %v2112 = vpop.f32.mrb[0].mxu0
        %2113 = vmatprep.mubr.f32.mxu0 %v1874
        %2114 = vmatmul.mubr.f32.gmra.mrb[0].mxu0 %v1873
        %v2115 = vpop.f32.mrb[0].mxu0
        %v2116 = vadd.f32 0.0, %v2115
        %v2117 = vpop.f32.mrb[0].mxu0
        %2118 = vmatprep.mubr.f32.mxu0 %v1876
        %2119 = vmatmul.mubr.f32.gmra.mrb[0].mxu0 %v1875
        %v2120 = vpop.f32.mrb[0].mxu0
        %v2121 = vadd.f32 0.0, %v2120
        %v2122 = vpop.f32.mrb[0].mxu0
        %2123 = vmatprep.mubr.f32.mxu0 %v1878
        %2124 = vmatmul.mubr.f32.gmra.mrb[0].mxu0 %v1877
        %v2125 = vpop.f32.mrb[0].mxu0
        %v2126 = vadd.f32 0.0, %v2125
        %v2127 = vpop.f32.mrb[0].mxu0
        %2128 = vmatprep.mubr.f32.mxu0 %v1880
        %2129 = vmatmul.mubr.f32.gmra.mrb[0].mxu0 %v1879
        %v2130 = vpop.f32.mrb[0].mxu0
        %v2131 = vadd.f32 0.0, %v2130
        %v2132 = vpop.f32.mrb[0].mxu0
        %2133 = vmatprep.mubr.f32.mxu0 %v1882
        %2134 = vmatmul.mubr.f32.gmra.mrb[0].mxu0 %v1881
        %v2135 = vpop.f32.mrb[0].mxu0
        %v2136 = vadd.f32 0.0, %v2135
        %v2137 = vpop.f32.mrb[0].mxu0
        %2138 = vmatprep.mubr.f32.mxu0 %v1884
        %2139 = vmatmul.mubr.f32.gmra.mrb[0].mxu0 %v1883
        %v2140 = vpop.f32.mrb[0].mxu0
        %v2141 = vadd.f32 0.0, %v2140
        %v2142 = vpop.f32.mrb[0].mxu0
        %2143 = vmatprep.mubr.f32.mxu0 %v1886
        %2144 = vmatmul.mubr.f32.gmra.mrb[0].mxu0 %v1885
        %v2145 = vpop.f32.mrb[0].mxu0
        %v2146 = vadd.f32 0.0, %v2145
        %v2147 = vpop.f32.mrb[0].mxu0
        %2148 = vmatprep.mubr.f32.mxu0 %v1888
        %2149 = vmatmul.mubr.f32.gmra.mrb[0].mxu0 %v1887
        %v2150 = vpop.f32.mrb[0].mxu0
        %v2151 = vadd.f32 0.0, %v2150
        %v2152 = vpop.f32.mrb[0].mxu0
        %2153 = vmatprep.mubr.f32.mxu0 %v1890
        %2154 = vmatmul.mubr.f32.gmra.mrb[0].mxu0 %v1889
        %v2155 = vpop.f32.mrb[0].mxu0
        %v2156 = vadd.f32 0.0, %v2155
        %v2157 = vpop.f32.mrb[0].mxu0
        %2158 = vmatprep.mubr.f32.mxu0 %v1892
        %2159 = vmatmul.mubr.f32.gmra.mrb[0].mxu0 %v1891
        %v2160 = vpop.f32.mrb[0].mxu0
        %v2161 = vadd.f32 0.0, %v2160
        %v2162 = vpop.f32.mrb[0].mxu0
        %2163 = vmatprep.mubr.f32.mxu0 %v1894
        %2164 = vmatmul.mubr.f32.gmra.mrb[0].mxu0 %v1893
        %v2165 = vpop.f32.mrb[0].mxu0
        %v2166 = vadd.f32 0.0, %v2165
        %v2167 = vpop.f32.mrb[0].mxu0
        %2168 = vmatprep.mubr.f32.mxu0 %v1896
        %2169 = vmatmul.mubr.f32.gmra.mrb[0].mxu0 %v1895
        %v2170 = vpop.f32.mrb[0].mxu0
        %v2171 = vadd.f32 0.0, %v2170
        %v2172 = vpop.f32.mrb[0].mxu0
        %2173 = vmatprep.mubr.f32.mxu0 %v1898
        %2174 = vmatmul.mubr.f32.gmra.mrb[0].mxu0 %v1897
        %v2175 = vpop.f32.mrb[0].mxu0
        %v2176 = vadd.f32 0.0, %v2175
        %v2177 = vpop.f32.mrb[0].mxu0
        %2178 = vmatprep.mubr.f32.mxu0 %v1900
        %2179 = vmatmul.mubr.f32.gmra.mrb[0].mxu0 %v1899
        %v2180 = vpop.f32.mrb[0].mxu0
        %v2181 = vadd.f32 0.0, %v2180
        %v2182 = vpop.f32.mrb[0].mxu0
        %2183 = vmatprep.mubr.f32.mxu0 %v1902
        %2184 = vmatmul.mubr.f32.gmra.mrb[0].mxu0 %v1901
        %v2185 = vpop.f32.mrb[0].mxu0
        %v2186 = vadd.f32 0.0, %v2185
        %v2187 = vpop.f32.mrb[0].mxu0
        %2188 = vmatprep.mubr.f32.mxu0 %v1904
        %2189 = vmatmul.mubr.f32.gmra.mrb[0].mxu0 %v1903
        %v2190 = vpop.f32.mrb[0].mxu0
        %v2191 = vadd.f32 0.0, %v2190
        %v2192 = vpop.f32.mrb[0].mxu0
        %2193 = vdwg.mxu0
        %v2194 = vadd.f32 %v1905, %v2036
        %v2195 = vadd.f32 %v1906, %v2041
        %v2196 = vadd.f32 %v1907, %v2046
        %v2197 = vadd.f32 %v1908, %v2051
        %v2198 = vadd.f32 %v1909, %v2056
        %v2199 = vadd.f32 %v1910, %v2061
        %v2200 = vadd.f32 %v1911, %v2066
        %v2201 = vadd.f32 %v1912, %v2071
        %v2202 = vadd.f32 %v1913, %v2076
        %v2203 = vadd.f32 %v1914, %v2081
        %v2204 = vadd.f32 %v1915, %v2086
        %v2205 = vadd.f32 %v1916, %v2091
        %v2206 = vadd.f32 %v1917, %v2096
        %v2207 = vadd.f32 %v1918, %v2101
        %v2208 = vadd.f32 %v1919, %v2106
        %v2209 = vadd.f32 %v1920, %v2111
        %v2210 = vadd.f32 %v1921, %v2116
        %v2211 = vadd.f32 %v1922, %v2121
        %v2212 = vadd.f32 %v1923, %v2126
        %v2213 = vadd.f32 %v1924, %v2131
        %v2214 = vadd.f32 %v1925, %v2136
        %v2215 = vadd.f32 %v1926, %v2141
        %v2216 = vadd.f32 %v1927, %v2146
        %v2217 = vadd.f32 %v1928, %v2151
        %v2218 = vadd.f32 %v1929, %v2156
        %v2219 = vadd.f32 %v1930, %v2161
        %v2220 = vadd.f32 %v1931, %v2166
        %v2221 = vadd.f32 %v1932, %v2171
        %v2222 = vadd.f32 %v1933, %v2176
        %v2223 = vadd.f32 %v1934, %v2181
        %v2224 = vadd.f32 %v1935, %v2186
        %v2225 = vadd.f32 %v1936, %v2191
        %2226 = vst [vmem:[#allocation2] sm:$0xff] %v2194
        %2227 = vst [vmem:[#allocation2 + $0x8] sm:$0xff] %v2195
        %2228 = vst [vmem:[#allocation2 + $0x10] sm:$0xff] %v2196
        %2229 = vst [vmem:[#allocation2 + $0x18] sm:$0xff] %v2197
        %2230 = vst [vmem:[#allocation2 + $0x20] sm:$0xff] %v2198
        %2231 = vst [vmem:[#allocation2 + $0x28] sm:$0xff] %v2199
        %2232 = vst [vmem:[#allocation2 + $0x30] sm:$0xff] %v2200
        %2233 = vst [vmem:[#allocation2 + $0x38] sm:$0xff] %v2201
        %2234 = vst [vmem:[#allocation2 + $0x40] sm:$0xff] %v2202
        %2235 = vst [vmem:[#allocation2 + $0x48] sm:$0xff] %v2203
        %2236 = vst [vmem:[#allocation2 + $0x50] sm:$0xff] %v2204
        %2237 = vst [vmem:[#allocation2 + $0x58] sm:$0xff] %v2205
        %2238 = vst [vmem:[#allocation2 + $0x60] sm:$0xff] %v2206
        %2239 = vst [vmem:[#allocation2 + $0x68] sm:$0xff] %v2207
        %2240 = vst [vmem:[#allocation2 + $0x70] sm:$0xff] %v2208
        %2241 = vst [vmem:[#allocation2 + $0x78] sm:$0xff] %v2209
        %2242 = vst [vmem:[#allocation2 + $0x80] sm:$0xff] %v2210
        %2243 = vst [vmem:[#allocation2 + $0x88] sm:$0xff] %v2211
        %2244 = vst [vmem:[#allocation2 + $0x90] sm:$0xff] %v2212
        %2245 = vst [vmem:[#allocation2 + $0x98] sm:$0xff] %v2213
        %2246 = vst [vmem:[#allocation2 + $0xa0] sm:$0xff] %v2214
        %2247 = vst [vmem:[#allocation2 + $0xa8] sm:$0xff] %v2215
        %2248 = vst [vmem:[#allocation2 + $0xb0] sm:$0xff] %v2216
        %2249 = vst [vmem:[#allocation2 + $0xb8] sm:$0xff] %v2217
        %2250 = vst [vmem:[#allocation2 + $0xc0] sm:$0xff] %v2218
        %2251 = vst [vmem:[#allocation2 + $0xc8] sm:$0xff] %v2219
        %2252 = vst [vmem:[#allocation2 + $0xd0] sm:$0xff] %v2220
        %2253 = vst [vmem:[#allocation2 + $0xd8] sm:$0xff] %v2221
        %2254 = vst [vmem:[#allocation2 + $0xe0] sm:$0xff] %v2222
        %2255 = vst [vmem:[#allocation2 + $0xe8] sm:$0xff] %v2223
        %2256 = vst [vmem:[#allocation2 + $0xf0] sm:$0xff] %v2224
        %2257 = vst [vmem:[#allocation2 + $0xf8] sm:$0xff] %v2225
        %v2258 = vld [vmem:[#allocation2] sm:$0xff]
        %v2259 = vld [vmem:[#allocation2 + $0x8] sm:$0xff]
        %v2260 = vld [vmem:[#allocation2 + $0x10] sm:$0xff]
        %v2261 = vld [vmem:[#allocation2 + $0x18] sm:$0xff]
        %v2262 = vld [vmem:[#allocation2 + $0x20] sm:$0xff]
        %v2263 = vld [vmem:[#allocation2 + $0x28] sm:$0xff]
        %v2264 = vld [vmem:[#allocation2 + $0x30] sm:$0xff]
        %v2265 = vld [vmem:[#allocation2 + $0x38] sm:$0xff]
        %v2266 = vld [vmem:[#allocation2 + $0x40] sm:$0xff]
        %v2267 = vld [vmem:[#allocation2 + $0x48] sm:$0xff]
        %v2268 = vld [vmem:[#allocation2 + $0x50] sm:$0xff]
        %v2269 = vld [vmem:[#allocation2 + $0x58] sm:$0xff]
        %v2270 = vld [vmem:[#allocation2 + $0x60] sm:$0xff]
        %v2271 = vld [vmem:[#allocation2 + $0x68] sm:$0xff]
        %v2272 = vld [vmem:[#allocation2 + $0x70] sm:$0xff]
        %v2273 = vld [vmem:[#allocation2 + $0x78] sm:$0xff]
        %v2274 = vld [vmem:[#allocation2 + $0x80] sm:$0xff]
        %v2275 = vld [vmem:[#allocation2 + $0x88] sm:$0xff]
        %v2276 = vld [vmem:[#allocation2 + $0x90] sm:$0xff]
        %v2277 = vld [vmem:[#allocation2 + $0x98] sm:$0xff]
        %v2278 = vld [vmem:[#allocation2 + $0xa0] sm:$0xff]
        %v2279 = vld [vmem:[#allocation2 + $0xa8] sm:$0xff]
        %v2280 = vld [vmem:[#allocation2 + $0xb0] sm:$0xff]
        %v2281 = vld [vmem:[#allocation2 + $0xb8] sm:$0xff]
        %v2282 = vld [vmem:[#allocation2 + $0xc0] sm:$0xff]
        %v2283 = vld [vmem:[#allocation2 + $0xc8] sm:$0xff]
        %v2284 = vld [vmem:[#allocation2 + $0xd0] sm:$0xff]
        %v2285 = vld [vmem:[#allocation2 + $0xd8] sm:$0xff]
        %v2286 = vld [vmem:[#allocation2 + $0xe0] sm:$0xff]
        %v2287 = vld [vmem:[#allocation2 + $0xe8] sm:$0xff]
        %v2288 = vld [vmem:[#allocation2 + $0xf0] sm:$0xff]
        %v2289 = vld [vmem:[#allocation2 + $0xf8] sm:$0xff]
        %v2290 = vld [vmem:[%s4] sm:$0x1]
        %v2292 = vlaneseq
        %v2293 = vshrl.u32 %v2292, 7
        %v2294 = vsub.s32 0, %v2293
        %v2295 = vrot.slane %v2290, %v2294
        %v2297 = vadd.f32 %v2258, %v2295
        %v2298 = vadd.f32 %v2259, %v2295
        %v2299 = vadd.f32 %v2260, %v2295
        %v2300 = vadd.f32 %v2261, %v2295
        %v2301 = vadd.f32 %v2262, %v2295
        %v2302 = vadd.f32 %v2263, %v2295
        %v2303 = vadd.f32 %v2264, %v2295
        %v2304 = vadd.f32 %v2265, %v2295
        %v2305 = vadd.f32 %v2266, %v2295
        %v2306 = vadd.f32 %v2267, %v2295
        %v2307 = vadd.f32 %v2268, %v2295
        %v2308 = vadd.f32 %v2269, %v2295
        %v2309 = vadd.f32 %v2270, %v2295
        %v2310 = vadd.f32 %v2271, %v2295
        %v2311 = vadd.f32 %v2272, %v2295
        %v2312 = vadd.f32 %v2273, %v2295
        %v2313 = vadd.f32 %v2274, %v2295
        %v2314 = vadd.f32 %v2275, %v2295
        %v2315 = vadd.f32 %v2276, %v2295
        %v2316 = vadd.f32 %v2277, %v2295
        %v2317 = vadd.f32 %v2278, %v2295
        %v2318 = vadd.f32 %v2279, %v2295
        %v2319 = vadd.f32 %v2280, %v2295
        %v2320 = vadd.f32 %v2281, %v2295
        %v2321 = vadd.f32 %v2282, %v2295
        %v2322 = vadd.f32 %v2283, %v2295
        %v2323 = vadd.f32 %v2284, %v2295
        %v2324 = vadd.f32 %v2285, %v2295
        %v2325 = vadd.f32 %v2286, %v2295
        %v2326 = vadd.f32 %v2287, %v2295
        %v2327 = vadd.f32 %v2288, %v2295
        %v2328 = vadd.f32 %v2289, %v2295
        %2329 = vst [vmem:[%s226] sm:$0xff] %v2297
        %2330 = vst [vmem:[%s226 + $0x8] sm:$0xff] %v2298
        %2331 = vst [vmem:[%s226 + $0x10] sm:$0xff] %v2299
        %2332 = vst [vmem:[%s226 + $0x18] sm:$0xff] %v2300
        %2333 = vst [vmem:[%s226 + $0x20] sm:$0xff] %v2301
        %2334 = vst [vmem:[%s226 + $0x28] sm:$0xff] %v2302
        %2335 = vst [vmem:[%s226 + $0x30] sm:$0xff] %v2303
        %2336 = vst [vmem:[%s226 + $0x38] sm:$0xff] %v2304
        %2337 = vst [vmem:[%s226 + $0x40] sm:$0xff] %v2305
        %2338 = vst [vmem:[%s226 + $0x48] sm:$0xff] %v2306
        %2339 = vst [vmem:[%s226 + $0x50] sm:$0xff] %v2307
        %2340 = vst [vmem:[%s226 + $0x58] sm:$0xff] %v2308
        %2341 = vst [vmem:[%s226 + $0x60] sm:$0xff] %v2309
        %2342 = vst [vmem:[%s226 + $0x68] sm:$0xff] %v2310
        %2343 = vst [vmem:[%s226 + $0x70] sm:$0xff] %v2311
        %2344 = vst [vmem:[%s226 + $0x78] sm:$0xff] %v2312
        %2345 = vst [vmem:[%s226 + $0x80] sm:$0xff] %v2313
        %2346 = vst [vmem:[%s226 + $0x88] sm:$0xff] %v2314
        %2347 = vst [vmem:[%s226 + $0x90] sm:$0xff] %v2315
        %2348 = vst [vmem:[%s226 + $0x98] sm:$0xff] %v2316
        %2349 = vst [vmem:[%s226 + $0xa0] sm:$0xff] %v2317
        %2350 = vst [vmem:[%s226 + $0xa8] sm:$0xff] %v2318
        %2351 = vst [vmem:[%s226 + $0xb0] sm:$0xff] %v2319
        %2352 = vst [vmem:[%s226 + $0xb8] sm:$0xff] %v2320
        %2353 = vst [vmem:[%s226 + $0xc0] sm:$0xff] %v2321
        %2354 = vst [vmem:[%s226 + $0xc8] sm:$0xff] %v2322
        %2355 = vst [vmem:[%s226 + $0xd0] sm:$0xff] %v2323
        %2356 = vst [vmem:[%s226 + $0xd8] sm:$0xff] %v2324
        %2357 = vst [vmem:[%s226 + $0xe0] sm:$0xff] %v2325
        %2358 = vst [vmem:[%s226 + $0xe8] sm:$0xff] %v2326
        %2359 = vst [vmem:[%s226 + $0xf0] sm:$0xff] %v2327
        %2360 = vst [vmem:[%s226 + $0xf8] sm:$0xff] %v2328
        %s2361 = sand.u32 %s134, 1
        %s2362 = sand.u32 %s134, 1
        %s2363 = smul.addr %s2362, 256
        %s2364 = scalar_lea.vmem [#allocation3], %s2363
        // Predicated region
        $region41: #{_ffn_pallas_impl.1} parent=39 // pred_check
          %p2365 = pneg %p144
        $region42: #{_ffn_pallas_impl.1} parent=39 // pred_check_branch
          %2367 = sbr.rel (%p2365) target = $region44
        $region43: #{_ffn_pallas_impl.1} parent=39 // pred_region
          %s2368 = smul.u32 32, %s16
          %s2369 = ssub.s32 50, %s2368
          %p2370 = scmp.lt.s32.totalorder %s2369, 32
          %s2371 = scalar_select %p2370, %s2369, 32
          %s2372 = smul.u32 128, %s2371
          %p2373 = scmp.ne.s32.totalorder 0, %s2372
          %s2374 = smul.addr %s2368, 8
          %s2375 = scalar_lea.vmem %s5, %s2374
          // Predicated region
          $region45: #{_ffn_pallas_impl.1} parent=43 // pred_check
            %p2376 = pneg %p2373
          $region46: #{_ffn_pallas_impl.1} parent=43 // pred_check_branch
            %2378 = sbr.rel (%p2376) target = $region48
          $region47: #{_ffn_pallas_impl.1} parent=43 // pred_region
            // Predicated region
            $region49: #{_ffn_pallas_impl.1} parent=47 // pred_check
              _
            $region50: #{_ffn_pallas_impl.1} parent=47 // pred_check_branch
              %2380 = sbr.rel (0) target = $region52
            $region51: #{_ffn_pallas_impl.1} parent=47 // pred_region
              // Predicated region
              $region71: #{_ffn_pallas_impl.1} parent=51 // pred_check
                _
              $region72: #{_ffn_pallas_impl.1} parent=51 // pred_check_branch
                %2491 = sbr.rel (0) target = $region74
              $region73: #{_ffn_pallas_impl.1} parent=51 // pred_region
                %s2492 = sshrl.u32 %s2371, 5
                // While loop
                $region75: #{_ffn_pallas_impl.1} parent=73 // loop_pre_header
                  _
                $region76: #{_ffn_pallas_impl.1} parent=73 // loop_header
                  %s2494 = sphi 0, %s2496
                  %p2495 = scmp.ge.s32.totalorder %s2494, %s2492
                  %s2499 = sphi 0, %s2568
                  %s2500 = sphi %s2364, %s2571
                  %s2501 = sphi %s2375, %s2572
                $region77: #{_ffn_pallas_impl.1} parent=73 // loop_header_branch
                  %2498 = sbr.rel (%p2495) target = $region81
                $region78: #{_ffn_pallas_impl.1} parent=73 // loop_body
                  %v2502 = vld [vmem:[%s2500] sm:$0xff]
                  %2503 = vst [vmem:[%s2501] sm:$0xff] %v2502
                  %v2504 = vld [vmem:[%s2500 + $0x8] sm:$0xff]
                  %2505 = vst [vmem:[%s2501 + $0x8] sm:$0xff] %v2504
                  %v2506 = vld [vmem:[%s2500 + $0x10] sm:$0xff]
                  %2507 = vst [vmem:[%s2501 + $0x10] sm:$0xff] %v2506
                  %v2508 = vld [vmem:[%s2500 + $0x18] sm:$0xff]
                  %2509 = vst [vmem:[%s2501 + $0x18] sm:$0xff] %v2508
                  %v2510 = vld [vmem:[%s2500 + $0x20] sm:$0xff]
                  %2511 = vst [vmem:[%s2501 + $0x20] sm:$0xff] %v2510
                  %v2512 = vld [vmem:[%s2500 + $0x28] sm:$0xff]
                  %2513 = vst [vmem:[%s2501 + $0x28] sm:$0xff] %v2512
                  %v2514 = vld [vmem:[%s2500 + $0x30] sm:$0xff]
                  %2515 = vst [vmem:[%s2501 + $0x30] sm:$0xff] %v2514
                  %v2516 = vld [vmem:[%s2500 + $0x38] sm:$0xff]
                  %2517 = vst [vmem:[%s2501 + $0x38] sm:$0xff] %v2516
                  %v2518 = vld [vmem:[%s2500 + $0x40] sm:$0xff]
                  %2519 = vst [vmem:[%s2501 + $0x40] sm:$0xff] %v2518
                  %v2520 = vld [vmem:[%s2500 + $0x48] sm:$0xff]
                  %2521 = vst [vmem:[%s2501 + $0x48] sm:$0xff] %v2520
                  %v2522 = vld [vmem:[%s2500 + $0x50] sm:$0xff]
                  %2523 = vst [vmem:[%s2501 + $0x50] sm:$0xff] %v2522
                  %v2524 = vld [vmem:[%s2500 + $0x58] sm:$0xff]
                  %2525 = vst [vmem:[%s2501 + $0x58] sm:$0xff] %v2524
                  %v2526 = vld [vmem:[%s2500 + $0x60] sm:$0xff]
                  %2527 = vst [vmem:[%s2501 + $0x60] sm:$0xff] %v2526
                  %v2528 = vld [vmem:[%s2500 + $0x68] sm:$0xff]
                  %2529 = vst [vmem:[%s2501 + $0x68] sm:$0xff] %v2528
                  %v2530 = vld [vmem:[%s2500 + $0x70] sm:$0xff]
                  %2531 = vst [vmem:[%s2501 + $0x70] sm:$0xff] %v2530
                  %v2532 = vld [vmem:[%s2500 + $0x78] sm:$0xff]
                  %2533 = vst [vmem:[%s2501 + $0x78] sm:$0xff] %v2532
                  %v2534 = vld [vmem:[%s2500 + $0x80] sm:$0xff]
                  %2535 = vst [vmem:[%s2501 + $0x80] sm:$0xff] %v2534
                  %v2536 = vld [vmem:[%s2500 + $0x88] sm:$0xff]
                  %2537 = vst [vmem:[%s2501 + $0x88] sm:$0xff] %v2536
                  %v2538 = vld [vmem:[%s2500 + $0x90] sm:$0xff]
                  %2539 = vst [vmem:[%s2501 + $0x90] sm:$0xff] %v2538
                  %v2540 = vld [vmem:[%s2500 + $0x98] sm:$0xff]
                  %2541 = vst [vmem:[%s2501 + $0x98] sm:$0xff] %v2540
                  %v2542 = vld [vmem:[%s2500 + $0xa0] sm:$0xff]
                  %2543 = vst [vmem:[%s2501 + $0xa0] sm:$0xff] %v2542
                  %v2544 = vld [vmem:[%s2500 + $0xa8] sm:$0xff]
                  %2545 = vst [vmem:[%s2501 + $0xa8] sm:$0xff] %v2544
                  %v2546 = vld [vmem:[%s2500 + $0xb0] sm:$0xff]
                  %2547 = vst [vmem:[%s2501 + $0xb0] sm:$0xff] %v2546
                  %v2548 = vld [vmem:[%s2500 + $0xb8] sm:$0xff]
                  %2549 = vst [vmem:[%s2501 + $0xb8] sm:$0xff] %v2548
                  %v2550 = vld [vmem:[%s2500 + $0xc0] sm:$0xff]
                  %2551 = vst [vmem:[%s2501 + $0xc0] sm:$0xff] %v2550
                  %v2552 = vld [vmem:[%s2500 + $0xc8] sm:$0xff]
                  %2553 = vst [vmem:[%s2501 + $0xc8] sm:$0xff] %v2552
                  %v2554 = vld [vmem:[%s2500 + $0xd0] sm:$0xff]
                  %2555 = vst [vmem:[%s2501 + $0xd0] sm:$0xff] %v2554
                  %v2556 = vld [vmem:[%s2500 + $0xd8] sm:$0xff]
                  %2557 = vst [vmem:[%s2501 + $0xd8] sm:$0xff] %v2556
                  %v2558 = vld [vmem:[%s2500 + $0xe0] sm:$0xff]
                  %2559 = vst [vmem:[%s2501 + $0xe0] sm:$0xff] %v2558
                  %v2560 = vld [vmem:[%s2500 + $0xe8] sm:$0xff]
                  %2561 = vst [vmem:[%s2501 + $0xe8] sm:$0xff] %v2560
                  %v2562 = vld [vmem:[%s2500 + $0xf0] sm:$0xff]
                  %2563 = vst [vmem:[%s2501 + $0xf0] sm:$0xff] %v2562
                  %v2564 = vld [vmem:[%s2500 + $0xf8] sm:$0xff]
                  %2565 = vst [vmem:[%s2501 + $0xf8] sm:$0xff] %v2564
                  %s2566 = sadd.s32 1, %s2499
                  %p2567 = scmp.ge.s32.totalorder %s2566, %s2492
                  %s2568 = scalar_select %p2567, 0, %s2566
                  %s2569 = smul.u32 %s2568, 256
                  %s2570 = smul.u32 %s2568, 256
                  %s2571 = scalar_lea.vmem %s2364, %s2569 [#allocation3]
                  %s2572 = scalar_lea.vmem %s2375, %s2570
                $region79: #{_ffn_pallas_impl.1} parent=73 // loop_footer
                  %s2496 = sadd.s32 %s2494, 1
                $region80: #{_ffn_pallas_impl.1} parent=73 // loop_footer_branch
                  %2493 = sbr.rel target = $region76
                $region81: #{_ffn_pallas_impl.1} parent=73 // loop_exit
                  _
                %s2573 = sshrl.u32 %s2371, 5
                %s2574 = sand.u32 %s2371, 31
                %s2575 = smul.u32 %s2573, 32
                %s2576 = smul.u32 8, %s2575
                %s2577 = scalar_lea.vmem %s2364, %s2576 [#allocation3]
                %s2578 = smul.u32 8, %s2575
                %s2579 = scalar_lea.vmem %s2375, %s2578
                // While loop
                $region82: #{_ffn_pallas_impl.1} parent=73 // loop_pre_header
                  _
                $region83: #{_ffn_pallas_impl.1} parent=73 // loop_header
                  %s2581 = sphi 0, %s2583
                  %p2582 = scmp.ge.s32.totalorder %s2581, %s2574
                  %s2586 = sphi 0, %s2593
                  %s2587 = sphi %s2577, %s2596
                  %s2588 = sphi %s2579, %s2597
                $region84: #{_ffn_pallas_impl.1} parent=73 // loop_header_branch
                  %2585 = sbr.rel (%p2582) target = $region88
                $region85: #{_ffn_pallas_impl.1} parent=73 // loop_body
                  %v2589 = vld [vmem:[%s2587] sm:$0xff]
                  %2590 = vst [vmem:[%s2588] sm:$0xff] %v2589
                  %s2591 = sadd.s32 1, %s2586
                  %p2592 = scmp.ge.s32.totalorder %s2591, %s2574
                  %s2593 = scalar_select %p2592, 0, %s2591
                  %s2594 = smul.u32 %s2593, 8
                  %s2595 = smul.u32 %s2593, 8
                  %s2596 = scalar_lea.vmem %s2577, %s2594 [#allocation3]
                  %s2597 = scalar_lea.vmem %s2579, %s2595
                $region86: #{_ffn_pallas_impl.1} parent=73 // loop_footer
                  %s2583 = sadd.s32 %s2581, 1
                $region87: #{_ffn_pallas_impl.1} parent=73 // loop_footer_branch
                  %2580 = sbr.rel target = $region83
                $region88: #{_ffn_pallas_impl.1} parent=73 // loop_exit
                  _
              $region74: #{_ffn_pallas_impl.1} parent=51 // pred_fallthru
                _
              // Predicated region
              $region89: #{_ffn_pallas_impl.1} parent=51 // pred_check
                _
              $region90: #{_ffn_pallas_impl.1} parent=51 // pred_check_branch
                %2599 = sbr.rel target = $region92
              $region91: #{_ffn_pallas_impl.1} parent=51 // pred_region
                _
              $region92: #{_ffn_pallas_impl.1} parent=51 // pred_fallthru
                _
            $region52: #{_ffn_pallas_impl.1} parent=47 // pred_fallthru
              _
            // Predicated region
            $region53: #{_ffn_pallas_impl.1} parent=47 // pred_check
              _
            $region54: #{_ffn_pallas_impl.1} parent=47 // pred_check_branch
              %2382 = sbr.rel target = $region56
            $region55: #{_ffn_pallas_impl.1} parent=47 // pred_region
              %s2384 = sshrl.u32 %s2371, 5
              // While loop
              $region57: #{_ffn_pallas_impl.1} parent=55 // loop_pre_header
                _
              $region58: #{_ffn_pallas_impl.1} parent=55 // loop_header
                %s2386 = sphi 0, %s2388
                %p2387 = scmp.ge.s32.totalorder %s2386, %s2384
                %s2391 = sphi 0, %s2460
                %s2392 = sphi %s2364, %s2463
                %s2393 = sphi %s2375, %s2464
              $region59: #{_ffn_pallas_impl.1} parent=55 // loop_header_branch
                %2390 = sbr.rel (%p2387) target = $region63
              $region60: #{_ffn_pallas_impl.1} parent=55 // loop_body
                %v2394 = vld [vmem:[%s2392] sm:$0xff]
                %2395 = vst [vmem:[%s2393] sm:$0xff] %v2394
                %v2396 = vld [vmem:[%s2392 + $0x8] sm:$0xff]
                %2397 = vst [vmem:[%s2393 + $0x8] sm:$0xff] %v2396
                %v2398 = vld [vmem:[%s2392 + $0x10] sm:$0xff]
                %2399 = vst [vmem:[%s2393 + $0x10] sm:$0xff] %v2398
                %v2400 = vld [vmem:[%s2392 + $0x18] sm:$0xff]
                %2401 = vst [vmem:[%s2393 + $0x18] sm:$0xff] %v2400
                %v2402 = vld [vmem:[%s2392 + $0x20] sm:$0xff]
                %2403 = vst [vmem:[%s2393 + $0x20] sm:$0xff] %v2402
                %v2404 = vld [vmem:[%s2392 + $0x28] sm:$0xff]
                %2405 = vst [vmem:[%s2393 + $0x28] sm:$0xff] %v2404
                %v2406 = vld [vmem:[%s2392 + $0x30] sm:$0xff]
                %2407 = vst [vmem:[%s2393 + $0x30] sm:$0xff] %v2406
                %v2408 = vld [vmem:[%s2392 + $0x38] sm:$0xff]
                %2409 = vst [vmem:[%s2393 + $0x38] sm:$0xff] %v2408
                %v2410 = vld [vmem:[%s2392 + $0x40] sm:$0xff]
                %2411 = vst [vmem:[%s2393 + $0x40] sm:$0xff] %v2410
                %v2412 = vld [vmem:[%s2392 + $0x48] sm:$0xff]
                %2413 = vst [vmem:[%s2393 + $0x48] sm:$0xff] %v2412
                %v2414 = vld [vmem:[%s2392 + $0x50] sm:$0xff]
                %2415 = vst [vmem:[%s2393 + $0x50] sm:$0xff] %v2414
                %v2416 = vld [vmem:[%s2392 + $0x58] sm:$0xff]
                %2417 = vst [vmem:[%s2393 + $0x58] sm:$0xff] %v2416
                %v2418 = vld [vmem:[%s2392 + $0x60] sm:$0xff]
                %2419 = vst [vmem:[%s2393 + $0x60] sm:$0xff] %v2418
                %v2420 = vld [vmem:[%s2392 + $0x68] sm:$0xff]
                %2421 = vst [vmem:[%s2393 + $0x68] sm:$0xff] %v2420
                %v2422 = vld [vmem:[%s2392 + $0x70] sm:$0xff]
                %2423 = vst [vmem:[%s2393 + $0x70] sm:$0xff] %v2422
                %v2424 = vld [vmem:[%s2392 + $0x78] sm:$0xff]
                %2425 = vst [vmem:[%s2393 + $0x78] sm:$0xff] %v2424
                %v2426 = vld [vmem:[%s2392 + $0x80] sm:$0xff]
                %2427 = vst [vmem:[%s2393 + $0x80] sm:$0xff] %v2426
                %v2428 = vld [vmem:[%s2392 + $0x88] sm:$0xff]
                %2429 = vst [vmem:[%s2393 + $0x88] sm:$0xff] %v2428
                %v2430 = vld [vmem:[%s2392 + $0x90] sm:$0xff]
                %2431 = vst [vmem:[%s2393 + $0x90] sm:$0xff] %v2430
                %v2432 = vld [vmem:[%s2392 + $0x98] sm:$0xff]
                %2433 = vst [vmem:[%s2393 + $0x98] sm:$0xff] %v2432
                %v2434 = vld [vmem:[%s2392 + $0xa0] sm:$0xff]
                %2435 = vst [vmem:[%s2393 + $0xa0] sm:$0xff] %v2434
                %v2436 = vld [vmem:[%s2392 + $0xa8] sm:$0xff]
                %2437 = vst [vmem:[%s2393 + $0xa8] sm:$0xff] %v2436
                %v2438 = vld [vmem:[%s2392 + $0xb0] sm:$0xff]
                %2439 = vst [vmem:[%s2393 + $0xb0] sm:$0xff] %v2438
                %v2440 = vld [vmem:[%s2392 + $0xb8] sm:$0xff]
                %2441 = vst [vmem:[%s2393 + $0xb8] sm:$0xff] %v2440
                %v2442 = vld [vmem:[%s2392 + $0xc0] sm:$0xff]
                %2443 = vst [vmem:[%s2393 + $0xc0] sm:$0xff] %v2442
                %v2444 = vld [vmem:[%s2392 + $0xc8] sm:$0xff]
                %2445 = vst [vmem:[%s2393 + $0xc8] sm:$0xff] %v2444
                %v2446 = vld [vmem:[%s2392 + $0xd0] sm:$0xff]
                %2447 = vst [vmem:[%s2393 + $0xd0] sm:$0xff] %v2446
                %v2448 = vld [vmem:[%s2392 + $0xd8] sm:$0xff]
                %2449 = vst [vmem:[%s2393 + $0xd8] sm:$0xff] %v2448
                %v2450 = vld [vmem:[%s2392 + $0xe0] sm:$0xff]
                %2451 = vst [vmem:[%s2393 + $0xe0] sm:$0xff] %v2450
                %v2452 = vld [vmem:[%s2392 + $0xe8] sm:$0xff]
                %2453 = vst [vmem:[%s2393 + $0xe8] sm:$0xff] %v2452
                %v2454 = vld [vmem:[%s2392 + $0xf0] sm:$0xff]
                %2455 = vst [vmem:[%s2393 + $0xf0] sm:$0xff] %v2454
                %v2456 = vld [vmem:[%s2392 + $0xf8] sm:$0xff]
                %2457 = vst [vmem:[%s2393 + $0xf8] sm:$0xff] %v2456
                %s2458 = sadd.s32 1, %s2391
                %p2459 = scmp.ge.s32.totalorder %s2458, %s2384
                %s2460 = scalar_select %p2459, 0, %s2458
                %s2461 = smul.u32 %s2460, 256
                %s2462 = smul.u32 %s2460, 256
                %s2463 = scalar_lea.vmem %s2364, %s2461 [#allocation3]
                %s2464 = scalar_lea.vmem %s2375, %s2462
              $region61: #{_ffn_pallas_impl.1} parent=55 // loop_footer
                %s2388 = sadd.s32 %s2386, 1
              $region62: #{_ffn_pallas_impl.1} parent=55 // loop_footer_branch
                %2385 = sbr.rel target = $region58
              $region63: #{_ffn_pallas_impl.1} parent=55 // loop_exit
                _
              %s2465 = sshrl.u32 %s2371, 5
              %s2466 = sand.u32 %s2371, 31
              %s2467 = smul.u32 %s2465, 32
              %s2468 = smul.u32 8, %s2467
              %s2469 = scalar_lea.vmem %s2364, %s2468 [#allocation3]
              %s2470 = smul.u32 8, %s2467
              %s2471 = scalar_lea.vmem %s2375, %s2470
              // While loop
              $region64: #{_ffn_pallas_impl.1} parent=55 // loop_pre_header
                _
              $region65: #{_ffn_pallas_impl.1} parent=55 // loop_header
                %s2473 = sphi 0, %s2475
                %p2474 = scmp.ge.s32.totalorder %s2473, %s2466
                %s2478 = sphi 0, %s2485
                %s2479 = sphi %s2469, %s2488
                %s2480 = sphi %s2471, %s2489
              $region66: #{_ffn_pallas_impl.1} parent=55 // loop_header_branch
                %2477 = sbr.rel (%p2474) target = $region70
              $region67: #{_ffn_pallas_impl.1} parent=55 // loop_body
                %v2481 = vld [vmem:[%s2479] sm:$0xff]
                %2482 = vst [vmem:[%s2480] sm:$0xff] %v2481
                %s2483 = sadd.s32 1, %s2478
                %p2484 = scmp.ge.s32.totalorder %s2483, %s2466
                %s2485 = scalar_select %p2484, 0, %s2483
                %s2486 = smul.u32 %s2485, 8
                %s2487 = smul.u32 %s2485, 8
                %s2488 = scalar_lea.vmem %s2469, %s2486 [#allocation3]
                %s2489 = scalar_lea.vmem %s2471, %s2487
              $region68: #{_ffn_pallas_impl.1} parent=55 // loop_footer
                %s2475 = sadd.s32 %s2473, 1
              $region69: #{_ffn_pallas_impl.1} parent=55 // loop_footer_branch
                %2472 = sbr.rel target = $region65
              $region70: #{_ffn_pallas_impl.1} parent=55 // loop_exit
                _
            $region56: #{_ffn_pallas_impl.1} parent=47 // pred_fallthru
              _
          $region48: #{_ffn_pallas_impl.1} parent=43 // pred_fallthru
            _
          %2600 = vnop
        $region44: #{_ffn_pallas_impl.1} parent=39 // pred_fallthru
          _
      $region40: #{_ffn_pallas_impl.1} parent=5 // pred_fallthru
        _
      %p2601 = scmp.le.s32.totalorder 2, %s11
      // Predicated region
      $region93: #{_ffn_pallas_impl.1} parent=5 // pred_check
        %p2602 = pneg %p2601
      $region94: #{_ffn_pallas_impl.1} parent=5 // pred_check_branch
        %2604 = sbr.rel (%p2602) target = $region96
      $region95: #{_ffn_pallas_impl.1} parent=5 // pred_region
        %s2605 = ssub.s32 %s11, 2
        // Predicated region
        $region97: #{_ffn_pallas_impl.1} parent=95 // pred_check
          %p2606 = pneg %p150
        $region98: #{_ffn_pallas_impl.1} parent=95 // pred_check_branch
          %2608 = sbr.rel (%p2606) target = $region100
        $region99: #{_ffn_pallas_impl.1} parent=95 // pred_region
          %s2609 = sand.u32 %s135, 1
          %s2610 = sand.u32 %s135, 1
          %s2611 = smul.addr %s2610, 256
          %s2612 = scalar_lea.vmem [#allocation3], %s2611
        $region100: #{_ffn_pallas_impl.1} parent=95 // pred_fallthru
          _
      $region96: #{_ffn_pallas_impl.1} parent=5 // pred_fallthru
        _
    $region6: #{_ffn_pallas_impl.1} parent=1 // loop_footer
      %s15 = sadd.s32 1, %s11
    $region7: #{_ffn_pallas_impl.1} parent=1 // loop_footer_branch
      %10 = sbr.rel target = $region3
    $region8: #{_ffn_pallas_impl.1} parent=1 // loop_exit
      _

</llo_original>
